<compile_context>
chip_gen: v5e
topology: v5e:2x2
jax: 0.10.0
libtpu: 0.0.40
codegen_flags: <defaults>
</compile_context>

<pallas_src>
import functools
import math

import jax
import jax.numpy as jnp
from jax import lax
from jax.experimental import pallas as pl
from jax.experimental.pallas import tpu as pltpu

# ----------------------------- configuration -------------------------------
EMBED = 32          # embedding_dim
HEADS = 4           # num_heads
MLP_DIM = 64        # mlp_dim
DOWNSAMPLE = 2      # attention_downsample_rate
DC = EMBED // DOWNSAMPLE          # internal dim of the cross attentions
NQ = 8              # sparse tokens (queries)
NK = 64             # dense tokens (keys), e.g. 8x8 image grid
B = 2               # batch
EPS = 1e-5          # torch.nn.LayerNorm default eps
LANES = 128         # TPU lane width; all channel axes are padded to this


# ------------------------------- Pallas kernel -------------------------------
def _two_way_kernel(q_ref, k_ref, qpe_ref, kpe_ref, w_ref, vec_ref,
                    q_out_ref, k_out_ref, *, w_off, v_off, num_heads):
    f32 = jnp.float32
    bf16 = jnp.bfloat16

    # ---- lazy, static-offset parameter access from the two resident slabs ----
    def W(name):                      # [128, 128] bf16 weight block (zero padded)
        off = w_off[name]
        return w_ref[off:off + LANES, :]

    def V(name):                      # [1, 128] f32 bias / LayerNorm vector
        off = v_off[name]
        return vec_ref[off:off + 1, :]

    def lin(x, wname, bname):
        """x: [bb, n, 128] f32 -> [bb, n, 128] f32.  Lane-dense matmul + bias;
        bf16 MXU operands, f32 accumulation/elementwise."""
        bb, n, _ = x.shape
        x2 = x.reshape(bb * n, LANES).astype(bf16)          # leading-dim merge: free
        y = jnp.dot(x2, W(wname), preferred_element_type=f32) + V(bname)
        return y.reshape(bb, n, LANES)

    def layernorm(x, gname, bname):
        # Padded lanes are zero on entry; gamma/beta padding is zero so they
        # stay zero on exit.  Statistics divide by the true width EMBED.
        bb, n, _ = x.shape
        x2 = x.reshape(bb * n, LANES)
        mu = jnp.sum(x2, axis=-1, keepdims=True) * (1.0 / EMBED)
        var = jnp.sum(x2 * x2, axis=-1, keepdims=True) * (1.0 / EMBED) - mu * mu
        y = (x2 - mu) * lax.rsqrt(var + EPS) * V(gname) + V(bname)
        return y.reshape(bb, n, LANES)

    def softmax(s):
        m = jnp.max(s, axis=-1, keepdims=True)
        e = jnp.exp(s - m)
        # reciprocal on the EUP slot instead of a VPU divide
        return e * pl.reciprocal(jnp.sum(e, axis=-1, keepdims=True), approx=True)

    def mha(q, k, v, masks, head_dim):
        """Multi-head attention with per-head lane masks (no per-head slicing).

        q: [bb, nq, 128], k/v: [bb, nk, 128]; all f32, zero beyond the internal
        dim.  Head h occupies lanes [h*head_dim, (h+1)*head_dim).
        """
        bb, nq, _ = q.shape
        scale = 1.0 / math.sqrt(head_dim)
        # Head-major stack of masked queries along sublanes:
        # rows [h*nq, (h+1)*nq) hold head h's queries (lane-dense, 128 wide).
        qm = jnp.concatenate([q * m for m in masks], axis=1)      # [bb, H*nq, 128]
        s = lax.dot_general(
            qm.astype(bf16), k.astype(bf16),
            (((2,), (2,)), ((0,), (0,))),
            preferred_element_type=f32) * scale                   # [bb, H*nq, nk]
        # NOTE: torch's +/-inf clamp is a no-op for finite inputs -> removed.
        p = softmax(s)
        o = lax.dot_general(
            p.astype(bf16), v.astype(bf16),
            (((2,), (1,)), ((0,), (0,))),
            preferred_element_type=f32)                           # [bb, H*nq, 128]
        # Recombine heads: keep each head's lanes, sum over heads.
        out = o[:, 0:nq, :] * masks[0]
        for h in range(1, num_heads):
            out = out + o[:, h * nq:(h + 1) * nq, :] * masks[h]
        return out                                                # [bb, nq, 128]

    # Per-head lane masks, built once from an iota (a handful of VPU ops).
    lane = lax.broadcasted_iota(jnp.int32, (1, 1, LANES), 2)

    def head_masks(head_dim):
        return [jnp.where((lane >= h * head_dim) & (lane < (h + 1) * head_dim),
                          1.0, 0.0).astype(f32)
                for h in range(num_heads)]

    dh_self = EMBED // num_heads
    dh_cross = DC // num_heads
    masks_self = head_masks(dh_self)
    masks_cross = head_masks(dh_cross)

    queries = q_ref[...]        # [bb, NQ, 128] f32, zero-padded beyond EMBED
    keys = k_ref[...]           # [bb, NK, 128]
    qpe = qpe_ref[...]
    kpe = kpe_ref[...]

    # (1) self attention of sparse tokens: q = k = queries + qpe, v = queries.
    q_in = queries + qpe
    attn = mha(lin(q_in, "sa_wq", "sa_bq"),
               lin(q_in, "sa_wk", "sa_bk"),
               lin(queries, "sa_wv", "sa_bv"),
               masks_self, dh_self)
    attn = lin(attn, "sa_wo", "sa_bo")
    queries = layernorm(queries + attn, "n1_g", "n1_b")

    # keys + key_pe is reused by (2) and (4): keys only change at the very end.
    k_in = keys + kpe

    # (2) cross attention, tokens -> image.
    q_in = queries + qpe
    attn = mha(lin(q_in, "t2i_wq", "t2i_bq"),
               lin(k_in, "t2i_wk", "t2i_bk"),
               lin(keys, "t2i_wv", "t2i_bv"),
               masks_cross, dh_cross)
    attn = lin(attn, "t2i_wo", "t2i_bo")
    queries = layernorm(queries + attn, "n2_g", "n2_b")

    # (3) MLP (ReLU) on sparse tokens.
    h = jnp.maximum(lin(queries, "mlp_w1", "mlp_b1"), 0.0)
    mlp = lin(h, "mlp_w2", "mlp_b2")
    queries = layernorm(queries + mlp, "n3_g", "n3_b")

    # (4) cross attention, image -> tokens (dense tokens attend to sparse ones).
    q_in = queries + qpe
    attn = mha(lin(k_in, "i2t_wq", "i2t_bq"),
               lin(q_in, "i2t_wk", "i2t_bk"),
               lin(queries, "i2t_wv", "i2t_bv"),
               masks_cross, dh_cross)
    attn = lin(attn, "i2t_wo", "i2t_bo")
    keys = layernorm(keys + attn, "n4_g", "n4_b")

    # Lane-dense (128-wide) stores; wrapper strips the channel padding.
    q_out_ref[...] = queries.astype(q_out_ref.dtype)
    k_out_ref[...] = keys.astype(k_out_ref.dtype)


# --------------------------- parameter slab packing --------------------------
_W_NAMES = ["sa_wq", "sa_wk", "sa_wv", "sa_wo",
            "t2i_wq", "t2i_wk", "t2i_wv", "t2i_wo",
            "i2t_wq", "i2t_wk", "i2t_wv", "i2t_wo",
            "mlp_w1", "mlp_w2"]
_V_NAMES = ["sa_bq", "sa_bk", "sa_bv", "sa_bo",
            "t2i_bq", "t2i_bk", "t2i_bv", "t2i_bo",
            "i2t_bq", "i2t_bk", "i2t_bv", "i2t_bo",
            "mlp_b1", "mlp_b2",
            "n1_g", "n1_b", "n2_g", "n2_b", "n3_g", "n3_b", "n4_g", "n4_b"]


def _pad_block(a, rows, cols):
    a = jnp.asarray(a, jnp.float32)
    r, c = a.shape
    return jnp.zeros((rows, cols), jnp.float32).at[:r, :c].set(a)


def pack_params(params):
    """Pack the per-tensor param dict into two flat slabs (do this once).

    Weight slab: one [128, 128] zero-padded block per weight, stored bf16
    (MXU operand).  Vec slab: one 8-row-aligned [1, 128] zero-padded entry per
    bias / LayerNorm vector, stored f32 (VPU operand).
    """
    w_blocks, w_off = [], {}
    for i, name in enumerate(_W_NAMES):
        w_off[name] = i * LANES
        w_blocks.append(_pad_block(params[name], LANES, LANES))
    v_blocks, v_off = [], {}
    for i, name in enumerate(_V_NAMES):
        v_off[name] = i * 8                       # 8-row aligned -> tile-aligned loads
        v_blocks.append(_pad_block(params[name], 8, LANES))
    w_slab = jnp.concatenate(w_blocks, axis=0).astype(jnp.bfloat16)
    v_slab = jnp.concatenate(v_blocks, axis=0)    # stays f32
    return w_slab, v_slab, w_off, v_off


# --------------------------------- wrapper -----------------------------------
def _has_multiple_tensorcores():
    """Best-effort detection of chips with 2 TensorCores per device
    (v4 / v5p megacore, v7x).  v5e / v6e have a single TC."""
    try:
        kind = jax.devices()[0].device_kind.lower()
    except Exception:
        return False
    return ("v7" in kind) or ("v4" in kind) or ("v5p" in kind)


def two_way_attention_block(queries, keys, query_pe, key_pe, packed,
                            *, batch_grid=None):
    w_slab, v_slab, w_off, v_off = packed
    bsz, nq, c = queries.shape
    nk = keys.shape[1]

    if batch_grid is None:
        batch_grid = _has_multiple_tensorcores()
    # Single-TC chips: fold the whole batch into one grid step (no per-step
    # overhead, [B*N,128] matmuls).  Multi-TC chips: one batch element per
    # "parallel" grid step so both TensorCores are used.
    steps = bsz if (batch_grid and bsz > 1) else 1
    bb = bsz // steps

    def pad_lanes(x):
        return jnp.pad(x, ((0, 0), (0, 0), (0, LANES - c))) if c < LANES else x

    def tok(n):
        return pl.BlockSpec((bb, n, LANES), lambda i: (i, 0, 0))

    def slab(a):   # constant index_map -> stays resident across grid steps
        return pl.BlockSpec(a.shape, lambda i: (0, 0))

    kernel = functools.partial(_two_way_kernel, w_off=w_off, v_off=v_off,
                               num_heads=HEADS)
    q_out, k_out = pl.pallas_call(
        kernel,
        grid=(steps,),
        in_specs=[tok(nq), tok(nk), tok(nq), tok(nk), slab(w_slab), slab(v_slab)],
        out_specs=(tok(nq), tok(nk)),
        out_shape=(
            jax.ShapeDtypeStruct((bsz, nq, LANES), jnp.float32),
            jax.ShapeDtypeStruct((bsz, nk, LANES), jnp.float32),
        ),
        compiler_params=pltpu.CompilerParams(
            dimension_semantics=("parallel",)),
    )(pad_lanes(queries), pad_lanes(keys), pad_lanes(query_pe),
      pad_lanes(key_pe), w_slab, v_slab)
    return q_out[..., :c], k_out[..., :c]


# ------------------------------ parameters -----------------------------------
def _init_linear(key, fan_in, fan_out):
    kw, kb = jax.random.split(key)
    w = jax.random.normal(kw, (fan_in, fan_out), jnp.float32) / math.sqrt(fan_in)
    # Round weights to bf16-representable values so the in-kernel bf16 weight
    # slab holds exactly the weights the f32 reference uses.
    w = w.astype(jnp.bfloat16).astype(jnp.float32)
    b = jax.random.normal(kb, (1, fan_out), jnp.float32) * 0.02
    return w, b


def init_params(key):
    C, M = EMBED, MLP_DIM
    p = {}
    ctr = [0]

    def nk():
        ctr[0] += 1
        return jax.random.fold_in(key, ctr[0])

    def add_attn(prefix, d_int):
        p[prefix + "_wq"], p[prefix + "_bq"] = _init_linear(nk(), C, d_int)
        p[prefix + "_wk"], p[prefix + "_bk"] = _init_linear(nk(), C, d_int)
        p[prefix + "_wv"], p[prefix + "_bv"] = _init_linear(nk(), C, d_int)
        p[prefix + "_wo"], p[prefix + "_bo"] = _init_linear(nk(), d_int, C)

    def add_norm(name):
        p[name + "_g"] = jnp.ones((1, C), jnp.float32)
        p[name + "_b"] = jnp.zeros((1, C), jnp.float32)

    add_attn("sa", C)          # self-attention: no downsampling
    add_norm("n1")
    add_attn("t2i", DC)        # cross attn token -> image (downsample 2)
    add_norm("n2")
    p["mlp_w1"], p["mlp_b1"] = _init_linear(nk(), C, M)
    p["mlp_w2"], p["mlp_b2"] = _init_linear(nk(), M, C)
    add_norm("n3")
    add_attn("i2t", DC)        # cross attn image -> token (downsample 2)
    add_norm("n4")
    return p


# ------------------------- pure-JAX reference (torch math) -------------------
def _ref_attention(q_in, k_in, v_in, P, prefix, num_heads):
    q = q_in @ P[prefix + "_wq"] + P[prefix + "_bq"]
    k = k_in @ P[prefix + "_wk"] + P[prefix + "_bk"]
    v = v_in @ P[prefix + "_wv"] + P[prefix + "_bv"]
    dh = q.shape[-1] // num_heads
    qh = q.reshape(q.shape[0], num_heads, dh).transpose(1, 0, 2)
    kh = k.reshape(k.shape[0], num_heads, dh).transpose(1, 0, 2)
    vh = v.reshape(v.shape[0], num_heads, dh).transpose(1, 0, 2)
    s = jnp.einsum("hqd,hkd->hqk", qh, kh) / math.sqrt(dh)
    a = jax.nn.softmax(s, axis=-1)
    o = jnp.einsum("hqk,hkd->hqd", a, vh)
    o = o.transpose(1, 0, 2).reshape(q.shape[0], num_heads * dh)
    return o @ P[prefix + "_wo"] + P[prefix + "_bo"]


def _ref_layernorm(x, g, b):
    mu = jnp.mean(x, axis=-1, keepdims=True)
    var = jnp.mean((x - mu) ** 2, axis=-1, keepdims=True)
    return (x - mu) * lax.rsqrt(var + EPS) * g + b


def reference_block(queries, keys, qpe, kpe, P):
    def one(q2, k2, qp, kp):
        q_in = q2 + qp
        a = _ref_attention(q_in, q_in, q2, P, "sa", HEADS)
        q2 = _ref_layernorm(q2 + a, P["n1_g"], P["n1_b"])
        a = _ref_attention(q2 + qp, k2 + kp, k2, P, "t2i", HEADS)
        q2 = _ref_layernorm(q2 + a, P["n2_g"], P["n2_b"])
        h = jnp.maximum(q2 @ P["mlp_w1"] + P["mlp_b1"], 0.0)
        m = h @ P["mlp_w2"] + P["mlp_b2"]
        q2 = _ref_layernorm(q2 + m, P["n3_g"], P["n3_b"])
        a = _ref_attention(k2 + kp, q2 + qp, q2, P, "i2t", HEADS)
        k2 = _ref_layernorm(k2 + a, P["n4_g"], P["n4_b"])
        return q2, k2
    return jax.vmap(one)(queries, keys, qpe, kpe)


# --------------------------------- main ---------------------------------------
if __name__ == "__main__":
    key = jax.random.PRNGKey(0)
    k_q, k_k, k_qpe, k_kpe, k_p = jax.random.split(key, 5)

    queries = jax.random.normal(k_q, (B, NQ, EMBED), jnp.float32)
    keys = jax.random.normal(k_k, (B, NK, EMBED), jnp.float32)
    query_pe = jax.random.normal(k_qpe, (B, NQ, EMBED), jnp.float32)
    key_pe = jax.random.normal(k_kpe, (B, NK, EMBED), jnp.float32)

    params = init_params(k_p)
    packed = pack_params(params)   # one-time packing into two flat slabs

    q_out, k_out = two_way_attention_block(queries, keys, query_pe, key_pe, packed)
    q_out = jax.block_until_ready(q_out)
    k_out = jax.block_until_ready(k_out)

    # Sanity check against a pure-f32 JAX reference of the torch module's math.
    # The kernel uses bf16 MXU operands (weights are bf16-representable, so only
    # the activation casts contribute error); tolerances are set accordingly.
    q_exp, k_exp = reference_block(queries, keys, query_pe, key_pe, params)
    assert q_out.shape == (B, NQ, EMBED) and k_out.shape == (B, NK, EMBED)
    for got, exp in ((q_out, q_exp), (k_out, k_exp)):
        diff = jnp.abs(got - exp)
        assert float(jnp.max(diff)) < 1e-1, float(jnp.max(diff))
        assert float(jnp.mean(diff)) < 2e-2, float(jnp.mean(diff))

    print("KERNEL_OK")
</pallas_src>

<mosaic_0001>
module attributes {stable_mosaic.version = 11 : i64} {
  func.func @_two_way_kernel(%arg0: i32, %arg1: memref<2x8x128xf32, #tpu.memory_space<vmem>>, %arg2: memref<2x64x128xf32, #tpu.memory_space<vmem>>, %arg3: memref<2x8x128xf32, #tpu.memory_space<vmem>>, %arg4: memref<2x64x128xf32, #tpu.memory_space<vmem>>, %arg5: memref<1792x128xbf16, #tpu.memory_space<vmem>>, %arg6: memref<176x128xf32, #tpu.memory_space<vmem>>, %arg7: memref<2x8x128xf32, #tpu.memory_space<vmem>>, %arg8: memref<2x64x128xf32, #tpu.memory_space<vmem>>) attributes {dimension_semantics = [#tpu.dimension_semantics<parallel>], iteration_bounds = array<i64: 1>, scalar_prefetch = 0 : i64, scratch_operands = 0 : i64, tpu.core_type = #tpu.core_type<tc>, window_params = [{transform_indices = @transform_0, window_bounds = array<i64: 2, 8, 128>}, {transform_indices = @transform_1, window_bounds = array<i64: 2, 64, 128>}, {transform_indices = @transform_2, window_bounds = array<i64: 2, 8, 128>}, {transform_indices = @transform_3, window_bounds = array<i64: 2, 64, 128>}, {pipeline_mode = #tpu.pipeline_mode<synchronous>, transform_indices = @transform_4, window_bounds = array<i64: 1792, 128>}, {pipeline_mode = #tpu.pipeline_mode<synchronous>, transform_indices = @transform_5, window_bounds = array<i64: 176, 128>}, {transform_indices = @transform_6, window_bounds = array<i64: 2, 8, 128>}, {transform_indices = @transform_7, window_bounds = array<i64: 2, 64, 128>}]} {
    %0 = tpu.iota {dimensions = array<i32: 2>} : vector<1x1x128xi32>
    %c0_i32 = arith.constant 0 : i32
    %1 = vector.broadcast %c0_i32 : i32 to vector<1x1x128xi32>
    %2 = arith.cmpi sge, %0, %1 : vector<1x1x128xi32>
    %c8_i32 = arith.constant 8 : i32
    %3 = vector.broadcast %c8_i32 : i32 to vector<1x1x128xi32>
    %4 = arith.cmpi slt, %0, %3 : vector<1x1x128xi32>
    %5 = arith.andi %2, %4 : vector<1x1x128xi1>
    %cst = arith.constant 1.000000e+00 : f32
    %cst_0 = arith.constant 0.000000e+00 : f32
    %6 = vector.broadcast %cst : f32 to vector<1x1x128xf32>
    %7 = vector.broadcast %cst_0 : f32 to vector<1x1x128xf32>
    %8 = arith.select %5, %6, %7 : vector<1x1x128xi1>, vector<1x1x128xf32>
    %c8_i32_1 = arith.constant 8 : i32
    %9 = vector.broadcast %c8_i32_1 : i32 to vector<1x1x128xi32>
    %10 = arith.cmpi sge, %0, %9 : vector<1x1x128xi32>
    %c16_i32 = arith.constant 16 : i32
    %11 = vector.broadcast %c16_i32 : i32 to vector<1x1x128xi32>
    %12 = arith.cmpi slt, %0, %11 : vector<1x1x128xi32>
    %13 = arith.andi %10, %12 : vector<1x1x128xi1>
    %cst_2 = arith.constant 1.000000e+00 : f32
    %cst_3 = arith.constant 0.000000e+00 : f32
    %14 = vector.broadcast %cst_2 : f32 to vector<1x1x128xf32>
    %15 = vector.broadcast %cst_3 : f32 to vector<1x1x128xf32>
    %16 = arith.select %13, %14, %15 : vector<1x1x128xi1>, vector<1x1x128xf32>
    %c16_i32_4 = arith.constant 16 : i32
    %17 = vector.broadcast %c16_i32_4 : i32 to vector<1x1x128xi32>
    %18 = arith.cmpi sge, %0, %17 : vector<1x1x128xi32>
    %c24_i32 = arith.constant 24 : i32
    %19 = vector.broadcast %c24_i32 : i32 to vector<1x1x128xi32>
    %20 = arith.cmpi slt, %0, %19 : vector<1x1x128xi32>
    %21 = arith.andi %18, %20 : vector<1x1x128xi1>
    %cst_5 = arith.constant 1.000000e+00 : f32
    %cst_6 = arith.constant 0.000000e+00 : f32
    %22 = vector.broadcast %cst_5 : f32 to vector<1x1x128xf32>
    %23 = vector.broadcast %cst_6 : f32 to vector<1x1x128xf32>
    %24 = arith.select %21, %22, %23 : vector<1x1x128xi1>, vector<1x1x128xf32>
    %c24_i32_7 = arith.constant 24 : i32
    %25 = vector.broadcast %c24_i32_7 : i32 to vector<1x1x128xi32>
    %26 = arith.cmpi sge, %0, %25 : vector<1x1x128xi32>
    %c32_i32 = arith.constant 32 : i32
    %27 = vector.broadcast %c32_i32 : i32 to vector<1x1x128xi32>
    %28 = arith.cmpi slt, %0, %27 : vector<1x1x128xi32>
    %29 = arith.andi %26, %28 : vector<1x1x128xi1>
    %cst_8 = arith.constant 1.000000e+00 : f32
    %cst_9 = arith.constant 0.000000e+00 : f32
    %30 = vector.broadcast %cst_8 : f32 to vector<1x1x128xf32>
    %31 = vector.broadcast %cst_9 : f32 to vector<1x1x128xf32>
    %32 = arith.select %29, %30, %31 : vector<1x1x128xi1>, vector<1x1x128xf32>
    %c0_i32_10 = arith.constant 0 : i32
    %33 = vector.broadcast %c0_i32_10 : i32 to vector<1x1x128xi32>
    %34 = arith.cmpi sge, %0, %33 : vector<1x1x128xi32>
    %c4_i32 = arith.constant 4 : i32
    %35 = vector.broadcast %c4_i32 : i32 to vector<1x1x128xi32>
    %36 = arith.cmpi slt, %0, %35 : vector<1x1x128xi32>
    %37 = arith.andi %34, %36 : vector<1x1x128xi1>
    %cst_11 = arith.constant 1.000000e+00 : f32
    %cst_12 = arith.constant 0.000000e+00 : f32
    %38 = vector.broadcast %cst_11 : f32 to vector<1x1x128xf32>
    %39 = vector.broadcast %cst_12 : f32 to vector<1x1x128xf32>
    %40 = arith.select %37, %38, %39 : vector<1x1x128xi1>, vector<1x1x128xf32>
    %c4_i32_13 = arith.constant 4 : i32
    %41 = vector.broadcast %c4_i32_13 : i32 to vector<1x1x128xi32>
    %42 = arith.cmpi sge, %0, %41 : vector<1x1x128xi32>
    %c8_i32_14 = arith.constant 8 : i32
    %43 = vector.broadcast %c8_i32_14 : i32 to vector<1x1x128xi32>
    %44 = arith.cmpi slt, %0, %43 : vector<1x1x128xi32>
    %45 = arith.andi %42, %44 : vector<1x1x128xi1>
    %cst_15 = arith.constant 1.000000e+00 : f32
    %cst_16 = arith.constant 0.000000e+00 : f32
    %46 = vector.broadcast %cst_15 : f32 to vector<1x1x128xf32>
    %47 = vector.broadcast %cst_16 : f32 to vector<1x1x128xf32>
    %48 = arith.select %45, %46, %47 : vector<1x1x128xi1>, vector<1x1x128xf32>
    %c8_i32_17 = arith.constant 8 : i32
    %49 = vector.broadcast %c8_i32_17 : i32 to vector<1x1x128xi32>
    %50 = arith.cmpi sge, %0, %49 : vector<1x1x128xi32>
    %c12_i32 = arith.constant 12 : i32
    %51 = vector.broadcast %c12_i32 : i32 to vector<1x1x128xi32>
    %52 = arith.cmpi slt, %0, %51 : vector<1x1x128xi32>
    %53 = arith.andi %50, %52 : vector<1x1x128xi1>
    %cst_18 = arith.constant 1.000000e+00 : f32
    %cst_19 = arith.constant 0.000000e+00 : f32
    %54 = vector.broadcast %cst_18 : f32 to vector<1x1x128xf32>
    %55 = vector.broadcast %cst_19 : f32 to vector<1x1x128xf32>
    %56 = arith.select %53, %54, %55 : vector<1x1x128xi1>, vector<1x1x128xf32>
    %c12_i32_20 = arith.constant 12 : i32
    %57 = vector.broadcast %c12_i32_20 : i32 to vector<1x1x128xi32>
    %58 = arith.cmpi sge, %0, %57 : vector<1x1x128xi32>
    %c16_i32_21 = arith.constant 16 : i32
    %59 = vector.broadcast %c16_i32_21 : i32 to vector<1x1x128xi32>
    %60 = arith.cmpi slt, %0, %59 : vector<1x1x128xi32>
    %61 = arith.andi %58, %60 : vector<1x1x128xi1>
    %cst_22 = arith.constant 1.000000e+00 : f32
    %cst_23 = arith.constant 0.000000e+00 : f32
    %62 = vector.broadcast %cst_22 : f32 to vector<1x1x128xf32>
    %63 = vector.broadcast %cst_23 : f32 to vector<1x1x128xf32>
    %64 = arith.select %61, %62, %63 : vector<1x1x128xi1>, vector<1x1x128xf32>
    %c0 = arith.constant 0 : index
    %c0_24 = arith.constant 0 : index
    %c0_25 = arith.constant 0 : index
    %65 = vector.load %arg1[%c0, %c0_24, %c0_25] : memref<2x8x128xf32, #tpu.memory_space<vmem>>, vector<2x8x128xf32>
    %c0_26 = arith.constant 0 : index
    %c0_27 = arith.constant 0 : index
    %c0_28 = arith.constant 0 : index
    %66 = vector.load %arg2[%c0_26, %c0_27, %c0_28] : memref<2x64x128xf32, #tpu.memory_space<vmem>>, vector<2x64x128xf32>
    %c0_29 = arith.constant 0 : index
    %c0_30 = arith.constant 0 : index
    %c0_31 = arith.constant 0 : index
    %67 = vector.load %arg3[%c0_29, %c0_30, %c0_31] : memref<2x8x128xf32, #tpu.memory_space<vmem>>, vector<2x8x128xf32>
    %c0_32 = arith.constant 0 : index
    %c0_33 = arith.constant 0 : index
    %c0_34 = arith.constant 0 : index
    %68 = vector.load %arg4[%c0_32, %c0_33, %c0_34] : memref<2x64x128xf32, #tpu.memory_space<vmem>>, vector<2x64x128xf32>
    %69 = arith.addf %65, %67 : vector<2x8x128xf32>
    %70 = vector.shape_cast %69 : vector<2x8x128xf32> to vector<16x128xf32>
    %71 = arith.truncf %70 : vector<16x128xf32> to vector<16x128xbf16>
    %c0_35 = arith.constant 0 : index
    %c0_36 = arith.constant 0 : index
    %72 = vector.load %arg5[%c0_35, %c0_36] : memref<1792x128xbf16, #tpu.memory_space<vmem>>, vector<128x128xbf16>
    %cst_37 = arith.constant dense<0.000000e+00> : vector<16x128xf32>
    %73 = tpu.matmul %71, %72, %cst_37 {dimension_numbers = #tpu.dot_dimension_numbers<[1], [0], [0], [1], [0, 0, 1, 1], [], []>} : vector<16x128xbf16>, vector<128x128xbf16>, vector<16x128xf32> -> vector<16x128xf32>
    %c0_38 = arith.constant 0 : index
    %c0_39 = arith.constant 0 : index
    %74 = vector.load %arg6[%c0_38, %c0_39] : memref<176x128xf32, #tpu.memory_space<vmem>>, vector<1x128xf32>
    %75 = vector.broadcast %74 : vector<1x128xf32> to vector<16x128xf32>
    %76 = arith.addf %73, %75 : vector<16x128xf32>
    %77 = vector.shape_cast %76 : vector<16x128xf32> to vector<2x8x128xf32>
    %78 = vector.shape_cast %69 : vector<2x8x128xf32> to vector<16x128xf32>
    %79 = arith.truncf %78 : vector<16x128xf32> to vector<16x128xbf16>
    %c128 = arith.constant 128 : index
    %c0_40 = arith.constant 0 : index
    %80 = vector.load %arg5[%c128, %c0_40] : memref<1792x128xbf16, #tpu.memory_space<vmem>>, vector<128x128xbf16>
    %cst_41 = arith.constant dense<0.000000e+00> : vector<16x128xf32>
    %81 = tpu.matmul %79, %80, %cst_41 {dimension_numbers = #tpu.dot_dimension_numbers<[1], [0], [0], [1], [0, 0, 1, 1], [], []>} : vector<16x128xbf16>, vector<128x128xbf16>, vector<16x128xf32> -> vector<16x128xf32>
    %c8 = arith.constant 8 : index
    %c0_42 = arith.constant 0 : index
    %82 = vector.load %arg6[%c8, %c0_42] : memref<176x128xf32, #tpu.memory_space<vmem>>, vector<1x128xf32>
    %83 = vector.broadcast %82 : vector<1x128xf32> to vector<16x128xf32>
    %84 = arith.addf %81, %83 : vector<16x128xf32>
    %85 = vector.shape_cast %84 : vector<16x128xf32> to vector<2x8x128xf32>
    %86 = vector.shape_cast %65 : vector<2x8x128xf32> to vector<16x128xf32>
    %87 = arith.truncf %86 : vector<16x128xf32> to vector<16x128xbf16>
    %c256 = arith.constant 256 : index
    %c0_43 = arith.constant 0 : index
    %88 = vector.load %arg5[%c256, %c0_43] : memref<1792x128xbf16, #tpu.memory_space<vmem>>, vector<128x128xbf16>
    %cst_44 = arith.constant dense<0.000000e+00> : vector<16x128xf32>
    %89 = tpu.matmul %87, %88, %cst_44 {dimension_numbers = #tpu.dot_dimension_numbers<[1], [0], [0], [1], [0, 0, 1, 1], [], []>} : vector<16x128xbf16>, vector<128x128xbf16>, vector<16x128xf32> -> vector<16x128xf32>
    %c16 = arith.constant 16 : index
    %c0_45 = arith.constant 0 : index
    %90 = vector.load %arg6[%c16, %c0_45] : memref<176x128xf32, #tpu.memory_space<vmem>>, vector<1x128xf32>
    %91 = vector.broadcast %90 : vector<1x128xf32> to vector<16x128xf32>
    %92 = arith.addf %89, %91 : vector<16x128xf32>
    %93 = vector.shape_cast %92 : vector<16x128xf32> to vector<2x8x128xf32>
    %94 = vector.broadcast %8 : vector<1x1x128xf32> to vector<2x8x128xf32>
    %95 = arith.mulf %77, %94 : vector<2x8x128xf32>
    %96 = vector.broadcast %16 : vector<1x1x128xf32> to vector<2x8x128xf32>
    %97 = arith.mulf %77, %96 : vector<2x8x128xf32>
    %98 = vector.broadcast %24 : vector<1x1x128xf32> to vector<2x8x128xf32>
    %99 = arith.mulf %77, %98 : vector<2x8x128xf32>
    %100 = vector.broadcast %32 : vector<1x1x128xf32> to vector<2x8x128xf32>
    %101 = arith.mulf %77, %100 : vector<2x8x128xf32>
    %102 = tpu.concatenate %95, %97, %99, %101 in 1 : vector<2x8x128xf32>, vector<2x8x128xf32>, vector<2x8x128xf32>, vector<2x8x128xf32> -> vector<2x32x128xf32>
    %103 = arith.truncf %102 : vector<2x32x128xf32> to vector<2x32x128xbf16>
    %104 = arith.truncf %85 : vector<2x8x128xf32> to vector<2x8x128xbf16>
    %cst_46 = arith.constant dense<0.000000e+00> : vector<2x32x8xf32>
    %105 = tpu.matmul %103, %104, %cst_46 {dimension_numbers = #tpu.dot_dimension_numbers<[2], [2], [1], [1], [0, 0, 0, 1, 1, 1], [0], [0]>} : vector<2x32x128xbf16>, vector<2x8x128xbf16>, vector<2x32x8xf32> -> vector<2x32x8xf32>
    %cst_47 = arith.constant 0.353553385 : f32
    %106 = vector.broadcast %cst_47 : f32 to vector<2x32x8xf32>
    %107 = arith.mulf %105, %106 : vector<2x32x8xf32>
    %cst_48 = arith.constant dense<0xFF800000> : vector<2x32xf32>
    %108 = vector.multi_reduction <maximumf>, %107, %cst_48 [2] : vector<2x32x8xf32> to vector<2x32xf32>
    %109 = vector.shape_cast %108 : vector<2x32xf32> to vector<2x32x1xf32>
    %110 = vector.broadcast %109 : vector<2x32x1xf32> to vector<2x32x8xf32>
    %111 = arith.subf %107, %110 : vector<2x32x8xf32>
    %112 = math.exp %111 : vector<2x32x8xf32>
    %cst_49 = arith.constant dense<0.000000e+00> : vector<2x32xf32>
    %113 = vector.multi_reduction <add>, %112, %cst_49 [2] : vector<2x32x8xf32> to vector<2x32xf32>
    %114 = vector.shape_cast %113 : vector<2x32xf32> to vector<2x32x1xf32>
    %115 = tpu.reciprocal %114 {approx = true} : vector<2x32x1xf32> -> vector<2x32x1xf32>
    %116 = vector.broadcast %115 : vector<2x32x1xf32> to vector<2x32x8xf32>
    %117 = arith.mulf %112, %116 : vector<2x32x8xf32>
    %118 = arith.truncf %117 : vector<2x32x8xf32> to vector<2x32x8xbf16>
    %119 = arith.truncf %93 : vector<2x8x128xf32> to vector<2x8x128xbf16>
    %cst_50 = arith.constant dense<0.000000e+00> : vector<2x32x128xf32>
    %120 = tpu.matmul %118, %119, %cst_50 {dimension_numbers = #tpu.dot_dimension_numbers<[2], [1], [1], [2], [0, 0, 0, 1, 1, 2], [0], [0]>} : vector<2x32x8xbf16>, vector<2x8x128xbf16>, vector<2x32x128xf32> -> vector<2x32x128xf32>
    %121 = vector.extract_strided_slice %120 {offsets = [0, 0, 0], sizes = [2, 8, 128], strides = [1, 1, 1]} : vector<2x32x128xf32> to vector<2x8x128xf32>
    %122 = vector.broadcast %8 : vector<1x1x128xf32> to vector<2x8x128xf32>
    %123 = arith.mulf %121, %122 : vector<2x8x128xf32>
    %124 = vector.extract_strided_slice %120 {offsets = [0, 8, 0], sizes = [2, 8, 128], strides = [1, 1, 1]} : vector<2x32x128xf32> to vector<2x8x128xf32>
    %125 = vector.broadcast %16 : vector<1x1x128xf32> to vector<2x8x128xf32>
    %126 = arith.mulf %124, %125 : vector<2x8x128xf32>
    %127 = arith.addf %123, %126 : vector<2x8x128xf32>
    %128 = vector.extract_strided_slice %120 {offsets = [0, 16, 0], sizes = [2, 8, 128], strides = [1, 1, 1]} : vector<2x32x128xf32> to vector<2x8x128xf32>
    %129 = vector.broadcast %24 : vector<1x1x128xf32> to vector<2x8x128xf32>
    %130 = arith.mulf %128, %129 : vector<2x8x128xf32>
    %131 = arith.addf %127, %130 : vector<2x8x128xf32>
    %132 = vector.extract_strided_slice %120 {offsets = [0, 24, 0], sizes = [2, 8, 128], strides = [1, 1, 1]} : vector<2x32x128xf32> to vector<2x8x128xf32>
    %133 = vector.broadcast %32 : vector<1x1x128xf32> to vector<2x8x128xf32>
    %134 = arith.mulf %132, %133 : vector<2x8x128xf32>
    %135 = arith.addf %131, %134 : vector<2x8x128xf32>
    %136 = vector.shape_cast %135 : vector<2x8x128xf32> to vector<16x128xf32>
    %137 = arith.truncf %136 : vector<16x128xf32> to vector<16x128xbf16>
    %c384 = arith.constant 384 : index
    %c0_51 = arith.constant 0 : index
    %138 = vector.load %arg5[%c384, %c0_51] : memref<1792x128xbf16, #tpu.memory_space<vmem>>, vector<128x128xbf16>
    %cst_52 = arith.constant dense<0.000000e+00> : vector<16x128xf32>
    %139 = tpu.matmul %137, %138, %cst_52 {dimension_numbers = #tpu.dot_dimension_numbers<[1], [0], [0], [1], [0, 0, 1, 1], [], []>} : vector<16x128xbf16>, vector<128x128xbf16>, vector<16x128xf32> -> vector<16x128xf32>
    %c24 = arith.constant 24 : index
    %c0_53 = arith.constant 0 : index
    %140 = vector.load %arg6[%c24, %c0_53] : memref<176x128xf32, #tpu.memory_space<vmem>>, vector<1x128xf32>
    %141 = vector.broadcast %140 : vector<1x128xf32> to vector<16x128xf32>
    %142 = arith.addf %139, %141 : vector<16x128xf32>
    %143 = vector.shape_cast %142 : vector<16x128xf32> to vector<2x8x128xf32>
    %144 = arith.addf %65, %143 : vector<2x8x128xf32>
    %145 = vector.shape_cast %144 : vector<2x8x128xf32> to vector<16x128xf32>
    %cst_54 = arith.constant dense<0.000000e+00> : vector<16xf32>
    %146 = vector.multi_reduction <add>, %145, %cst_54 [1] : vector<16x128xf32> to vector<16xf32>
    %147 = vector.shape_cast %146 : vector<16xf32> to vector<16x1xf32>
    %cst_55 = arith.constant 3.125000e-02 : f32
    %148 = vector.broadcast %cst_55 : f32 to vector<16x1xf32>
    %149 = arith.mulf %147, %148 : vector<16x1xf32>
    %150 = arith.mulf %145, %145 : vector<16x128xf32>
    %cst_56 = arith.constant dense<0.000000e+00> : vector<16xf32>
    %151 = vector.multi_reduction <add>, %150, %cst_56 [1] : vector<16x128xf32> to vector<16xf32>
    %152 = vector.shape_cast %151 : vector<16xf32> to vector<16x1xf32>
    %cst_57 = arith.constant 3.125000e-02 : f32
    %153 = vector.broadcast %cst_57 : f32 to vector<16x1xf32>
    %154 = arith.mulf %152, %153 : vector<16x1xf32>
    %155 = arith.mulf %149, %149 : vector<16x1xf32>
    %156 = arith.subf %154, %155 : vector<16x1xf32>
    %157 = vector.broadcast %149 : vector<16x1xf32> to vector<16x128xf32>
    %158 = arith.subf %145, %157 : vector<16x128xf32>
    %cst_58 = arith.constant 9.99999974E-6 : f32
    %159 = vector.broadcast %cst_58 : f32 to vector<16x1xf32>
    %160 = arith.addf %156, %159 : vector<16x1xf32>
    %161 = math.rsqrt %160 : vector<16x1xf32>
    %162 = vector.broadcast %161 : vector<16x1xf32> to vector<16x128xf32>
    %163 = arith.mulf %158, %162 : vector<16x128xf32>
    %c112 = arith.constant 112 : index
    %c0_59 = arith.constant 0 : index
    %164 = vector.load %arg6[%c112, %c0_59] : memref<176x128xf32, #tpu.memory_space<vmem>>, vector<1x128xf32>
    %165 = vector.broadcast %164 : vector<1x128xf32> to vector<16x128xf32>
    %166 = arith.mulf %163, %165 : vector<16x128xf32>
    %c120 = arith.constant 120 : index
    %c0_60 = arith.constant 0 : index
    %167 = vector.load %arg6[%c120, %c0_60] : memref<176x128xf32, #tpu.memory_space<vmem>>, vector<1x128xf32>
    %168 = vector.broadcast %167 : vector<1x128xf32> to vector<16x128xf32>
    %169 = arith.addf %166, %168 : vector<16x128xf32>
    %170 = vector.shape_cast %169 : vector<16x128xf32> to vector<2x8x128xf32>
    %171 = arith.addf %66, %68 : vector<2x64x128xf32>
    %172 = arith.addf %170, %67 : vector<2x8x128xf32>
    %173 = vector.shape_cast %172 : vector<2x8x128xf32> to vector<16x128xf32>
    %174 = arith.truncf %173 : vector<16x128xf32> to vector<16x128xbf16>
    %c512 = arith.constant 512 : index
    %c0_61 = arith.constant 0 : index
    %175 = vector.load %arg5[%c512, %c0_61] : memref<1792x128xbf16, #tpu.memory_space<vmem>>, vector<128x128xbf16>
    %cst_62 = arith.constant dense<0.000000e+00> : vector<16x128xf32>
    %176 = tpu.matmul %174, %175, %cst_62 {dimension_numbers = #tpu.dot_dimension_numbers<[1], [0], [0], [1], [0, 0, 1, 1], [], []>} : vector<16x128xbf16>, vector<128x128xbf16>, vector<16x128xf32> -> vector<16x128xf32>
    %c32 = arith.constant 32 : index
    %c0_63 = arith.constant 0 : index
    %177 = vector.load %arg6[%c32, %c0_63] : memref<176x128xf32, #tpu.memory_space<vmem>>, vector<1x128xf32>
    %178 = vector.broadcast %177 : vector<1x128xf32> to vector<16x128xf32>
    %179 = arith.addf %176, %178 : vector<16x128xf32>
    %180 = vector.shape_cast %179 : vector<16x128xf32> to vector<2x8x128xf32>
    %181 = vector.shape_cast %171 : vector<2x64x128xf32> to vector<128x128xf32>
    %182 = arith.truncf %181 : vector<128x128xf32> to vector<128x128xbf16>
    %c640 = arith.constant 640 : index
    %c0_64 = arith.constant 0 : index
    %183 = vector.load %arg5[%c640, %c0_64] : memref<1792x128xbf16, #tpu.memory_space<vmem>>, vector<128x128xbf16>
    %cst_65 = arith.constant dense<0.000000e+00> : vector<128x128xf32>
    %184 = tpu.matmul %182, %183, %cst_65 {dimension_numbers = #tpu.dot_dimension_numbers<[1], [0], [0], [1], [0, 0, 1, 1], [], []>} : vector<128x128xbf16>, vector<128x128xbf16>, vector<128x128xf32> -> vector<128x128xf32>
    %c40 = arith.constant 40 : index
    %c0_66 = arith.constant 0 : index
    %185 = vector.load %arg6[%c40, %c0_66] : memref<176x128xf32, #tpu.memory_space<vmem>>, vector<1x128xf32>
    %186 = vector.broadcast %185 : vector<1x128xf32> to vector<128x128xf32>
    %187 = arith.addf %184, %186 : vector<128x128xf32>
    %188 = vector.shape_cast %187 : vector<128x128xf32> to vector<2x64x128xf32>
    %189 = vector.shape_cast %66 : vector<2x64x128xf32> to vector<128x128xf32>
    %190 = arith.truncf %189 : vector<128x128xf32> to vector<128x128xbf16>
    %c768 = arith.constant 768 : index
    %c0_67 = arith.constant 0 : index
    %191 = vector.load %arg5[%c768, %c0_67] : memref<1792x128xbf16, #tpu.memory_space<vmem>>, vector<128x128xbf16>
    %cst_68 = arith.constant dense<0.000000e+00> : vector<128x128xf32>
    %192 = tpu.matmul %190, %191, %cst_68 {dimension_numbers = #tpu.dot_dimension_numbers<[1], [0], [0], [1], [0, 0, 1, 1], [], []>} : vector<128x128xbf16>, vector<128x128xbf16>, vector<128x128xf32> -> vector<128x128xf32>
    %c48 = arith.constant 48 : index
    %c0_69 = arith.constant 0 : index
    %193 = vector.load %arg6[%c48, %c0_69] : memref<176x128xf32, #tpu.memory_space<vmem>>, vector<1x128xf32>
    %194 = vector.broadcast %193 : vector<1x128xf32> to vector<128x128xf32>
    %195 = arith.addf %192, %194 : vector<128x128xf32>
    %196 = vector.shape_cast %195 : vector<128x128xf32> to vector<2x64x128xf32>
    %197 = vector.broadcast %40 : vector<1x1x128xf32> to vector<2x8x128xf32>
    %198 = arith.mulf %180, %197 : vector<2x8x128xf32>
    %199 = vector.broadcast %48 : vector<1x1x128xf32> to vector<2x8x128xf32>
    %200 = arith.mulf %180, %199 : vector<2x8x128xf32>
    %201 = vector.broadcast %56 : vector<1x1x128xf32> to vector<2x8x128xf32>
    %202 = arith.mulf %180, %201 : vector<2x8x128xf32>
    %203 = vector.broadcast %64 : vector<1x1x128xf32> to vector<2x8x128xf32>
    %204 = arith.mulf %180, %203 : vector<2x8x128xf32>
    %205 = tpu.concatenate %198, %200, %202, %204 in 1 : vector<2x8x128xf32>, vector<2x8x128xf32>, vector<2x8x128xf32>, vector<2x8x128xf32> -> vector<2x32x128xf32>
    %206 = arith.truncf %205 : vector<2x32x128xf32> to vector<2x32x128xbf16>
    %207 = arith.truncf %188 : vector<2x64x128xf32> to vector<2x64x128xbf16>
    %cst_70 = arith.constant dense<0.000000e+00> : vector<2x32x64xf32>
    %208 = tpu.matmul %206, %207, %cst_70 {dimension_numbers = #tpu.dot_dimension_numbers<[2], [2], [1], [1], [0, 0, 0, 1, 1, 1], [0], [0]>} : vector<2x32x128xbf16>, vector<2x64x128xbf16>, vector<2x32x64xf32> -> vector<2x32x64xf32>
    %cst_71 = arith.constant 5.000000e-01 : f32
    %209 = vector.broadcast %cst_71 : f32 to vector<2x32x64xf32>
    %210 = arith.mulf %208, %209 : vector<2x32x64xf32>
    %cst_72 = arith.constant dense<0xFF800000> : vector<2x32xf32>
    %211 = vector.multi_reduction <maximumf>, %210, %cst_72 [2] : vector<2x32x64xf32> to vector<2x32xf32>
    %212 = vector.shape_cast %211 : vector<2x32xf32> to vector<2x32x1xf32>
    %213 = vector.broadcast %212 : vector<2x32x1xf32> to vector<2x32x64xf32>
    %214 = arith.subf %210, %213 : vector<2x32x64xf32>
    %215 = math.exp %214 : vector<2x32x64xf32>
    %cst_73 = arith.constant dense<0.000000e+00> : vector<2x32xf32>
    %216 = vector.multi_reduction <add>, %215, %cst_73 [2] : vector<2x32x64xf32> to vector<2x32xf32>
    %217 = vector.shape_cast %216 : vector<2x32xf32> to vector<2x32x1xf32>
    %218 = tpu.reciprocal %217 {approx = true} : vector<2x32x1xf32> -> vector<2x32x1xf32>
    %219 = vector.broadcast %218 : vector<2x32x1xf32> to vector<2x32x64xf32>
    %220 = arith.mulf %215, %219 : vector<2x32x64xf32>
    %221 = arith.truncf %220 : vector<2x32x64xf32> to vector<2x32x64xbf16>
    %222 = arith.truncf %196 : vector<2x64x128xf32> to vector<2x64x128xbf16>
    %cst_74 = arith.constant dense<0.000000e+00> : vector<2x32x128xf32>
    %223 = tpu.matmul %221, %222, %cst_74 {dimension_numbers = #tpu.dot_dimension_numbers<[2], [1], [1], [2], [0, 0, 0, 1, 1, 2], [0], [0]>} : vector<2x32x64xbf16>, vector<2x64x128xbf16>, vector<2x32x128xf32> -> vector<2x32x128xf32>
    %224 = vector.extract_strided_slice %223 {offsets = [0, 0, 0], sizes = [2, 8, 128], strides = [1, 1, 1]} : vector<2x32x128xf32> to vector<2x8x128xf32>
    %225 = vector.broadcast %40 : vector<1x1x128xf32> to vector<2x8x128xf32>
    %226 = arith.mulf %224, %225 : vector<2x8x128xf32>
    %227 = vector.extract_strided_slice %223 {offsets = [0, 8, 0], sizes = [2, 8, 128], strides = [1, 1, 1]} : vector<2x32x128xf32> to vector<2x8x128xf32>
    %228 = vector.broadcast %48 : vector<1x1x128xf32> to vector<2x8x128xf32>
    %229 = arith.mulf %227, %228 : vector<2x8x128xf32>
    %230 = arith.addf %226, %229 : vector<2x8x128xf32>
    %231 = vector.extract_strided_slice %223 {offsets = [0, 16, 0], sizes = [2, 8, 128], strides = [1, 1, 1]} : vector<2x32x128xf32> to vector<2x8x128xf32>
    %232 = vector.broadcast %56 : vector<1x1x128xf32> to vector<2x8x128xf32>
    %233 = arith.mulf %231, %232 : vector<2x8x128xf32>
    %234 = arith.addf %230, %233 : vector<2x8x128xf32>
    %235 = vector.extract_strided_slice %223 {offsets = [0, 24, 0], sizes = [2, 8, 128], strides = [1, 1, 1]} : vector<2x32x128xf32> to vector<2x8x128xf32>
    %236 = vector.broadcast %64 : vector<1x1x128xf32> to vector<2x8x128xf32>
    %237 = arith.mulf %235, %236 : vector<2x8x128xf32>
    %238 = arith.addf %234, %237 : vector<2x8x128xf32>
    %239 = vector.shape_cast %238 : vector<2x8x128xf32> to vector<16x128xf32>
    %240 = arith.truncf %239 : vector<16x128xf32> to vector<16x128xbf16>
    %c896 = arith.constant 896 : index
    %c0_75 = arith.constant 0 : index
    %241 = vector.load %arg5[%c896, %c0_75] : memref<1792x128xbf16, #tpu.memory_space<vmem>>, vector<128x128xbf16>
    %cst_76 = arith.constant dense<0.000000e+00> : vector<16x128xf32>
    %242 = tpu.matmul %240, %241, %cst_76 {dimension_numbers = #tpu.dot_dimension_numbers<[1], [0], [0], [1], [0, 0, 1, 1], [], []>} : vector<16x128xbf16>, vector<128x128xbf16>, vector<16x128xf32> -> vector<16x128xf32>
    %c56 = arith.constant 56 : index
    %c0_77 = arith.constant 0 : index
    %243 = vector.load %arg6[%c56, %c0_77] : memref<176x128xf32, #tpu.memory_space<vmem>>, vector<1x128xf32>
    %244 = vector.broadcast %243 : vector<1x128xf32> to vector<16x128xf32>
    %245 = arith.addf %242, %244 : vector<16x128xf32>
    %246 = vector.shape_cast %245 : vector<16x128xf32> to vector<2x8x128xf32>
    %247 = arith.addf %170, %246 : vector<2x8x128xf32>
    %248 = vector.shape_cast %247 : vector<2x8x128xf32> to vector<16x128xf32>
    %cst_78 = arith.constant dense<0.000000e+00> : vector<16xf32>
    %249 = vector.multi_reduction <add>, %248, %cst_78 [1] : vector<16x128xf32> to vector<16xf32>
    %250 = vector.shape_cast %249 : vector<16xf32> to vector<16x1xf32>
    %cst_79 = arith.constant 3.125000e-02 : f32
    %251 = vector.broadcast %cst_79 : f32 to vector<16x1xf32>
    %252 = arith.mulf %250, %251 : vector<16x1xf32>
    %253 = arith.mulf %248, %248 : vector<16x128xf32>
    %cst_80 = arith.constant dense<0.000000e+00> : vector<16xf32>
    %254 = vector.multi_reduction <add>, %253, %cst_80 [1] : vector<16x128xf32> to vector<16xf32>
    %255 = vector.shape_cast %254 : vector<16xf32> to vector<16x1xf32>
    %cst_81 = arith.constant 3.125000e-02 : f32
    %256 = vector.broadcast %cst_81 : f32 to vector<16x1xf32>
    %257 = arith.mulf %255, %256 : vector<16x1xf32>
    %258 = arith.mulf %252, %252 : vector<16x1xf32>
    %259 = arith.subf %257, %258 : vector<16x1xf32>
    %260 = vector.broadcast %252 : vector<16x1xf32> to vector<16x128xf32>
    %261 = arith.subf %248, %260 : vector<16x128xf32>
    %cst_82 = arith.constant 9.99999974E-6 : f32
    %262 = vector.broadcast %cst_82 : f32 to vector<16x1xf32>
    %263 = arith.addf %259, %262 : vector<16x1xf32>
    %264 = math.rsqrt %263 : vector<16x1xf32>
    %265 = vector.broadcast %264 : vector<16x1xf32> to vector<16x128xf32>
    %266 = arith.mulf %261, %265 : vector<16x128xf32>
    %c128_83 = arith.constant 128 : index
    %c0_84 = arith.constant 0 : index
    %267 = vector.load %arg6[%c128_83, %c0_84] : memref<176x128xf32, #tpu.memory_space<vmem>>, vector<1x128xf32>
    %268 = vector.broadcast %267 : vector<1x128xf32> to vector<16x128xf32>
    %269 = arith.mulf %266, %268 : vector<16x128xf32>
    %c136 = arith.constant 136 : index
    %c0_85 = arith.constant 0 : index
    %270 = vector.load %arg6[%c136, %c0_85] : memref<176x128xf32, #tpu.memory_space<vmem>>, vector<1x128xf32>
    %271 = vector.broadcast %270 : vector<1x128xf32> to vector<16x128xf32>
    %272 = arith.addf %269, %271 : vector<16x128xf32>
    %273 = vector.shape_cast %272 : vector<16x128xf32> to vector<2x8x128xf32>
    %274 = vector.shape_cast %273 : vector<2x8x128xf32> to vector<16x128xf32>
    %275 = arith.truncf %274 : vector<16x128xf32> to vector<16x128xbf16>
    %c1536 = arith.constant 1536 : index
    %c0_86 = arith.constant 0 : index
    %276 = vector.load %arg5[%c1536, %c0_86] : memref<1792x128xbf16, #tpu.memory_space<vmem>>, vector<128x128xbf16>
    %cst_87 = arith.constant dense<0.000000e+00> : vector<16x128xf32>
    %277 = tpu.matmul %275, %276, %cst_87 {dimension_numbers = #tpu.dot_dimension_numbers<[1], [0], [0], [1], [0, 0, 1, 1], [], []>} : vector<16x128xbf16>, vector<128x128xbf16>, vector<16x128xf32> -> vector<16x128xf32>
    %c96 = arith.constant 96 : index
    %c0_88 = arith.constant 0 : index
    %278 = vector.load %arg6[%c96, %c0_88] : memref<176x128xf32, #tpu.memory_space<vmem>>, vector<1x128xf32>
    %279 = vector.broadcast %278 : vector<1x128xf32> to vector<16x128xf32>
    %280 = arith.addf %277, %279 : vector<16x128xf32>
    %281 = vector.shape_cast %280 : vector<16x128xf32> to vector<2x8x128xf32>
    %cst_89 = arith.constant 0.000000e+00 : f32
    %282 = vector.broadcast %cst_89 : f32 to vector<2x8x128xf32>
    %283 = arith.maximumf %281, %282 : vector<2x8x128xf32>
    %284 = vector.shape_cast %283 : vector<2x8x128xf32> to vector<16x128xf32>
    %285 = arith.truncf %284 : vector<16x128xf32> to vector<16x128xbf16>
    %c1664 = arith.constant 1664 : index
    %c0_90 = arith.constant 0 : index
    %286 = vector.load %arg5[%c1664, %c0_90] : memref<1792x128xbf16, #tpu.memory_space<vmem>>, vector<128x128xbf16>
    %cst_91 = arith.constant dense<0.000000e+00> : vector<16x128xf32>
    %287 = tpu.matmul %285, %286, %cst_91 {dimension_numbers = #tpu.dot_dimension_numbers<[1], [0], [0], [1], [0, 0, 1, 1], [], []>} : vector<16x128xbf16>, vector<128x128xbf16>, vector<16x128xf32> -> vector<16x128xf32>
    %c104 = arith.constant 104 : index
    %c0_92 = arith.constant 0 : index
    %288 = vector.load %arg6[%c104, %c0_92] : memref<176x128xf32, #tpu.memory_space<vmem>>, vector<1x128xf32>
    %289 = vector.broadcast %288 : vector<1x128xf32> to vector<16x128xf32>
    %290 = arith.addf %287, %289 : vector<16x128xf32>
    %291 = vector.shape_cast %290 : vector<16x128xf32> to vector<2x8x128xf32>
    %292 = arith.addf %273, %291 : vector<2x8x128xf32>
    %293 = vector.shape_cast %292 : vector<2x8x128xf32> to vector<16x128xf32>
    %cst_93 = arith.constant dense<0.000000e+00> : vector<16xf32>
    %294 = vector.multi_reduction <add>, %293, %cst_93 [1] : vector<16x128xf32> to vector<16xf32>
    %295 = vector.shape_cast %294 : vector<16xf32> to vector<16x1xf32>
    %cst_94 = arith.constant 3.125000e-02 : f32
    %296 = vector.broadcast %cst_94 : f32 to vector<16x1xf32>
    %297 = arith.mulf %295, %296 : vector<16x1xf32>
    %298 = arith.mulf %293, %293 : vector<16x128xf32>
    %cst_95 = arith.constant dense<0.000000e+00> : vector<16xf32>
    %299 = vector.multi_reduction <add>, %298, %cst_95 [1] : vector<16x128xf32> to vector<16xf32>
    %300 = vector.shape_cast %299 : vector<16xf32> to vector<16x1xf32>
    %cst_96 = arith.constant 3.125000e-02 : f32
    %301 = vector.broadcast %cst_96 : f32 to vector<16x1xf32>
    %302 = arith.mulf %300, %301 : vector<16x1xf32>
    %303 = arith.mulf %297, %297 : vector<16x1xf32>
    %304 = arith.subf %302, %303 : vector<16x1xf32>
    %305 = vector.broadcast %297 : vector<16x1xf32> to vector<16x128xf32>
    %306 = arith.subf %293, %305 : vector<16x128xf32>
    %cst_97 = arith.constant 9.99999974E-6 : f32
    %307 = vector.broadcast %cst_97 : f32 to vector<16x1xf32>
    %308 = arith.addf %304, %307 : vector<16x1xf32>
    %309 = math.rsqrt %308 : vector<16x1xf32>
    %310 = vector.broadcast %309 : vector<16x1xf32> to vector<16x128xf32>
    %311 = arith.mulf %306, %310 : vector<16x128xf32>
    %c144 = arith.constant 144 : index
    %c0_98 = arith.constant 0 : index
    %312 = vector.load %arg6[%c144, %c0_98] : memref<176x128xf32, #tpu.memory_space<vmem>>, vector<1x128xf32>
    %313 = vector.broadcast %312 : vector<1x128xf32> to vector<16x128xf32>
    %314 = arith.mulf %311, %313 : vector<16x128xf32>
    %c152 = arith.constant 152 : index
    %c0_99 = arith.constant 0 : index
    %315 = vector.load %arg6[%c152, %c0_99] : memref<176x128xf32, #tpu.memory_space<vmem>>, vector<1x128xf32>
    %316 = vector.broadcast %315 : vector<1x128xf32> to vector<16x128xf32>
    %317 = arith.addf %314, %316 : vector<16x128xf32>
    %318 = vector.shape_cast %317 : vector<16x128xf32> to vector<2x8x128xf32>
    %319 = arith.addf %318, %67 : vector<2x8x128xf32>
    %320 = vector.shape_cast %171 : vector<2x64x128xf32> to vector<128x128xf32>
    %321 = arith.truncf %320 : vector<128x128xf32> to vector<128x128xbf16>
    %c1024 = arith.constant 1024 : index
    %c0_100 = arith.constant 0 : index
    %322 = vector.load %arg5[%c1024, %c0_100] : memref<1792x128xbf16, #tpu.memory_space<vmem>>, vector<128x128xbf16>
    %cst_101 = arith.constant dense<0.000000e+00> : vector<128x128xf32>
    %323 = tpu.matmul %321, %322, %cst_101 {dimension_numbers = #tpu.dot_dimension_numbers<[1], [0], [0], [1], [0, 0, 1, 1], [], []>} : vector<128x128xbf16>, vector<128x128xbf16>, vector<128x128xf32> -> vector<128x128xf32>
    %c64 = arith.constant 64 : index
    %c0_102 = arith.constant 0 : index
    %324 = vector.load %arg6[%c64, %c0_102] : memref<176x128xf32, #tpu.memory_space<vmem>>, vector<1x128xf32>
    %325 = vector.broadcast %324 : vector<1x128xf32> to vector<128x128xf32>
    %326 = arith.addf %323, %325 : vector<128x128xf32>
    %327 = vector.shape_cast %326 : vector<128x128xf32> to vector<2x64x128xf32>
    %328 = vector.shape_cast %319 : vector<2x8x128xf32> to vector<16x128xf32>
    %329 = arith.truncf %328 : vector<16x128xf32> to vector<16x128xbf16>
    %c1152 = arith.constant 1152 : index
    %c0_103 = arith.constant 0 : index
    %330 = vector.load %arg5[%c1152, %c0_103] : memref<1792x128xbf16, #tpu.memory_space<vmem>>, vector<128x128xbf16>
    %cst_104 = arith.constant dense<0.000000e+00> : vector<16x128xf32>
    %331 = tpu.matmul %329, %330, %cst_104 {dimension_numbers = #tpu.dot_dimension_numbers<[1], [0], [0], [1], [0, 0, 1, 1], [], []>} : vector<16x128xbf16>, vector<128x128xbf16>, vector<16x128xf32> -> vector<16x128xf32>
    %c72 = arith.constant 72 : index
    %c0_105 = arith.constant 0 : index
    %332 = vector.load %arg6[%c72, %c0_105] : memref<176x128xf32, #tpu.memory_space<vmem>>, vector<1x128xf32>
    %333 = vector.broadcast %332 : vector<1x128xf32> to vector<16x128xf32>
    %334 = arith.addf %331, %333 : vector<16x128xf32>
    %335 = vector.shape_cast %334 : vector<16x128xf32> to vector<2x8x128xf32>
    %336 = vector.shape_cast %318 : vector<2x8x128xf32> to vector<16x128xf32>
    %337 = arith.truncf %336 : vector<16x128xf32> to vector<16x128xbf16>
    %c1280 = arith.constant 1280 : index
    %c0_106 = arith.constant 0 : index
    %338 = vector.load %arg5[%c1280, %c0_106] : memref<1792x128xbf16, #tpu.memory_space<vmem>>, vector<128x128xbf16>
    %cst_107 = arith.constant dense<0.000000e+00> : vector<16x128xf32>
    %339 = tpu.matmul %337, %338, %cst_107 {dimension_numbers = #tpu.dot_dimension_numbers<[1], [0], [0], [1], [0, 0, 1, 1], [], []>} : vector<16x128xbf16>, vector<128x128xbf16>, vector<16x128xf32> -> vector<16x128xf32>
    %c80 = arith.constant 80 : index
    %c0_108 = arith.constant 0 : index
    %340 = vector.load %arg6[%c80, %c0_108] : memref<176x128xf32, #tpu.memory_space<vmem>>, vector<1x128xf32>
    %341 = vector.broadcast %340 : vector<1x128xf32> to vector<16x128xf32>
    %342 = arith.addf %339, %341 : vector<16x128xf32>
    %343 = vector.shape_cast %342 : vector<16x128xf32> to vector<2x8x128xf32>
    %344 = vector.broadcast %40 : vector<1x1x128xf32> to vector<2x64x128xf32>
    %345 = arith.mulf %327, %344 : vector<2x64x128xf32>
    %346 = vector.broadcast %48 : vector<1x1x128xf32> to vector<2x64x128xf32>
    %347 = arith.mulf %327, %346 : vector<2x64x128xf32>
    %348 = vector.broadcast %56 : vector<1x1x128xf32> to vector<2x64x128xf32>
    %349 = arith.mulf %327, %348 : vector<2x64x128xf32>
    %350 = vector.broadcast %64 : vector<1x1x128xf32> to vector<2x64x128xf32>
    %351 = arith.mulf %327, %350 : vector<2x64x128xf32>
    %352 = tpu.concatenate %345, %347, %349, %351 in 1 : vector<2x64x128xf32>, vector<2x64x128xf32>, vector<2x64x128xf32>, vector<2x64x128xf32> -> vector<2x256x128xf32>
    %353 = arith.truncf %352 : vector<2x256x128xf32> to vector<2x256x128xbf16>
    %354 = arith.truncf %335 : vector<2x8x128xf32> to vector<2x8x128xbf16>
    %cst_109 = arith.constant dense<0.000000e+00> : vector<2x256x8xf32>
    %355 = tpu.matmul %353, %354, %cst_109 {dimension_numbers = #tpu.dot_dimension_numbers<[2], [2], [1], [1], [0, 0, 0, 1, 1, 1], [0], [0]>} : vector<2x256x128xbf16>, vector<2x8x128xbf16>, vector<2x256x8xf32> -> vector<2x256x8xf32>
    %cst_110 = arith.constant 5.000000e-01 : f32
    %356 = vector.broadcast %cst_110 : f32 to vector<2x256x8xf32>
    %357 = arith.mulf %355, %356 : vector<2x256x8xf32>
    %cst_111 = arith.constant dense<0xFF800000> : vector<2x256xf32>
    %358 = vector.multi_reduction <maximumf>, %357, %cst_111 [2] : vector<2x256x8xf32> to vector<2x256xf32>
    %359 = vector.shape_cast %358 : vector<2x256xf32> to vector<2x256x1xf32>
    %360 = vector.broadcast %359 : vector<2x256x1xf32> to vector<2x256x8xf32>
    %361 = arith.subf %357, %360 : vector<2x256x8xf32>
    %362 = math.exp %361 : vector<2x256x8xf32>
    %cst_112 = arith.constant dense<0.000000e+00> : vector<2x256xf32>
    %363 = vector.multi_reduction <add>, %362, %cst_112 [2] : vector<2x256x8xf32> to vector<2x256xf32>
    %364 = vector.shape_cast %363 : vector<2x256xf32> to vector<2x256x1xf32>
    %365 = tpu.reciprocal %364 {approx = true} : vector<2x256x1xf32> -> vector<2x256x1xf32>
    %366 = vector.broadcast %365 : vector<2x256x1xf32> to vector<2x256x8xf32>
    %367 = arith.mulf %362, %366 : vector<2x256x8xf32>
    %368 = arith.truncf %367 : vector<2x256x8xf32> to vector<2x256x8xbf16>
    %369 = arith.truncf %343 : vector<2x8x128xf32> to vector<2x8x128xbf16>
    %cst_113 = arith.constant dense<0.000000e+00> : vector<2x256x128xf32>
    %370 = tpu.matmul %368, %369, %cst_113 {dimension_numbers = #tpu.dot_dimension_numbers<[2], [1], [1], [2], [0, 0, 0, 1, 1, 2], [0], [0]>} : vector<2x256x8xbf16>, vector<2x8x128xbf16>, vector<2x256x128xf32> -> vector<2x256x128xf32>
    %371 = vector.extract_strided_slice %370 {offsets = [0, 0, 0], sizes = [2, 64, 128], strides = [1, 1, 1]} : vector<2x256x128xf32> to vector<2x64x128xf32>
    %372 = vector.broadcast %40 : vector<1x1x128xf32> to vector<2x64x128xf32>
    %373 = arith.mulf %371, %372 : vector<2x64x128xf32>
    %374 = vector.extract_strided_slice %370 {offsets = [0, 64, 0], sizes = [2, 64, 128], strides = [1, 1, 1]} : vector<2x256x128xf32> to vector<2x64x128xf32>
    %375 = vector.broadcast %48 : vector<1x1x128xf32> to vector<2x64x128xf32>
    %376 = arith.mulf %374, %375 : vector<2x64x128xf32>
    %377 = arith.addf %373, %376 : vector<2x64x128xf32>
    %378 = vector.extract_strided_slice %370 {offsets = [0, 128, 0], sizes = [2, 64, 128], strides = [1, 1, 1]} : vector<2x256x128xf32> to vector<2x64x128xf32>
    %379 = vector.broadcast %56 : vector<1x1x128xf32> to vector<2x64x128xf32>
    %380 = arith.mulf %378, %379 : vector<2x64x128xf32>
    %381 = arith.addf %377, %380 : vector<2x64x128xf32>
    %382 = vector.extract_strided_slice %370 {offsets = [0, 192, 0], sizes = [2, 64, 128], strides = [1, 1, 1]} : vector<2x256x128xf32> to vector<2x64x128xf32>
    %383 = vector.broadcast %64 : vector<1x1x128xf32> to vector<2x64x128xf32>
    %384 = arith.mulf %382, %383 : vector<2x64x128xf32>
    %385 = arith.addf %381, %384 : vector<2x64x128xf32>
    %386 = vector.shape_cast %385 : vector<2x64x128xf32> to vector<128x128xf32>
    %387 = arith.truncf %386 : vector<128x128xf32> to vector<128x128xbf16>
    %c1408 = arith.constant 1408 : index
    %c0_114 = arith.constant 0 : index
    %388 = vector.load %arg5[%c1408, %c0_114] : memref<1792x128xbf16, #tpu.memory_space<vmem>>, vector<128x128xbf16>
    %cst_115 = arith.constant dense<0.000000e+00> : vector<128x128xf32>
    %389 = tpu.matmul %387, %388, %cst_115 {dimension_numbers = #tpu.dot_dimension_numbers<[1], [0], [0], [1], [0, 0, 1, 1], [], []>} : vector<128x128xbf16>, vector<128x128xbf16>, vector<128x128xf32> -> vector<128x128xf32>
    %c88 = arith.constant 88 : index
    %c0_116 = arith.constant 0 : index
    %390 = vector.load %arg6[%c88, %c0_116] : memref<176x128xf32, #tpu.memory_space<vmem>>, vector<1x128xf32>
    %391 = vector.broadcast %390 : vector<1x128xf32> to vector<128x128xf32>
    %392 = arith.addf %389, %391 : vector<128x128xf32>
    %393 = vector.shape_cast %392 : vector<128x128xf32> to vector<2x64x128xf32>
    %394 = arith.addf %66, %393 : vector<2x64x128xf32>
    %395 = vector.shape_cast %394 : vector<2x64x128xf32> to vector<128x128xf32>
    %cst_117 = arith.constant dense<0.000000e+00> : vector<128xf32>
    %396 = vector.multi_reduction <add>, %395, %cst_117 [1] : vector<128x128xf32> to vector<128xf32>
    %397 = vector.shape_cast %396 : vector<128xf32> to vector<128x1xf32>
    %cst_118 = arith.constant 3.125000e-02 : f32
    %398 = vector.broadcast %cst_118 : f32 to vector<128x1xf32>
    %399 = arith.mulf %397, %398 : vector<128x1xf32>
    %400 = arith.mulf %395, %395 : vector<128x128xf32>
    %cst_119 = arith.constant dense<0.000000e+00> : vector<128xf32>
    %401 = vector.multi_reduction <add>, %400, %cst_119 [1] : vector<128x128xf32> to vector<128xf32>
    %402 = vector.shape_cast %401 : vector<128xf32> to vector<128x1xf32>
    %cst_120 = arith.constant 3.125000e-02 : f32
    %403 = vector.broadcast %cst_120 : f32 to vector<128x1xf32>
    %404 = arith.mulf %402, %403 : vector<128x1xf32>
    %405 = arith.mulf %399, %399 : vector<128x1xf32>
    %406 = arith.subf %404, %405 : vector<128x1xf32>
    %407 = vector.broadcast %399 : vector<128x1xf32> to vector<128x128xf32>
    %408 = arith.subf %395, %407 : vector<128x128xf32>
    %cst_121 = arith.constant 9.99999974E-6 : f32
    %409 = vector.broadcast %cst_121 : f32 to vector<128x1xf32>
    %410 = arith.addf %406, %409 : vector<128x1xf32>
    %411 = math.rsqrt %410 : vector<128x1xf32>
    %412 = vector.broadcast %411 : vector<128x1xf32> to vector<128x128xf32>
    %413 = arith.mulf %408, %412 : vector<128x128xf32>
    %c160 = arith.constant 160 : index
    %c0_122 = arith.constant 0 : index
    %414 = vector.load %arg6[%c160, %c0_122] : memref<176x128xf32, #tpu.memory_space<vmem>>, vector<1x128xf32>
    %415 = vector.broadcast %414 : vector<1x128xf32> to vector<128x128xf32>
    %416 = arith.mulf %413, %415 : vector<128x128xf32>
    %c168 = arith.constant 168 : index
    %c0_123 = arith.constant 0 : index
    %417 = vector.load %arg6[%c168, %c0_123] : memref<176x128xf32, #tpu.memory_space<vmem>>, vector<1x128xf32>
    %418 = vector.broadcast %417 : vector<1x128xf32> to vector<128x128xf32>
    %419 = arith.addf %416, %418 : vector<128x128xf32>
    %420 = vector.shape_cast %419 : vector<128x128xf32> to vector<2x64x128xf32>
    %c0_124 = arith.constant 0 : index
    %c0_125 = arith.constant 0 : index
    %c0_126 = arith.constant 0 : index
    %421 = vector.load %arg7[%c0_124, %c0_125, %c0_126] : memref<2x8x128xf32, #tpu.memory_space<vmem>>, vector<2x8x128xf32>
    tpu.vector_store %arg7[%c0_124, %c0_125, %c0_126], %318 {strides = array<i32>} : memref<2x8x128xf32, #tpu.memory_space<vmem>>, vector<2x8x128xf32>,
    %c0_127 = arith.constant 0 : index
    %c0_128 = arith.constant 0 : index
    %c0_129 = arith.constant 0 : index
    %422 = vector.load %arg8[%c0_127, %c0_128, %c0_129] : memref<2x64x128xf32, #tpu.memory_space<vmem>>, vector<2x64x128xf32>
    tpu.vector_store %arg8[%c0_127, %c0_128, %c0_129], %420 {strides = array<i32>} : memref<2x64x128xf32, #tpu.memory_space<vmem>>, vector<2x64x128xf32>,
    return
  }
  func.func @transform_0(%arg0: i32) -> (i32, i32, i32) {
    %c0_i32 = arith.constant 0 : i32
    %c0_i32_0 = arith.constant 0 : i32
    %c0_i32_1 = arith.constant 0 : i32
    return %arg0, %c0_i32, %c0_i32_0 : i32, i32, i32
  }
  func.func @transform_1(%arg0: i32) -> (i32, i32, i32) {
    %c0_i32 = arith.constant 0 : i32
    %c0_i32_0 = arith.constant 0 : i32
    %c0_i32_1 = arith.constant 0 : i32
    return %arg0, %c0_i32, %c0_i32_0 : i32, i32, i32
  }
  func.func @transform_2(%arg0: i32) -> (i32, i32, i32) {
    %c0_i32 = arith.constant 0 : i32
    %c0_i32_0 = arith.constant 0 : i32
    %c0_i32_1 = arith.constant 0 : i32
    return %arg0, %c0_i32, %c0_i32_0 : i32, i32, i32
  }
  func.func @transform_3(%arg0: i32) -> (i32, i32, i32) {
    %c0_i32 = arith.constant 0 : i32
    %c0_i32_0 = arith.constant 0 : i32
    %c0_i32_1 = arith.constant 0 : i32
    return %arg0, %c0_i32, %c0_i32_0 : i32, i32, i32
  }
  func.func @transform_4(%arg0: i32) -> (i32, i32) {
    %c0_i32 = arith.constant 0 : i32
    %c0_i32_0 = arith.constant 0 : i32
    %c0_i32_1 = arith.constant 0 : i32
    return %c0_i32, %c0_i32_0 : i32, i32
  }
  func.func @transform_5(%arg0: i32) -> (i32, i32) {
    %c0_i32 = arith.constant 0 : i32
    %c0_i32_0 = arith.constant 0 : i32
    %c0_i32_1 = arith.constant 0 : i32
    return %c0_i32, %c0_i32_0 : i32, i32
  }
  func.func @transform_6(%arg0: i32) -> (i32, i32, i32) {
    %c0_i32 = arith.constant 0 : i32
    %c0_i32_0 = arith.constant 0 : i32
    %c0_i32_1 = arith.constant 0 : i32
    return %arg0, %c0_i32, %c0_i32_0 : i32, i32, i32
  }
  func.func @transform_7(%arg0: i32) -> (i32, i32, i32) {
    %c0_i32 = arith.constant 0 : i32
    %c0_i32_0 = arith.constant 0 : i32
    %c0_i32_1 = arith.constant 0 : i32
    return %arg0, %c0_i32, %c0_i32_0 : i32, i32, i32
  }
}

</mosaic_0001>

<llo_original>
// kernel: tpu_custom_call.1
$region0: #{tpu_custom_call.1}
  #allocation0 [shape = 'u32[]', space=smem, size = 0x4, offset = 0x4, fixed_abs, tag = 'smem constant byte address 0x4 - core index']
  #allocation1 [shape = 'u32[72,128]{1,0:T(1,128)}', space=vmem, size = 0x9000, scoped, tag = 'internal scratch']
  %s0 = inlined_call_operand.hbm [shape: f32[2,8,128], index: 0, kind: input, shape index: {}]
  %s1 = inlined_call_operand.hbm [shape: f32[2,64,128], index: 1, kind: input, shape index: {}]
  %s2 = inlined_call_operand.hbm [shape: f32[2,8,128], index: 2, kind: input, shape index: {}]
  %s3 = inlined_call_operand.hbm [shape: f32[2,64,128], index: 3, kind: input, shape index: {}]
  %s4 = inlined_call_operand.hbm [shape: bf16[1792,128], index: 4, kind: input, shape index: {}]
  %s5 = inlined_call_operand.hbm [shape: f32[176,128], index: 5, kind: input, shape index: {}]
  %s6 = inlined_call_operand.hbm [shape: f32[2,8,128], index: 6, kind: output, shape index: {0}]
  %s7 = inlined_call_operand.hbm [shape: f32[2,64,128], index: 7, kind: output, shape index: {1}]
  %8 = xla_tuple %s6, %s7
  %s9 = sld [smem:[#allocation0]]
  $region66: #{tpu_custom_call.1} parent=0
    _
  %s11 = ssub.s32 1, %s9
  %s12 = scalar_select 0, %s11, %s9
  $region1: #{tpu_custom_call.1} parent=0
    #allocation2 [shape = 'u8[8192]{0}', space=vmem, size = 0x2000, scoped, tag = 'input window, operand 0, single buffered']
    #allocation3 [shape = 's32[1]{0}', space=sflag, size = 0x4, scoped, tag = 'scoped memory for tpu_custom_call.1']
    #allocation4 [shape = 's32[1]{0}', space=sflag, size = 0x4, scoped, tag = 'scoped memory for tpu_custom_call.1']
    #allocation5 [shape = 'u8[65536]{0}', space=vmem, size = 0x10000, scoped, tag = 'input window, operand 1, single buffered']
    #allocation6 [shape = 's32[1]{0}', space=sflag, size = 0x4, scoped, tag = 'scoped memory for tpu_custom_call.1']
    #allocation7 [shape = 'u8[8192]{0}', space=vmem, size = 0x2000, scoped, tag = 'input window, operand 2, single buffered']
    #allocation8 [shape = 'u8[65536]{0}', space=vmem, size = 0x10000, scoped, tag = 'input window, operand 3, single buffered']
    #allocation9 [shape = 's32[1]{0}', space=sflag, size = 0x4, scoped, tag = 'scoped memory for tpu_custom_call.1']
    #allocation10 [shape = 'u8[458752]{0}', space=vmem, size = 0x70000, scoped, tag = 'input window, operand 4, single buffered']
    #allocation11 [shape = 'u8[90112]{0}', space=vmem, size = 0x16000, scoped, tag = 'input window, operand 5, single buffered']
    #allocation12 [shape = 's32[1]{0}', space=sflag, size = 0x4, scoped, tag = 'scoped memory for tpu_custom_call.1']
    #allocation13 [shape = 'u8[8192]{0}', space=vmem, size = 0x2000, scoped, tag = 'output window, operand 0, single buffered']
    #allocation14 [shape = 'u8[65536]{0}', space=vmem, size = 0x10000, scoped, tag = 'output window, operand 1, single buffered']
    #allocation15 [shape = 's32[1]{0}', space=sflag, size = 0x4, scoped, tag = 'scoped memory for tpu_custom_call.1']
    %13 = vsyncpa [#allocation3], 0
    %14 = vsyncpa [#allocation6], 0
    %15 = vsyncpa [#allocation9], 0
    %16 = vsyncpa [#allocation12], 0
    %17 = vsyncpa [#allocation4], 0
    %18 = vsyncpa [#allocation15], 0
    // Predicated region
    $region2: #{tpu_custom_call.1} parent=1 // pred_check
      _
    $region3: #{tpu_custom_call.1} parent=1 // pred_check_branch
      %20 = sbr.rel (0) target = $region5
    $region4: #{tpu_custom_call.1} parent=1 // pred_region
      %22 = vsyncadd [#allocation3], 0
      %s23 = sshll.u32 %s0, 4
      %s24 = int_to_ptr.hbm [resolvable:$true] %s23
      %s25 = sshll.u32 [#allocation2], 4
      %s26 = int_to_ptr.vmem [resolvable:$true] %s25
      %31 = dma.hbm_to_vmem [thread:$0]  %s24, 256, %s26, [#allocation3], 128, 128, 8
    $region5: #{tpu_custom_call.1} parent=1 // pred_fallthru
      _
    // Predicated region
    $region6: #{tpu_custom_call.1} parent=1 // pred_check
      _
    $region7: #{tpu_custom_call.1} parent=1 // pred_check_branch
      %33 = sbr.rel (0) target = $region9
    $region8: #{tpu_custom_call.1} parent=1 // pred_region
      %35 = vsyncadd [#allocation6], 0
      %s36 = sshll.u32 %s1, 4
      %s37 = int_to_ptr.hbm [resolvable:$true] %s36
      %s38 = sshll.u32 [#allocation5], 4
      %s39 = int_to_ptr.vmem [resolvable:$true] %s38
      %44 = dma.hbm_to_vmem [thread:$0]  %s37, 2048, %s39, [#allocation6], 128, 128, 8
    $region9: #{tpu_custom_call.1} parent=1 // pred_fallthru
      _
    // Predicated region
    $region10: #{tpu_custom_call.1} parent=1 // pred_check
      _
    $region11: #{tpu_custom_call.1} parent=1 // pred_check_branch
      %46 = sbr.rel (0) target = $region13
    $region12: #{tpu_custom_call.1} parent=1 // pred_region
      %48 = vsyncadd [#allocation6], 0
      %s49 = sshll.u32 %s2, 4
      %s50 = int_to_ptr.hbm [resolvable:$true] %s49
      %s51 = sshll.u32 [#allocation7], 4
      %s52 = int_to_ptr.vmem [resolvable:$true] %s51
      %57 = dma.hbm_to_vmem [thread:$0]  %s50, 256, %s52, [#allocation6], 128, 128, 8
    $region13: #{tpu_custom_call.1} parent=1 // pred_fallthru
      _
    // Predicated region
    $region14: #{tpu_custom_call.1} parent=1 // pred_check
      _
    $region15: #{tpu_custom_call.1} parent=1 // pred_check_branch
      %59 = sbr.rel (0) target = $region17
    $region16: #{tpu_custom_call.1} parent=1 // pred_region
      %61 = vsyncadd [#allocation9], 0
      %s62 = sshll.u32 %s3, 4
      %s63 = int_to_ptr.hbm [resolvable:$true] %s62
      %s64 = sshll.u32 [#allocation8], 4
      %s65 = int_to_ptr.vmem [resolvable:$true] %s64
      %70 = dma.hbm_to_vmem [thread:$0]  %s63, 2048, %s65, [#allocation9], 128, 128, 8
    $region17: #{tpu_custom_call.1} parent=1 // pred_fallthru
      _
    // Predicated region
    $region18: #{tpu_custom_call.1} parent=1 // pred_check
      _
    $region19: #{tpu_custom_call.1} parent=1 // pred_check_branch
      %72 = sbr.rel (0) target = $region21
    $region20: #{tpu_custom_call.1} parent=1 // pred_region
      %74 = vsyncadd [#allocation9], 0
      %s75 = sshll.u32 %s4, 4
      %s76 = int_to_ptr.hbm [resolvable:$true] %s75
      %s77 = sshll.u32 [#allocation10], 4
      %s78 = int_to_ptr.vmem [resolvable:$true] %s77
      %83 = dma.hbm_to_vmem [thread:$0]  %s76, 14336, %s78, [#allocation9], 64, 64, 4
    $region21: #{tpu_custom_call.1} parent=1 // pred_fallthru
      _
    // Predicated region
    $region22: #{tpu_custom_call.1} parent=1 // pred_check
      _
    $region23: #{tpu_custom_call.1} parent=1 // pred_check_branch
      %85 = sbr.rel (0) target = $region25
    $region24: #{tpu_custom_call.1} parent=1 // pred_region
      %87 = vsyncadd [#allocation12], 0
      %s88 = sshll.u32 %s5, 4
      %s89 = int_to_ptr.hbm [resolvable:$true] %s88
      %s90 = sshll.u32 [#allocation11], 4
      %s91 = int_to_ptr.vmem [resolvable:$true] %s90
      %96 = dma.hbm_to_vmem [thread:$0]  %s89, 2816, %s91, [#allocation12], 128, 128, 8
    $region25: #{tpu_custom_call.1} parent=1 // pred_fallthru
      _
    // Predicated region
    $region26: #{tpu_custom_call.1} parent=1 // pred_check
      _
    $region27: #{tpu_custom_call.1} parent=1 // pred_check_branch
      %98 = sbr.rel (0) target = $region29
    $region28: #{tpu_custom_call.1} parent=1 // pred_region
      %100 = dma.done [#allocation3], 256
    $region29: #{tpu_custom_call.1} parent=1 // pred_fallthru
      _
    // Predicated region
    $region30: #{tpu_custom_call.1} parent=1 // pred_check
      _
    $region31: #{tpu_custom_call.1} parent=1 // pred_check_branch
      %102 = sbr.rel (0) target = $region33
    $region32: #{tpu_custom_call.1} parent=1 // pred_region
      %104 = dma.done [#allocation6], 2048
    $region33: #{tpu_custom_call.1} parent=1 // pred_fallthru
      _
    // Predicated region
    $region34: #{tpu_custom_call.1} parent=1 // pred_check
      _
    $region35: #{tpu_custom_call.1} parent=1 // pred_check_branch
      %106 = sbr.rel (0) target = $region37
    $region36: #{tpu_custom_call.1} parent=1 // pred_region
      %108 = dma.done [#allocation6], 256
    $region37: #{tpu_custom_call.1} parent=1 // pred_fallthru
      _
    // Predicated region
    $region38: #{tpu_custom_call.1} parent=1 // pred_check
      _
    $region39: #{tpu_custom_call.1} parent=1 // pred_check_branch
      %110 = sbr.rel (0) target = $region41
    $region40: #{tpu_custom_call.1} parent=1 // pred_region
      %112 = dma.done [#allocation9], 2048
    $region41: #{tpu_custom_call.1} parent=1 // pred_fallthru
      _
    // Predicated region
    $region42: #{tpu_custom_call.1} parent=1 // pred_check
      _
    $region43: #{tpu_custom_call.1} parent=1 // pred_check_branch
      %114 = sbr.rel (0) target = $region45
    $region44: #{tpu_custom_call.1} parent=1 // pred_region
      %116 = dma.done [#allocation9], 14336
    $region45: #{tpu_custom_call.1} parent=1 // pred_fallthru
      _
    // Predicated region
    $region46: #{tpu_custom_call.1} parent=1 // pred_check
      _
    $region47: #{tpu_custom_call.1} parent=1 // pred_check_branch
      %118 = sbr.rel (0) target = $region49
    $region48: #{tpu_custom_call.1} parent=1 // pred_region
      %120 = dma.done [#allocation12], 2816
    $region49: #{tpu_custom_call.1} parent=1 // pred_fallthru
      _
    %v122 = vlaneseq
    %v123 = vand.u32 %v122, 127
    %vm124 = vcmp.ge.s32.totalorder %v123, 0
    %vm125 = vcmp.lt.s32.totalorder %v123, 8
    %vm126 = vmand %vm124, %vm125
    %v127 = vsel %vm126, 1.0, 0.0
    %vm128 = vcmp.ge.s32.totalorder %v123, 8
    %vm129 = vcmp.lt.s32.totalorder %v123, 16
    %vm130 = vmand %vm128, %vm129
    %v131 = vsel %vm130, 1.0, 0.0
    %vm132 = vcmp.ge.s32.totalorder %v123, 16
    %vm133 = vcmp.lt.s32.totalorder %v123, 24
    %vm134 = vmand %vm132, %vm133
    %v135 = vsel %vm134, 1.0, 0.0
    %vm136 = vcmp.ge.s32.totalorder %v123, 24
    %vm137 = vcmp.lt.s32.totalorder %v123, 32
    %vm138 = vmand %vm136, %vm137
    %v139 = vsel %vm138, 1.0, 0.0
    %vm140 = vcmp.lt.s32.totalorder %v123, 4
    %vm141 = vmand %vm124, %vm140
    %v142 = vsel %vm141, 1.0, 0.0
    %vm143 = vcmp.ge.s32.totalorder %v123, 4
    %vm144 = vmand %vm143, %vm125
    %v145 = vsel %vm144, 1.0, 0.0
    %vm146 = vcmp.lt.s32.totalorder %v123, 12
    %vm147 = vmand %vm128, %vm146
    %v148 = vsel %vm147, 1.0, 0.0
    %vm149 = vcmp.ge.s32.totalorder %v123, 12
    %vm150 = vmand %vm149, %vm129
    %v151 = vsel %vm150, 1.0, 0.0
    %v152 = vld [vmem:[#allocation2] sm:$0xff]
    %v153 = vld [vmem:[#allocation2 + $0x8] sm:$0xff]
    %v154 = vld [vmem:[#allocation5] sm:$0xff]
    %v155 = vld [vmem:[#allocation5 + $0x8] sm:$0xff]
    %v156 = vld [vmem:[#allocation5 + $0x10] sm:$0xff]
    %v157 = vld [vmem:[#allocation5 + $0x18] sm:$0xff]
    %v158 = vld [vmem:[#allocation5 + $0x20] sm:$0xff]
    %v159 = vld [vmem:[#allocation5 + $0x28] sm:$0xff]
    %v160 = vld [vmem:[#allocation5 + $0x30] sm:$0xff]
    %v161 = vld [vmem:[#allocation5 + $0x38] sm:$0xff]
    %v162 = vld [vmem:[#allocation5 + $0x40] sm:$0xff]
    %v163 = vld [vmem:[#allocation5 + $0x48] sm:$0xff]
    %v164 = vld [vmem:[#allocation5 + $0x50] sm:$0xff]
    %v165 = vld [vmem:[#allocation5 + $0x58] sm:$0xff]
    %v166 = vld [vmem:[#allocation5 + $0x60] sm:$0xff]
    %v167 = vld [vmem:[#allocation5 + $0x68] sm:$0xff]
    %v168 = vld [vmem:[#allocation5 + $0x70] sm:$0xff]
    %v169 = vld [vmem:[#allocation5 + $0x78] sm:$0xff]
    %v170 = vld [vmem:[#allocation7] sm:$0xff]
    %v171 = vld [vmem:[#allocation7 + $0x8] sm:$0xff]
    %v172 = vld [vmem:[#allocation8] sm:$0xff]
    %v173 = vld [vmem:[#allocation8 + $0x8] sm:$0xff]
    %v174 = vld [vmem:[#allocation8 + $0x10] sm:$0xff]
    %v175 = vld [vmem:[#allocation8 + $0x18] sm:$0xff]
    %v176 = vld [vmem:[#allocation8 + $0x20] sm:$0xff]
    %v177 = vld [vmem:[#allocation8 + $0x28] sm:$0xff]
    %v178 = vld [vmem:[#allocation8 + $0x30] sm:$0xff]
    %v179 = vld [vmem:[#allocation8 + $0x38] sm:$0xff]
    %v180 = vld [vmem:[#allocation8 + $0x40] sm:$0xff]
    %v181 = vld [vmem:[#allocation8 + $0x48] sm:$0xff]
    %v182 = vld [vmem:[#allocation8 + $0x50] sm:$0xff]
    %v183 = vld [vmem:[#allocation8 + $0x58] sm:$0xff]
    %v184 = vld [vmem:[#allocation8 + $0x60] sm:$0xff]
    %v185 = vld [vmem:[#allocation8 + $0x68] sm:$0xff]
    %v186 = vld [vmem:[#allocation8 + $0x70] sm:$0xff]
    %v187 = vld [vmem:[#allocation8 + $0x78] sm:$0xff]
    %v188 = vadd.f32 %v152, %v170
    %v189 = vadd.f32 %v153, %v171
    %v190 = vpack.c.bf16 %v189, %v188
    %v191 = vld [vmem:[#allocation10] sm:$0xf]
    %v192 = vld [vmem:[#allocation10 + $0x4] sm:$0xf]
    %v193 = vld [vmem:[#allocation10 + $0x8] sm:$0xf]
    %v194 = vld [vmem:[#allocation10 + $0xc] sm:$0xf]
    %v195 = vld [vmem:[#allocation10 + $0x10] sm:$0xf]
    %v196 = vld [vmem:[#allocation10 + $0x14] sm:$0xf]
    %v197 = vld [vmem:[#allocation10 + $0x18] sm:$0xf]
    %v198 = vld [vmem:[#allocation10 + $0x1c] sm:$0xf]
    %v199 = vld [vmem:[#allocation10 + $0x20] sm:$0xf]
    %v200 = vld [vmem:[#allocation10 + $0x24] sm:$0xf]
    %v201 = vld [vmem:[#allocation10 + $0x28] sm:$0xf]
    %v202 = vld [vmem:[#allocation10 + $0x2c] sm:$0xf]
    %v203 = vld [vmem:[#allocation10 + $0x30] sm:$0xf]
    %v204 = vld [vmem:[#allocation10 + $0x34] sm:$0xf]
    %v205 = vld [vmem:[#allocation10 + $0x38] sm:$0xf]
    %v206 = vld [vmem:[#allocation10 + $0x3c] sm:$0xf]
    %v207 = vld [vmem:[#allocation11] sm:$0x1]
    %v208 = vperm.slane %v207, 0
    %v225 = vunpack.c.l.b16 %v191
    %v226 = vunpack.c.l.b16 %v192
    %v227 = vunpack.c.l.b16 %v193
    %v228 = vunpack.c.l.b16 %v194
    %v229 = vunpack.c.l.b16 %v195
    %v230 = vunpack.c.l.b16 %v196
    %v231 = vunpack.c.l.b16 %v197
    %v232 = vunpack.c.l.b16 %v198
    %v233 = vunpack.c.l.b16 %v199
    %v234 = vunpack.c.l.b16 %v200
    %v235 = vunpack.c.l.b16 %v201
    %v236 = vunpack.c.l.b16 %v202
    %v237 = vunpack.c.l.b16 %v203
    %v238 = vunpack.c.l.b16 %v204
    %v239 = vunpack.c.l.b16 %v205
    %v240 = vunpack.c.l.b16 %v206
    %v241 = vpack.c.b16 %v226, %v225
    %v242 = vpack.c.b16 %v228, %v227
    %v243 = vpack.c.b16 %v230, %v229
    %v244 = vpack.c.b16 %v232, %v231
    %v245 = vpack.c.b16 %v234, %v233
    %v246 = vpack.c.b16 %v236, %v235
    %v247 = vpack.c.b16 %v238, %v237
    %v248 = vpack.c.b16 %v240, %v239
    %257 = vmatpush.bf16.msra.mxu0 %v248
    %258 = vmatpush.bf16.msra.mxu0 %v247
    %259 = vmatpush.bf16.msra.mxu0 %v246
    %260 = vmatpush.bf16.msra.mxu0 %v245
    %261 = vmatpush.bf16.msra.mxu0 %v244
    %262 = vmatpush.bf16.msra.mxu0 %v243
    %263 = vmatpush.bf16.msra.mxu0 %v242
    %264 = vmatpush.bf16.msra.mxu0 %v241
    %265 = vmatmul.bf16.gmra.mxu0 %v190
    %v266 = vpop.f32.mrf.mxu0
    %v267 = vadd.f32 %v208, %v266
    %v268 = vpop.f32.mrf.mxu0
    %v269 = vadd.f32 %v208, %v268
    %270 = vdwg.mxu0
    %v271 = vld [vmem:[#allocation10 + $0x40] sm:$0xf]
    %v272 = vld [vmem:[#allocation10 + $0x44] sm:$0xf]
    %v273 = vld [vmem:[#allocation10 + $0x48] sm:$0xf]
    %v274 = vld [vmem:[#allocation10 + $0x4c] sm:$0xf]
    %v275 = vld [vmem:[#allocation10 + $0x50] sm:$0xf]
    %v276 = vld [vmem:[#allocation10 + $0x54] sm:$0xf]
    %v277 = vld [vmem:[#allocation10 + $0x58] sm:$0xf]
    %v278 = vld [vmem:[#allocation10 + $0x5c] sm:$0xf]
    %v279 = vld [vmem:[#allocation10 + $0x60] sm:$0xf]
    %v280 = vld [vmem:[#allocation10 + $0x64] sm:$0xf]
    %v281 = vld [vmem:[#allocation10 + $0x68] sm:$0xf]
    %v282 = vld [vmem:[#allocation10 + $0x6c] sm:$0xf]
    %v283 = vld [vmem:[#allocation10 + $0x70] sm:$0xf]
    %v284 = vld [vmem:[#allocation10 + $0x74] sm:$0xf]
    %v285 = vld [vmem:[#allocation10 + $0x78] sm:$0xf]
    %v286 = vld [vmem:[#allocation10 + $0x7c] sm:$0xf]
    %v287 = vld [vmem:[#allocation11 + $0x8] sm:$0x1]
    %v288 = vperm.slane %v287, 0
    %v305 = vunpack.c.l.b16 %v271
    %v306 = vunpack.c.l.b16 %v272
    %v307 = vunpack.c.l.b16 %v273
    %v308 = vunpack.c.l.b16 %v274
    %v309 = vunpack.c.l.b16 %v275
    %v310 = vunpack.c.l.b16 %v276
    %v311 = vunpack.c.l.b16 %v277
    %v312 = vunpack.c.l.b16 %v278
    %v313 = vunpack.c.l.b16 %v279
    %v314 = vunpack.c.l.b16 %v280
    %v315 = vunpack.c.l.b16 %v281
    %v316 = vunpack.c.l.b16 %v282
    %v317 = vunpack.c.l.b16 %v283
    %v318 = vunpack.c.l.b16 %v284
    %v319 = vunpack.c.l.b16 %v285
    %v320 = vunpack.c.l.b16 %v286
    %v321 = vpack.c.b16 %v306, %v305
    %v322 = vpack.c.b16 %v308, %v307
    %v323 = vpack.c.b16 %v310, %v309
    %v324 = vpack.c.b16 %v312, %v311
    %v325 = vpack.c.b16 %v314, %v313
    %v326 = vpack.c.b16 %v316, %v315
    %v327 = vpack.c.b16 %v318, %v317
    %v328 = vpack.c.b16 %v320, %v319
    %337 = vmatpush.bf16.msra.mxu0 %v328
    %338 = vmatpush.bf16.msra.mxu0 %v327
    %339 = vmatpush.bf16.msra.mxu0 %v326
    %340 = vmatpush.bf16.msra.mxu0 %v325
    %341 = vmatpush.bf16.msra.mxu0 %v324
    %342 = vmatpush.bf16.msra.mxu0 %v323
    %343 = vmatpush.bf16.msra.mxu0 %v322
    %344 = vmatpush.bf16.msra.mxu0 %v321
    %345 = vmatmul.bf16.gmra.mxu0 %v190
    %v346 = vpop.f32.mrf.mxu0
    %v347 = vadd.f32 %v288, %v346
    %v348 = vpop.f32.mrf.mxu0
    %v349 = vadd.f32 %v288, %v348
    %350 = vdwg.mxu0
    %v351 = vpack.c.bf16 %v153, %v152
    %v352 = vld [vmem:[#allocation10 + $0x80] sm:$0xf]
    %v353 = vld [vmem:[#allocation10 + $0x84] sm:$0xf]
    %v354 = vld [vmem:[#allocation10 + $0x88] sm:$0xf]
    %v355 = vld [vmem:[#allocation10 + $0x8c] sm:$0xf]
    %v356 = vld [vmem:[#allocation10 + $0x90] sm:$0xf]
    %v357 = vld [vmem:[#allocation10 + $0x94] sm:$0xf]
    %v358 = vld [vmem:[#allocation10 + $0x98] sm:$0xf]
    %v359 = vld [vmem:[#allocation10 + $0x9c] sm:$0xf]
    %v360 = vld [vmem:[#allocation10 + $0xa0] sm:$0xf]
    %v361 = vld [vmem:[#allocation10 + $0xa4] sm:$0xf]
    %v362 = vld [vmem:[#allocation10 + $0xa8] sm:$0xf]
    %v363 = vld [vmem:[#allocation10 + $0xac] sm:$0xf]
    %v364 = vld [vmem:[#allocation10 + $0xb0] sm:$0xf]
    %v365 = vld [vmem:[#allocation10 + $0xb4] sm:$0xf]
    %v366 = vld [vmem:[#allocation10 + $0xb8] sm:$0xf]
    %v367 = vld [vmem:[#allocation10 + $0xbc] sm:$0xf]
    %v368 = vld [vmem:[#allocation11 + $0x10] sm:$0x1]
    %v369 = vperm.slane %v368, 0
    %v386 = vunpack.c.l.b16 %v352
    %v387 = vunpack.c.l.b16 %v353
    %v388 = vunpack.c.l.b16 %v354
    %v389 = vunpack.c.l.b16 %v355
    %v390 = vunpack.c.l.b16 %v356
    %v391 = vunpack.c.l.b16 %v357
    %v392 = vunpack.c.l.b16 %v358
    %v393 = vunpack.c.l.b16 %v359
    %v394 = vunpack.c.l.b16 %v360
    %v395 = vunpack.c.l.b16 %v361
    %v396 = vunpack.c.l.b16 %v362
    %v397 = vunpack.c.l.b16 %v363
    %v398 = vunpack.c.l.b16 %v364
    %v399 = vunpack.c.l.b16 %v365
    %v400 = vunpack.c.l.b16 %v366
    %v401 = vunpack.c.l.b16 %v367
    %v402 = vpack.c.b16 %v387, %v386
    %v403 = vpack.c.b16 %v389, %v388
    %v404 = vpack.c.b16 %v391, %v390
    %v405 = vpack.c.b16 %v393, %v392
    %v406 = vpack.c.b16 %v395, %v394
    %v407 = vpack.c.b16 %v397, %v396
    %v408 = vpack.c.b16 %v399, %v398
    %v409 = vpack.c.b16 %v401, %v400
    %418 = vmatpush.bf16.msra.mxu0 %v409
    %419 = vmatpush.bf16.msra.mxu0 %v408
    %420 = vmatpush.bf16.msra.mxu0 %v407
    %421 = vmatpush.bf16.msra.mxu0 %v406
    %422 = vmatpush.bf16.msra.mxu0 %v405
    %423 = vmatpush.bf16.msra.mxu0 %v404
    %424 = vmatpush.bf16.msra.mxu0 %v403
    %425 = vmatpush.bf16.msra.mxu0 %v402
    %426 = vmatmul.bf16.gmra.mxu0 %v351
    %v427 = vpop.f32.mrf.mxu0
    %v428 = vadd.f32 %v369, %v427
    %v429 = vpop.f32.mrf.mxu0
    %v430 = vadd.f32 %v369, %v429
    %431 = vdwg.mxu0
    %v432 = vmul.f32 %v267, %v127
    %v433 = vmul.f32 %v269, %v127
    %v434 = vmul.f32 %v267, %v131
    %v435 = vmul.f32 %v269, %v131
    %v436 = vmul.f32 %v267, %v135
    %v437 = vmul.f32 %v269, %v135
    %v438 = vmul.f32 %v267, %v139
    %v439 = vmul.f32 %v269, %v139
    %v440 = vpack.c.bf16 %v432, %v432
    %v441 = vpack.c.bf16 %v434, %v434
    %v442 = vpack.c.bf16 %v436, %v436
    %v443 = vpack.c.bf16 %v438, %v438
    %v444 = vpack.c.bf16 %v433, %v433
    %v445 = vpack.c.bf16 %v435, %v435
    %v446 = vpack.c.bf16 %v437, %v437
    %v447 = vpack.c.bf16 %v439, %v439
    %v448 = vpack.c.bf16 %v347, %v347
    %v449 = vpack.c.bf16 %v349, %v349
    %v454 = vunpack.c.l.b16 %v440
    %v455 = vunpack.c.l.b16 %v441
    %v456 = vunpack.c.l.b16 %v442
    %v457 = vunpack.c.l.b16 %v443
    %v458 = vpack.c.b16 %v455, %v454
    %v459 = vpack.c.b16 %v457, %v456
    %462 = vmatpush.bf16.xpose.msra.mxu0 0
    %463 = vmatpush.bf16.xpose.msra.mxu0 0
    %464 = vmatpush.bf16.xpose.msra.mxu0 0
    %465 = vmatpush.bf16.xpose.msra.mxu0 0
    %466 = vmatpush.bf16.xpose.msra.mxu0 0
    %467 = vmatpush.bf16.xpose.msra.mxu0 0
    %468 = vmatpush.bf16.xpose.msra.mxu0 0
    %469 = vmatpush.bf16.xpose.msra.mxu0 %v448
    %470 = vmatmul.bf16.gmra.mxu0 %v458
    %v471 = vpop.f32.mrf.mxu0
    %v472 = vadd.f32 0.0, %v471
    %v473 = vpop.f32.mrf.mxu0
    %v474 = vadd.f32 0.0, %v473
    %475 = vmatmul.bf16.gmra.mxu0 %v459
    %v476 = vpop.f32.mrf.mxu0
    %v477 = vadd.f32 0.0, %v476
    %v478 = vpop.f32.mrf.mxu0
    %v479 = vadd.f32 0.0, %v478
    %480 = vdwg.mxu0
    %v485 = vunpack.c.l.b16 %v444
    %v486 = vunpack.c.l.b16 %v445
    %v487 = vunpack.c.l.b16 %v446
    %v488 = vunpack.c.l.b16 %v447
    %v489 = vpack.c.b16 %v486, %v485
    %v490 = vpack.c.b16 %v488, %v487
    %493 = vmatpush.bf16.xpose.msra.mxu0 0
    %494 = vmatpush.bf16.xpose.msra.mxu0 0
    %495 = vmatpush.bf16.xpose.msra.mxu0 0
    %496 = vmatpush.bf16.xpose.msra.mxu0 0
    %497 = vmatpush.bf16.xpose.msra.mxu0 0
    %498 = vmatpush.bf16.xpose.msra.mxu0 0
    %499 = vmatpush.bf16.xpose.msra.mxu0 0
    %500 = vmatpush.bf16.xpose.msra.mxu0 %v449
    %501 = vmatmul.bf16.gmra.mxu0 %v489
    %v502 = vpop.f32.mrf.mxu0
    %v503 = vadd.f32 0.0, %v502
    %v504 = vpop.f32.mrf.mxu0
    %v505 = vadd.f32 0.0, %v504
    %506 = vmatmul.bf16.gmra.mxu0 %v490
    %v507 = vpop.f32.mrf.mxu0
    %v508 = vadd.f32 0.0, %v507
    %v509 = vpop.f32.mrf.mxu0
    %v510 = vadd.f32 0.0, %v509
    %511 = vdwg.mxu0
    %v512 = vmul.f32 %v472, 0.35355338
    %v513 = vmul.f32 %v474, 0.35355338
    %v514 = vmul.f32 %v477, 0.35355338
    %v515 = vmul.f32 %v479, 0.35355338
    %v516 = vmul.f32 %v503, 0.35355338
    %v517 = vmul.f32 %v505, 0.35355338
    %v518 = vmul.f32 %v508, 0.35355338
    %v519 = vmul.f32 %v510, 0.35355338
    %vm520 = vcmask 64512
    %v521 = vsel %vm520, %v512, -inf
    %522 = vmax.xlane.f32.xlu0 %v521
    %v523 = vpop.xlane.xlu0 %522
    %v524 = vsel %vm520, %v513, -inf
    %525 = vmax.xlane.f32.xlu0 %v524
    %v526 = vpop.xlane.xlu0 %525
    %v527 = vsel %vm520, %v514, -inf
    %528 = vmax.xlane.f32.xlu0 %v527
    %v529 = vpop.xlane.xlu0 %528
    %v530 = vsel %vm520, %v515, -inf
    %531 = vmax.xlane.f32.xlu0 %v530
    %v532 = vpop.xlane.xlu0 %531
    %v533 = vsel %vm520, %v516, -inf
    %534 = vmax.xlane.f32.xlu0 %v533
    %v535 = vpop.xlane.xlu0 %534
    %v536 = vsel %vm520, %v517, -inf
    %537 = vmax.xlane.f32.xlu0 %v536
    %v538 = vpop.xlane.xlu0 %537
    %v539 = vsel %vm520, %v518, -inf
    %540 = vmax.xlane.f32.xlu0 %v539
    %v541 = vpop.xlane.xlu0 %540
    %v542 = vsel %vm520, %v519, -inf
    %543 = vmax.xlane.f32.xlu0 %v542
    %v544 = vpop.xlane.xlu0 %543
    %v545 = vsub.f32 %v512, %v523
    %v546 = vsub.f32 %v513, %v526
    %v547 = vsub.f32 %v514, %v529
    %v548 = vsub.f32 %v515, %v532
    %v549 = vsub.f32 %v516, %v535
    %v550 = vsub.f32 %v517, %v538
    %v551 = vsub.f32 %v518, %v541
    %v552 = vsub.f32 %v519, %v544
    %v553 = vmul.f32 %v545, 1.442695
    %v554 = vpow.pop %v553
    %v555 = vmul.f32 %v546, 1.442695
    %v556 = vpow.pop %v555
    %v557 = vmul.f32 %v547, 1.442695
    %v558 = vpow.pop %v557
    %v559 = vmul.f32 %v548, 1.442695
    %v560 = vpow.pop %v559
    %v561 = vmul.f32 %v549, 1.442695
    %v562 = vpow.pop %v561
    %v563 = vmul.f32 %v550, 1.442695
    %v564 = vpow.pop %v563
    %v565 = vmul.f32 %v551, 1.442695
    %v566 = vpow.pop %v565
    %v567 = vmul.f32 %v552, 1.442695
    %v568 = vpow.pop %v567
    %v569 = vsel %vm520, %v554, 0.0
    %570 = vadd.xlane.f32.xlu0 %v569
    %v571 = vpop.xlane.xlu0 %570
    %v572 = vsel %vm520, %v556, 0.0
    %573 = vadd.xlane.f32.xlu0 %v572
    %v574 = vpop.xlane.xlu0 %573
    %v575 = vsel %vm520, %v558, 0.0
    %576 = vadd.xlane.f32.xlu0 %v575
    %v577 = vpop.xlane.xlu0 %576
    %v578 = vsel %vm520, %v560, 0.0
    %579 = vadd.xlane.f32.xlu0 %v578
    %v580 = vpop.xlane.xlu0 %579
    %v581 = vsel %vm520, %v562, 0.0
    %582 = vadd.xlane.f32.xlu0 %v581
    %v583 = vpop.xlane.xlu0 %582
    %v584 = vsel %vm520, %v564, 0.0
    %585 = vadd.xlane.f32.xlu0 %v584
    %v586 = vpop.xlane.xlu0 %585
    %v587 = vsel %vm520, %v566, 0.0
    %588 = vadd.xlane.f32.xlu0 %v587
    %v589 = vpop.xlane.xlu0 %588
    %v590 = vsel %vm520, %v568, 0.0
    %591 = vadd.xlane.f32.xlu0 %v590
    %v592 = vpop.xlane.xlu0 %591
    %v593 = vrcp.pop %v571
    %v594 = vrcp.pop %v574
    %v595 = vrcp.pop %v577
    %v596 = vrcp.pop %v580
    %v597 = vrcp.pop %v583
    %v598 = vrcp.pop %v586
    %v599 = vrcp.pop %v589
    %v600 = vrcp.pop %v592
    %v601 = vmul.f32 %v554, %v593
    %v602 = vmul.f32 %v556, %v594
    %v603 = vmul.f32 %v558, %v595
    %v604 = vmul.f32 %v560, %v596
    %v605 = vmul.f32 %v562, %v597
    %v606 = vmul.f32 %v564, %v598
    %v607 = vmul.f32 %v566, %v599
    %v608 = vmul.f32 %v568, %v600
    %v609 = vpack.c.bf16 %v601, %v601
    %v610 = vpack.c.bf16 %v602, %v602
    %v611 = vpack.c.bf16 %v603, %v603
    %v612 = vpack.c.bf16 %v604, %v604
    %v613 = vpack.c.bf16 %v605, %v605
    %v614 = vpack.c.bf16 %v606, %v606
    %v615 = vpack.c.bf16 %v607, %v607
    %v616 = vpack.c.bf16 %v608, %v608
    %v617 = vpack.c.bf16 %v428, %v428
    %v618 = vpack.c.bf16 %v430, %v430
    %v623 = vunpack.c.l.b16 %v609
    %v624 = vunpack.c.l.b16 %v610
    %v625 = vunpack.c.l.b16 %v611
    %v626 = vunpack.c.l.b16 %v612
    %v627 = vpack.c.b16 %v624, %v623
    %v628 = vpack.c.b16 %v626, %v625
    %v630 = vsel %vm520, %v627, 0
    %v633 = vsel %vm520, %v628, 0
    %vm635 = vcmask 1043456
    %v637 = vsel %vm635, %v617, 0
    %639 = vmatpush.bf16.msra.mxu0 0
    %640 = vmatpush.bf16.msra.mxu0 0
    %641 = vmatpush.bf16.msra.mxu0 0
    %642 = vmatpush.bf16.msra.mxu0 0
    %643 = vmatpush.bf16.msra.mxu0 0
    %644 = vmatpush.bf16.msra.mxu0 0
    %645 = vmatpush.bf16.msra.mxu0 0
    %646 = vmatpush.bf16.msra.mxu0 %v637
    %647 = vmatmul.bf16.gmra.mxu0 %v630
    %v648 = vpop.f32.mrf.mxu0
    %v649 = vadd.f32 0.0, %v648
    %v650 = vpop.f32.mrf.mxu0
    %v651 = vadd.f32 0.0, %v650
    %652 = vmatmul.bf16.gmra.mxu0 %v633
    %v653 = vpop.f32.mrf.mxu0
    %v654 = vadd.f32 0.0, %v653
    %v655 = vpop.f32.mrf.mxu0
    %v656 = vadd.f32 0.0, %v655
    %657 = vdwg.mxu0
    %v662 = vunpack.c.l.b16 %v613
    %v663 = vunpack.c.l.b16 %v614
    %v664 = vunpack.c.l.b16 %v615
    %v665 = vunpack.c.l.b16 %v616
    %v666 = vpack.c.b16 %v663, %v662
    %v667 = vpack.c.b16 %v665, %v664
    %v669 = vsel %vm520, %v666, 0
    %v672 = vsel %vm520, %v667, 0
    %v675 = vsel %vm635, %v618, 0
    %677 = vmatpush.bf16.msra.mxu0 0
    %678 = vmatpush.bf16.msra.mxu0 0
    %679 = vmatpush.bf16.msra.mxu0 0
    %680 = vmatpush.bf16.msra.mxu0 0
    %681 = vmatpush.bf16.msra.mxu0 0
    %682 = vmatpush.bf16.msra.mxu0 0
    %683 = vmatpush.bf16.msra.mxu0 0
    %684 = vmatpush.bf16.msra.mxu0 %v675
    %685 = vmatmul.bf16.gmra.mxu0 %v669
    %v686 = vpop.f32.mrf.mxu0
    %v687 = vadd.f32 0.0, %v686
    %v688 = vpop.f32.mrf.mxu0
    %v689 = vadd.f32 0.0, %v688
    %690 = vmatmul.bf16.gmra.mxu0 %v672
    %v691 = vpop.f32.mrf.mxu0
    %v692 = vadd.f32 0.0, %v691
    %v693 = vpop.f32.mrf.mxu0
    %v694 = vadd.f32 0.0, %v693
    %695 = vdwg.mxu0
    %v696 = vmul.f32 %v649, %v127
    %v697 = vmul.f32 %v687, %v127
    %v698 = vmul.f32 %v651, %v131
    %v699 = vmul.f32 %v689, %v131
    %v700 = vadd.f32 %v696, %v698
    %v701 = vadd.f32 %v697, %v699
    %v702 = vmul.f32 %v654, %v135
    %v703 = vmul.f32 %v692, %v135
    %v704 = vadd.f32 %v700, %v702
    %v705 = vadd.f32 %v701, %v703
    %v706 = vmul.f32 %v656, %v139
    %v707 = vmul.f32 %v694, %v139
    %v708 = vadd.f32 %v704, %v706
    %v709 = vadd.f32 %v705, %v707
    %v710 = vpack.c.bf16 %v709, %v708
    %v711 = vld [vmem:[#allocation10 + $0xc0] sm:$0xf]
    %v712 = vld [vmem:[#allocation10 + $0xc4] sm:$0xf]
    %v713 = vld [vmem:[#allocation10 + $0xc8] sm:$0xf]
    %v714 = vld [vmem:[#allocation10 + $0xcc] sm:$0xf]
    %v715 = vld [vmem:[#allocation10 + $0xd0] sm:$0xf]
    %v716 = vld [vmem:[#allocation10 + $0xd4] sm:$0xf]
    %v717 = vld [vmem:[#allocation10 + $0xd8] sm:$0xf]
    %v718 = vld [vmem:[#allocation10 + $0xdc] sm:$0xf]
    %v719 = vld [vmem:[#allocation10 + $0xe0] sm:$0xf]
    %v720 = vld [vmem:[#allocation10 + $0xe4] sm:$0xf]
    %v721 = vld [vmem:[#allocation10 + $0xe8] sm:$0xf]
    %v722 = vld [vmem:[#allocation10 + $0xec] sm:$0xf]
    %v723 = vld [vmem:[#allocation10 + $0xf0] sm:$0xf]
    %v724 = vld [vmem:[#allocation10 + $0xf4] sm:$0xf]
    %v725 = vld [vmem:[#allocation10 + $0xf8] sm:$0xf]
    %v726 = vld [vmem:[#allocation10 + $0xfc] sm:$0xf]
    %v727 = vld [vmem:[#allocation11 + $0x18] sm:$0x1]
    %v728 = vperm.slane %v727, 0
    %v745 = vunpack.c.l.b16 %v711
    %v746 = vunpack.c.l.b16 %v712
    %v747 = vunpack.c.l.b16 %v713
    %v748 = vunpack.c.l.b16 %v714
    %v749 = vunpack.c.l.b16 %v715
    %v750 = vunpack.c.l.b16 %v716
    %v751 = vunpack.c.l.b16 %v717
    %v752 = vunpack.c.l.b16 %v718
    %v753 = vunpack.c.l.b16 %v719
    %v754 = vunpack.c.l.b16 %v720
    %v755 = vunpack.c.l.b16 %v721
    %v756 = vunpack.c.l.b16 %v722
    %v757 = vunpack.c.l.b16 %v723
    %v758 = vunpack.c.l.b16 %v724
    %v759 = vunpack.c.l.b16 %v725
    %v760 = vunpack.c.l.b16 %v726
    %v761 = vpack.c.b16 %v746, %v745
    %v762 = vpack.c.b16 %v748, %v747
    %v763 = vpack.c.b16 %v750, %v749
    %v764 = vpack.c.b16 %v752, %v751
    %v765 = vpack.c.b16 %v754, %v753
    %v766 = vpack.c.b16 %v756, %v755
    %v767 = vpack.c.b16 %v758, %v757
    %v768 = vpack.c.b16 %v760, %v759
    %777 = vmatpush.bf16.msra.mxu0 %v768
    %778 = vmatpush.bf16.msra.mxu0 %v767
    %779 = vmatpush.bf16.msra.mxu0 %v766
    %780 = vmatpush.bf16.msra.mxu0 %v765
    %781 = vmatpush.bf16.msra.mxu0 %v764
    %782 = vmatpush.bf16.msra.mxu0 %v763
    %783 = vmatpush.bf16.msra.mxu0 %v762
    %784 = vmatpush.bf16.msra.mxu0 %v761
    %785 = vmatmul.bf16.gmra.mxu0 %v710
    %v786 = vpop.f32.mrf.mxu0
    %v787 = vadd.f32 %v728, %v786
    %v788 = vpop.f32.mrf.mxu0
    %v789 = vadd.f32 %v728, %v788
    %790 = vdwg.mxu0
    %v791 = vadd.f32 %v152, %v787
    %v792 = vadd.f32 %v153, %v789
    %793 = vadd.xlane.f32.xlu0 %v791
    %v794 = vpop.xlane.xlu0 %793
    %795 = vadd.xlane.f32.xlu0 %v792
    %v796 = vpop.xlane.xlu0 %795
    %v797 = vmul.f32 %v794, 0.03125
    %v798 = vmul.f32 %v796, 0.03125
    %v799 = vmul.f32 %v791, %v791
    %v800 = vmul.f32 %v792, %v792
    %801 = vadd.xlane.f32.xlu0 %v799
    %v802 = vpop.xlane.xlu0 %801
    %803 = vadd.xlane.f32.xlu0 %v800
    %v804 = vpop.xlane.xlu0 %803
    %v805 = vmul.f32 %v802, 0.03125
    %v806 = vmul.f32 %v804, 0.03125
    %v807 = vmul.f32 %v797, %v797
    %v808 = vmul.f32 %v798, %v798
    %v809 = vsub.f32 %v805, %v807
    %v810 = vsub.f32 %v806, %v808
    %v811 = vsub.f32 %v791, %v797
    %v812 = vsub.f32 %v792, %v798
    %v813 = vadd.f32 %v809, 1e-05
    %v814 = vadd.f32 %v810, 1e-05
    %v815 = vrsqrt.pop %v813
    %v816 = vmul.f32 %v815, %v813
    %v817 = vmul.f32 %v816, %v815
    %v818 = vmul.f32 0.5, %v817
    %v819 = vsub.f32 1.5, %v818
    %v820 = vmul.f32 %v815, %v819
    %vm821 = vweird.f32 %v813
    %vm822 = vweird.f32 %v815
    %vm823 = vmor %vm821, %vm822
    %v824 = vsel %vm823, %v815, %v820
    %v825 = vrsqrt.pop %v814
    %v826 = vmul.f32 %v825, %v814
    %v827 = vmul.f32 %v826, %v825
    %v828 = vmul.f32 0.5, %v827
    %v829 = vsub.f32 1.5, %v828
    %v830 = vmul.f32 %v825, %v829
    %vm831 = vweird.f32 %v814
    %vm832 = vweird.f32 %v825
    %vm833 = vmor %vm831, %vm832
    %v834 = vsel %vm833, %v825, %v830
    %v835 = vmul.f32 %v811, %v824
    %v836 = vmul.f32 %v812, %v834
    %v837 = vld [vmem:[#allocation11 + $0x70] sm:$0x1]
    %v838 = vperm.slane %v837, 0
    %v839 = vmul.f32 %v835, %v838
    %v840 = vmul.f32 %v836, %v838
    %v841 = vld [vmem:[#allocation11 + $0x78] sm:$0x1]
    %v842 = vperm.slane %v841, 0
    %v843 = vadd.f32 %v839, %v842
    %v844 = vadd.f32 %v840, %v842
    %v845 = vadd.f32 %v154, %v172
    %v846 = vadd.f32 %v155, %v173
    %v847 = vadd.f32 %v156, %v174
    %v848 = vadd.f32 %v157, %v175
    %v849 = vadd.f32 %v158, %v176
    %v850 = vadd.f32 %v159, %v177
    %v851 = vadd.f32 %v160, %v178
    %v852 = vadd.f32 %v161, %v179
    %v853 = vadd.f32 %v162, %v180
    %v854 = vadd.f32 %v163, %v181
    %v855 = vadd.f32 %v164, %v182
    %v856 = vadd.f32 %v165, %v183
    %v857 = vadd.f32 %v166, %v184
    %v858 = vadd.f32 %v167, %v185
    %v859 = vadd.f32 %v168, %v186
    %v860 = vadd.f32 %v169, %v187
    %v861 = vadd.f32 %v843, %v170
    %v862 = vadd.f32 %v844, %v171
    %v863 = vpack.c.bf16 %v862, %v861
    %v864 = vld [vmem:[#allocation10 + $0x100] sm:$0xf]
    %v865 = vld [vmem:[#allocation10 + $0x104] sm:$0xf]
    %v866 = vld [vmem:[#allocation10 + $0x108] sm:$0xf]
    %v867 = vld [vmem:[#allocation10 + $0x10c] sm:$0xf]
    %v868 = vld [vmem:[#allocation10 + $0x110] sm:$0xf]
    %v869 = vld [vmem:[#allocation10 + $0x114] sm:$0xf]
    %v870 = vld [vmem:[#allocation10 + $0x118] sm:$0xf]
    %v871 = vld [vmem:[#allocation10 + $0x11c] sm:$0xf]
    %v872 = vld [vmem:[#allocation10 + $0x120] sm:$0xf]
    %v873 = vld [vmem:[#allocation10 + $0x124] sm:$0xf]
    %v874 = vld [vmem:[#allocation10 + $0x128] sm:$0xf]
    %v875 = vld [vmem:[#allocation10 + $0x12c] sm:$0xf]
    %v876 = vld [vmem:[#allocation10 + $0x130] sm:$0xf]
    %v877 = vld [vmem:[#allocation10 + $0x134] sm:$0xf]
    %v878 = vld [vmem:[#allocation10 + $0x138] sm:$0xf]
    %v879 = vld [vmem:[#allocation10 + $0x13c] sm:$0xf]
    %v880 = vld [vmem:[#allocation11 + $0x20] sm:$0x1]
    %v881 = vperm.slane %v880, 0
    %v898 = vunpack.c.l.b16 %v864
    %v899 = vunpack.c.l.b16 %v865
    %v900 = vunpack.c.l.b16 %v866
    %v901 = vunpack.c.l.b16 %v867
    %v902 = vunpack.c.l.b16 %v868
    %v903 = vunpack.c.l.b16 %v869
    %v904 = vunpack.c.l.b16 %v870
    %v905 = vunpack.c.l.b16 %v871
    %v906 = vunpack.c.l.b16 %v872
    %v907 = vunpack.c.l.b16 %v873
    %v908 = vunpack.c.l.b16 %v874
    %v909 = vunpack.c.l.b16 %v875
    %v910 = vunpack.c.l.b16 %v876
    %v911 = vunpack.c.l.b16 %v877
    %v912 = vunpack.c.l.b16 %v878
    %v913 = vunpack.c.l.b16 %v879
    %v914 = vpack.c.b16 %v899, %v898
    %v915 = vpack.c.b16 %v901, %v900
    %v916 = vpack.c.b16 %v903, %v902
    %v917 = vpack.c.b16 %v905, %v904
    %v918 = vpack.c.b16 %v907, %v906
    %v919 = vpack.c.b16 %v909, %v908
    %v920 = vpack.c.b16 %v911, %v910
    %v921 = vpack.c.b16 %v913, %v912
    %930 = vmatpush.bf16.msra.mxu0 %v921
    %931 = vmatpush.bf16.msra.mxu0 %v920
    %932 = vmatpush.bf16.msra.mxu0 %v919
    %933 = vmatpush.bf16.msra.mxu0 %v918
    %934 = vmatpush.bf16.msra.mxu0 %v917
    %935 = vmatpush.bf16.msra.mxu0 %v916
    %936 = vmatpush.bf16.msra.mxu0 %v915
    %937 = vmatpush.bf16.msra.mxu0 %v914
    %938 = vmatmul.bf16.gmra.mxu0 %v863
    %v939 = vpop.f32.mrf.mxu0
    %v940 = vadd.f32 %v881, %v939
    %v941 = vpop.f32.mrf.mxu0
    %v942 = vadd.f32 %v881, %v941
    %943 = vdwg.mxu0
    %v944 = vpack.c.bf16 %v846, %v845
    %v945 = vpack.c.bf16 %v848, %v847
    %v946 = vpack.c.bf16 %v850, %v849
    %v947 = vpack.c.bf16 %v852, %v851
    %v948 = vpack.c.bf16 %v854, %v853
    %v949 = vpack.c.bf16 %v856, %v855
    %v950 = vpack.c.bf16 %v858, %v857
    %v951 = vpack.c.bf16 %v860, %v859
    %v952 = vld [vmem:[#allocation10 + $0x140] sm:$0xf]
    %v953 = vld [vmem:[#allocation10 + $0x144] sm:$0xf]
    %v954 = vld [vmem:[#allocation10 + $0x148] sm:$0xf]
    %v955 = vld [vmem:[#allocation10 + $0x14c] sm:$0xf]
    %v956 = vld [vmem:[#allocation10 + $0x150] sm:$0xf]
    %v957 = vld [vmem:[#allocation10 + $0x154] sm:$0xf]
    %v958 = vld [vmem:[#allocation10 + $0x158] sm:$0xf]
    %v959 = vld [vmem:[#allocation10 + $0x15c] sm:$0xf]
    %v960 = vld [vmem:[#allocation10 + $0x160] sm:$0xf]
    %v961 = vld [vmem:[#allocation10 + $0x164] sm:$0xf]
    %v962 = vld [vmem:[#allocation10 + $0x168] sm:$0xf]
    %v963 = vld [vmem:[#allocation10 + $0x16c] sm:$0xf]
    %v964 = vld [vmem:[#allocation10 + $0x170] sm:$0xf]
    %v965 = vld [vmem:[#allocation10 + $0x174] sm:$0xf]
    %v966 = vld [vmem:[#allocation10 + $0x178] sm:$0xf]
    %v967 = vld [vmem:[#allocation10 + $0x17c] sm:$0xf]
    %v968 = vld [vmem:[#allocation11 + $0x28] sm:$0x1]
    %v969 = vperm.slane %v968, 0
    %v986 = vunpack.c.l.b16 %v952
    %v987 = vunpack.c.l.b16 %v953
    %v988 = vunpack.c.l.b16 %v954
    %v989 = vunpack.c.l.b16 %v955
    %v990 = vunpack.c.l.b16 %v956
    %v991 = vunpack.c.l.b16 %v957
    %v992 = vunpack.c.l.b16 %v958
    %v993 = vunpack.c.l.b16 %v959
    %v994 = vunpack.c.l.b16 %v960
    %v995 = vunpack.c.l.b16 %v961
    %v996 = vunpack.c.l.b16 %v962
    %v997 = vunpack.c.l.b16 %v963
    %v998 = vunpack.c.l.b16 %v964
    %v999 = vunpack.c.l.b16 %v965
    %v1000 = vunpack.c.l.b16 %v966
    %v1001 = vunpack.c.l.b16 %v967
    %v1002 = vpack.c.b16 %v987, %v986
    %v1003 = vpack.c.b16 %v989, %v988
    %v1004 = vpack.c.b16 %v991, %v990
    %v1005 = vpack.c.b16 %v993, %v992
    %v1006 = vpack.c.b16 %v995, %v994
    %v1007 = vpack.c.b16 %v997, %v996
    %v1008 = vpack.c.b16 %v999, %v998
    %v1009 = vpack.c.b16 %v1001, %v1000
    %1018 = vmatpush.bf16.msra.mxu0 %v1009
    %1019 = vmatpush.bf16.msra.mxu0 %v1008
    %1020 = vmatpush.bf16.msra.mxu0 %v1007
    %1021 = vmatpush.bf16.msra.mxu0 %v1006
    %1022 = vmatpush.bf16.msra.mxu0 %v1005
    %1023 = vmatpush.bf16.msra.mxu0 %v1004
    %1024 = vmatpush.bf16.msra.mxu0 %v1003
    %1025 = vmatpush.bf16.msra.mxu0 %v1002
    %1026 = vmatmul.bf16.gmra.mxu0 %v944
    %v1027 = vpop.f32.mrf.mxu0
    %v1028 = vadd.f32 %v969, %v1027
    %v1029 = vpop.f32.mrf.mxu0
    %v1030 = vadd.f32 %v969, %v1029
    %1031 = vmatmul.bf16.gmra.mxu0 %v945
    %v1032 = vpop.f32.mrf.mxu0
    %v1033 = vadd.f32 %v969, %v1032
    %v1034 = vpop.f32.mrf.mxu0
    %v1035 = vadd.f32 %v969, %v1034
    %1036 = vmatmul.bf16.gmra.mxu0 %v946
    %v1037 = vpop.f32.mrf.mxu0
    %v1038 = vadd.f32 %v969, %v1037
    %v1039 = vpop.f32.mrf.mxu0
    %v1040 = vadd.f32 %v969, %v1039
    %1041 = vmatmul.bf16.gmra.mxu0 %v947
    %v1042 = vpop.f32.mrf.mxu0
    %v1043 = vadd.f32 %v969, %v1042
    %v1044 = vpop.f32.mrf.mxu0
    %v1045 = vadd.f32 %v969, %v1044
    %1046 = vmatmul.bf16.gmra.mxu0 %v948
    %v1047 = vpop.f32.mrf.mxu0
    %v1048 = vadd.f32 %v969, %v1047
    %v1049 = vpop.f32.mrf.mxu0
    %v1050 = vadd.f32 %v969, %v1049
    %1051 = vmatmul.bf16.gmra.mxu0 %v949
    %v1052 = vpop.f32.mrf.mxu0
    %v1053 = vadd.f32 %v969, %v1052
    %v1054 = vpop.f32.mrf.mxu0
    %v1055 = vadd.f32 %v969, %v1054
    %1056 = vmatmul.bf16.gmra.mxu0 %v950
    %v1057 = vpop.f32.mrf.mxu0
    %v1058 = vadd.f32 %v969, %v1057
    %v1059 = vpop.f32.mrf.mxu0
    %v1060 = vadd.f32 %v969, %v1059
    %1061 = vmatmul.bf16.gmra.mxu0 %v951
    %v1062 = vpop.f32.mrf.mxu0
    %v1063 = vadd.f32 %v969, %v1062
    %v1064 = vpop.f32.mrf.mxu0
    %v1065 = vadd.f32 %v969, %v1064
    %1066 = vdwg.mxu0
    %v1067 = vpack.c.bf16 %v155, %v154
    %v1068 = vpack.c.bf16 %v157, %v156
    %v1069 = vpack.c.bf16 %v159, %v158
    %v1070 = vpack.c.bf16 %v161, %v160
    %v1071 = vpack.c.bf16 %v163, %v162
    %v1072 = vpack.c.bf16 %v165, %v164
    %v1073 = vpack.c.bf16 %v167, %v166
    %v1074 = vpack.c.bf16 %v169, %v168
    %v1075 = vld [vmem:[#allocation10 + $0x180] sm:$0xf]
    %v1076 = vld [vmem:[#allocation10 + $0x184] sm:$0xf]
    %v1077 = vld [vmem:[#allocation10 + $0x188] sm:$0xf]
    %v1078 = vld [vmem:[#allocation10 + $0x18c] sm:$0xf]
    %v1079 = vld [vmem:[#allocation10 + $0x190] sm:$0xf]
    %v1080 = vld [vmem:[#allocation10 + $0x194] sm:$0xf]
    %v1081 = vld [vmem:[#allocation10 + $0x198] sm:$0xf]
    %v1082 = vld [vmem:[#allocation10 + $0x19c] sm:$0xf]
    %v1083 = vld [vmem:[#allocation10 + $0x1a0] sm:$0xf]
    %v1084 = vld [vmem:[#allocation10 + $0x1a4] sm:$0xf]
    %v1085 = vld [vmem:[#allocation10 + $0x1a8] sm:$0xf]
    %v1086 = vld [vmem:[#allocation10 + $0x1ac] sm:$0xf]
    %v1087 = vld [vmem:[#allocation10 + $0x1b0] sm:$0xf]
    %v1088 = vld [vmem:[#allocation10 + $0x1b4] sm:$0xf]
    %v1089 = vld [vmem:[#allocation10 + $0x1b8] sm:$0xf]
    %v1090 = vld [vmem:[#allocation10 + $0x1bc] sm:$0xf]
    %v1091 = vld [vmem:[#allocation11 + $0x30] sm:$0x1]
    %v1092 = vperm.slane %v1091, 0
    %v1109 = vunpack.c.l.b16 %v1075
    %v1110 = vunpack.c.l.b16 %v1076
    %v1111 = vunpack.c.l.b16 %v1077
    %v1112 = vunpack.c.l.b16 %v1078
    %v1113 = vunpack.c.l.b16 %v1079
    %v1114 = vunpack.c.l.b16 %v1080
    %v1115 = vunpack.c.l.b16 %v1081
    %v1116 = vunpack.c.l.b16 %v1082
    %v1117 = vunpack.c.l.b16 %v1083
    %v1118 = vunpack.c.l.b16 %v1084
    %v1119 = vunpack.c.l.b16 %v1085
    %v1120 = vunpack.c.l.b16 %v1086
    %v1121 = vunpack.c.l.b16 %v1087
    %v1122 = vunpack.c.l.b16 %v1088
    %v1123 = vunpack.c.l.b16 %v1089
    %v1124 = vunpack.c.l.b16 %v1090
    %v1125 = vpack.c.b16 %v1110, %v1109
    %v1126 = vpack.c.b16 %v1112, %v1111
    %v1127 = vpack.c.b16 %v1114, %v1113
    %v1128 = vpack.c.b16 %v1116, %v1115
    %v1129 = vpack.c.b16 %v1118, %v1117
    %v1130 = vpack.c.b16 %v1120, %v1119
    %v1131 = vpack.c.b16 %v1122, %v1121
    %v1132 = vpack.c.b16 %v1124, %v1123
    %1141 = vmatpush.bf16.msra.mxu0 %v1132
    %1142 = vmatpush.bf16.msra.mxu0 %v1131
    %1143 = vmatpush.bf16.msra.mxu0 %v1130
    %1144 = vmatpush.bf16.msra.mxu0 %v1129
    %1145 = vmatpush.bf16.msra.mxu0 %v1128
    %1146 = vmatpush.bf16.msra.mxu0 %v1127
    %1147 = vmatpush.bf16.msra.mxu0 %v1126
    %1148 = vmatpush.bf16.msra.mxu0 %v1125
    %1149 = vmatmul.bf16.gmra.mxu0 %v1067
    %v1150 = vpop.f32.mrf.mxu0
    %v1151 = vadd.f32 %v1092, %v1150
    %v1152 = vpop.f32.mrf.mxu0
    %v1153 = vadd.f32 %v1092, %v1152
    %1154 = vmatmul.bf16.gmra.mxu0 %v1068
    %v1155 = vpop.f32.mrf.mxu0
    %v1156 = vadd.f32 %v1092, %v1155
    %v1157 = vpop.f32.mrf.mxu0
    %v1158 = vadd.f32 %v1092, %v1157
    %1159 = vmatmul.bf16.gmra.mxu0 %v1069
    %v1160 = vpop.f32.mrf.mxu0
    %v1161 = vadd.f32 %v1092, %v1160
    %v1162 = vpop.f32.mrf.mxu0
    %v1163 = vadd.f32 %v1092, %v1162
    %1164 = vmatmul.bf16.gmra.mxu0 %v1070
    %v1165 = vpop.f32.mrf.mxu0
    %v1166 = vadd.f32 %v1092, %v1165
    %v1167 = vpop.f32.mrf.mxu0
    %v1168 = vadd.f32 %v1092, %v1167
    %1169 = vmatmul.bf16.gmra.mxu0 %v1071
    %v1170 = vpop.f32.mrf.mxu0
    %v1171 = vadd.f32 %v1092, %v1170
    %v1172 = vpop.f32.mrf.mxu0
    %v1173 = vadd.f32 %v1092, %v1172
    %1174 = vmatmul.bf16.gmra.mxu0 %v1072
    %v1175 = vpop.f32.mrf.mxu0
    %v1176 = vadd.f32 %v1092, %v1175
    %v1177 = vpop.f32.mrf.mxu0
    %v1178 = vadd.f32 %v1092, %v1177
    %1179 = vmatmul.bf16.gmra.mxu0 %v1073
    %v1180 = vpop.f32.mrf.mxu0
    %v1181 = vadd.f32 %v1092, %v1180
    %v1182 = vpop.f32.mrf.mxu0
    %v1183 = vadd.f32 %v1092, %v1182
    %1184 = vmatmul.bf16.gmra.mxu0 %v1074
    %v1185 = vpop.f32.mrf.mxu0
    %v1186 = vadd.f32 %v1092, %v1185
    %v1187 = vpop.f32.mrf.mxu0
    %v1188 = vadd.f32 %v1092, %v1187
    %1189 = vdwg.mxu0
    %v1190 = vmul.f32 %v940, %v142
    %v1191 = vmul.f32 %v942, %v142
    %v1192 = vmul.f32 %v940, %v145
    %v1193 = vmul.f32 %v942, %v145
    %v1194 = vmul.f32 %v940, %v148
    %v1195 = vmul.f32 %v942, %v148
    %v1196 = vmul.f32 %v940, %v151
    %v1197 = vmul.f32 %v942, %v151
    %v1198 = vpack.c.bf16 %v1190, %v1190
    %v1199 = vpack.c.bf16 %v1192, %v1192
    %v1200 = vpack.c.bf16 %v1194, %v1194
    %v1201 = vpack.c.bf16 %v1196, %v1196
    %v1202 = vpack.c.bf16 %v1191, %v1191
    %v1203 = vpack.c.bf16 %v1193, %v1193
    %v1204 = vpack.c.bf16 %v1195, %v1195
    %v1205 = vpack.c.bf16 %v1197, %v1197
    %v1206 = vpack.c.bf16 %v1028, %v1028
    %v1207 = vpack.c.bf16 %v1030, %v1030
    %v1208 = vpack.c.bf16 %v1033, %v1033
    %v1209 = vpack.c.bf16 %v1035, %v1035
    %v1210 = vpack.c.bf16 %v1038, %v1038
    %v1211 = vpack.c.bf16 %v1040, %v1040
    %v1212 = vpack.c.bf16 %v1043, %v1043
    %v1213 = vpack.c.bf16 %v1045, %v1045
    %v1214 = vpack.c.bf16 %v1048, %v1048
    %v1215 = vpack.c.bf16 %v1050, %v1050
    %v1216 = vpack.c.bf16 %v1053, %v1053
    %v1217 = vpack.c.bf16 %v1055, %v1055
    %v1218 = vpack.c.bf16 %v1058, %v1058
    %v1219 = vpack.c.bf16 %v1060, %v1060
    %v1220 = vpack.c.bf16 %v1063, %v1063
    %v1221 = vpack.c.bf16 %v1065, %v1065
    %v1226 = vunpack.c.l.b16 %v1198
    %v1227 = vunpack.c.l.b16 %v1199
    %v1228 = vunpack.c.l.b16 %v1200
    %v1229 = vunpack.c.l.b16 %v1201
    %v1230 = vpack.c.b16 %v1227, %v1226
    %v1231 = vpack.c.b16 %v1229, %v1228
    %v1242 = vunpack.c.l.b16 %v1206
    %v1243 = vunpack.c.l.b16 %v1207
    %v1244 = vunpack.c.l.b16 %v1208
    %v1245 = vunpack.c.l.b16 %v1209
    %v1246 = vunpack.c.l.b16 %v1210
    %v1247 = vunpack.c.l.b16 %v1211
    %v1248 = vunpack.c.l.b16 %v1212
    %v1249 = vunpack.c.l.b16 %v1213
    %v1250 = vpack.c.b16 %v1243, %v1242
    %v1251 = vpack.c.b16 %v1245, %v1244
    %v1252 = vpack.c.b16 %v1247, %v1246
    %v1253 = vpack.c.b16 %v1249, %v1248
    %1258 = vmatpush.bf16.xpose.msra.mxu0 0
    %1259 = vmatpush.bf16.xpose.msra.mxu0 0
    %1260 = vmatpush.bf16.xpose.msra.mxu0 0
    %1261 = vmatpush.bf16.xpose.msra.mxu0 0
    %1262 = vmatpush.bf16.xpose.msra.mxu0 %v1253
    %1263 = vmatpush.bf16.xpose.msra.mxu0 %v1252
    %1264 = vmatpush.bf16.xpose.msra.mxu0 %v1251
    %1265 = vmatpush.bf16.xpose.msra.mxu0 %v1250
    %1266 = vmatmul.bf16.gmra.mxu0 %v1230
    %v1267 = vpop.f32.mrf.mxu0
    %v1268 = vadd.f32 0.0, %v1267
    %v1269 = vpop.f32.mrf.mxu0
    %v1270 = vadd.f32 0.0, %v1269
    %1271 = vmatmul.bf16.gmra.mxu0 %v1231
    %v1272 = vpop.f32.mrf.mxu0
    %v1273 = vadd.f32 0.0, %v1272
    %v1274 = vpop.f32.mrf.mxu0
    %v1275 = vadd.f32 0.0, %v1274
    %1276 = vdwg.mxu0
    %v1281 = vunpack.c.l.b16 %v1202
    %v1282 = vunpack.c.l.b16 %v1203
    %v1283 = vunpack.c.l.b16 %v1204
    %v1284 = vunpack.c.l.b16 %v1205
    %v1285 = vpack.c.b16 %v1282, %v1281
    %v1286 = vpack.c.b16 %v1284, %v1283
    %v1297 = vunpack.c.l.b16 %v1214
    %v1298 = vunpack.c.l.b16 %v1215
    %v1299 = vunpack.c.l.b16 %v1216
    %v1300 = vunpack.c.l.b16 %v1217
    %v1301 = vunpack.c.l.b16 %v1218
    %v1302 = vunpack.c.l.b16 %v1219
    %v1303 = vunpack.c.l.b16 %v1220
    %v1304 = vunpack.c.l.b16 %v1221
    %v1305 = vpack.c.b16 %v1298, %v1297
    %v1306 = vpack.c.b16 %v1300, %v1299
    %v1307 = vpack.c.b16 %v1302, %v1301
    %v1308 = vpack.c.b16 %v1304, %v1303
    %1313 = vmatpush.bf16.xpose.msra.mxu0 0
    %1314 = vmatpush.bf16.xpose.msra.mxu0 0
    %1315 = vmatpush.bf16.xpose.msra.mxu0 0
    %1316 = vmatpush.bf16.xpose.msra.mxu0 0
    %1317 = vmatpush.bf16.xpose.msra.mxu0 %v1308
    %1318 = vmatpush.bf16.xpose.msra.mxu0 %v1307
    %1319 = vmatpush.bf16.xpose.msra.mxu0 %v1306
    %1320 = vmatpush.bf16.xpose.msra.mxu0 %v1305
    %1321 = vmatmul.bf16.gmra.mxu0 %v1285
    %v1322 = vpop.f32.mrf.mxu0
    %v1323 = vadd.f32 0.0, %v1322
    %v1324 = vpop.f32.mrf.mxu0
    %v1325 = vadd.f32 0.0, %v1324
    %1326 = vmatmul.bf16.gmra.mxu0 %v1286
    %v1327 = vpop.f32.mrf.mxu0
    %v1328 = vadd.f32 0.0, %v1327
    %v1329 = vpop.f32.mrf.mxu0
    %v1330 = vadd.f32 0.0, %v1329
    %1331 = vdwg.mxu0
    %v1332 = vmul.f32 %v1268, 0.5
    %v1333 = vmul.f32 %v1270, 0.5
    %v1334 = vmul.f32 %v1273, 0.5
    %v1335 = vmul.f32 %v1275, 0.5
    %v1336 = vmul.f32 %v1323, 0.5
    %v1337 = vmul.f32 %v1325, 0.5
    %v1338 = vmul.f32 %v1328, 0.5
    %v1339 = vmul.f32 %v1330, 0.5
    %vm1340 = vcmask 523264
    %v1341 = vsel %vm1340, %v1332, -inf
    %1342 = vmax.xlane.f32.xlu0 %v1341
    %v1343 = vpop.xlane.xlu0 %1342
    %v1344 = vsel %vm1340, %v1333, -inf
    %1345 = vmax.xlane.f32.xlu0 %v1344
    %v1346 = vpop.xlane.xlu0 %1345
    %v1347 = vsel %vm1340, %v1334, -inf
    %1348 = vmax.xlane.f32.xlu0 %v1347
    %v1349 = vpop.xlane.xlu0 %1348
    %v1350 = vsel %vm1340, %v1335, -inf
    %1351 = vmax.xlane.f32.xlu0 %v1350
    %v1352 = vpop.xlane.xlu0 %1351
    %v1353 = vsel %vm1340, %v1336, -inf
    %1354 = vmax.xlane.f32.xlu0 %v1353
    %v1355 = vpop.xlane.xlu0 %1354
    %v1356 = vsel %vm1340, %v1337, -inf
    %1357 = vmax.xlane.f32.xlu0 %v1356
    %v1358 = vpop.xlane.xlu0 %1357
    %v1359 = vsel %vm1340, %v1338, -inf
    %1360 = vmax.xlane.f32.xlu0 %v1359
    %v1361 = vpop.xlane.xlu0 %1360
    %v1362 = vsel %vm1340, %v1339, -inf
    %1363 = vmax.xlane.f32.xlu0 %v1362
    %v1364 = vpop.xlane.xlu0 %1363
    %v1365 = vsub.f32 %v1332, %v1343
    %v1366 = vsub.f32 %v1333, %v1346
    %v1367 = vsub.f32 %v1334, %v1349
    %v1368 = vsub.f32 %v1335, %v1352
    %v1369 = vsub.f32 %v1336, %v1355
    %v1370 = vsub.f32 %v1337, %v1358
    %v1371 = vsub.f32 %v1338, %v1361
    %v1372 = vsub.f32 %v1339, %v1364
    %v1373 = vmul.f32 %v1365, 1.442695
    %v1374 = vpow.pop %v1373
    %v1375 = vmul.f32 %v1366, 1.442695
    %v1376 = vpow.pop %v1375
    %v1377 = vmul.f32 %v1367, 1.442695
    %v1378 = vpow.pop %v1377
    %v1379 = vmul.f32 %v1368, 1.442695
    %v1380 = vpow.pop %v1379
    %v1381 = vmul.f32 %v1369, 1.442695
    %v1382 = vpow.pop %v1381
    %v1383 = vmul.f32 %v1370, 1.442695
    %v1384 = vpow.pop %v1383
    %v1385 = vmul.f32 %v1371, 1.442695
    %v1386 = vpow.pop %v1385
    %v1387 = vmul.f32 %v1372, 1.442695
    %v1388 = vpow.pop %v1387
    %v1389 = vsel %vm1340, %v1374, 0.0
    %1390 = vadd.xlane.f32.xlu0 %v1389
    %v1391 = vpop.xlane.xlu0 %1390
    %v1392 = vsel %vm1340, %v1376, 0.0
    %1393 = vadd.xlane.f32.xlu0 %v1392
    %v1394 = vpop.xlane.xlu0 %1393
    %v1395 = vsel %vm1340, %v1378, 0.0
    %1396 = vadd.xlane.f32.xlu0 %v1395
    %v1397 = vpop.xlane.xlu0 %1396
    %v1398 = vsel %vm1340, %v1380, 0.0
    %1399 = vadd.xlane.f32.xlu0 %v1398
    %v1400 = vpop.xlane.xlu0 %1399
    %v1401 = vsel %vm1340, %v1382, 0.0
    %1402 = vadd.xlane.f32.xlu0 %v1401
    %v1403 = vpop.xlane.xlu0 %1402
    %v1404 = vsel %vm1340, %v1384, 0.0
    %1405 = vadd.xlane.f32.xlu0 %v1404
    %v1406 = vpop.xlane.xlu0 %1405
    %v1407 = vsel %vm1340, %v1386, 0.0
    %1408 = vadd.xlane.f32.xlu0 %v1407
    %v1409 = vpop.xlane.xlu0 %1408
    %v1410 = vsel %vm1340, %v1388, 0.0
    %1411 = vadd.xlane.f32.xlu0 %v1410
    %v1412 = vpop.xlane.xlu0 %1411
    %v1413 = vrcp.pop %v1391
    %v1414 = vrcp.pop %v1394
    %v1415 = vrcp.pop %v1397
    %v1416 = vrcp.pop %v1400
    %v1417 = vrcp.pop %v1403
    %v1418 = vrcp.pop %v1406
    %v1419 = vrcp.pop %v1409
    %v1420 = vrcp.pop %v1412
    %v1421 = vmul.f32 %v1374, %v1413
    %v1422 = vmul.f32 %v1376, %v1414
    %v1423 = vmul.f32 %v1378, %v1415
    %v1424 = vmul.f32 %v1380, %v1416
    %v1425 = vmul.f32 %v1382, %v1417
    %v1426 = vmul.f32 %v1384, %v1418
    %v1427 = vmul.f32 %v1386, %v1419
    %v1428 = vmul.f32 %v1388, %v1420
    %v1429 = vpack.c.bf16 %v1421, %v1421
    %v1430 = vpack.c.bf16 %v1422, %v1422
    %v1431 = vpack.c.bf16 %v1423, %v1423
    %v1432 = vpack.c.bf16 %v1424, %v1424
    %v1433 = vpack.c.bf16 %v1425, %v1425
    %v1434 = vpack.c.bf16 %v1426, %v1426
    %v1435 = vpack.c.bf16 %v1427, %v1427
    %v1436 = vpack.c.bf16 %v1428, %v1428
    %v1437 = vpack.c.bf16 %v1151, %v1151
    %v1438 = vpack.c.bf16 %v1153, %v1153
    %v1439 = vpack.c.bf16 %v1156, %v1156
    %v1440 = vpack.c.bf16 %v1158, %v1158
    %v1441 = vpack.c.bf16 %v1161, %v1161
    %v1442 = vpack.c.bf16 %v1163, %v1163
    %v1443 = vpack.c.bf16 %v1166, %v1166
    %v1444 = vpack.c.bf16 %v1168, %v1168
    %v1445 = vpack.c.bf16 %v1171, %v1171
    %v1446 = vpack.c.bf16 %v1173, %v1173
    %v1447 = vpack.c.bf16 %v1176, %v1176
    %v1448 = vpack.c.bf16 %v1178, %v1178
    %v1449 = vpack.c.bf16 %v1181, %v1181
    %v1450 = vpack.c.bf16 %v1183, %v1183
    %v1451 = vpack.c.bf16 %v1186, %v1186
    %v1452 = vpack.c.bf16 %v1188, %v1188
    %v1457 = vunpack.c.l.b16 %v1429
    %v1458 = vunpack.c.l.b16 %v1430
    %v1459 = vunpack.c.l.b16 %v1431
    %v1460 = vunpack.c.l.b16 %v1432
    %v1461 = vpack.c.b16 %v1458, %v1457
    %v1462 = vpack.c.b16 %v1460, %v1459
    %v1471 = vunpack.c.l.b16 %v1437
    %v1472 = vunpack.c.l.b16 %v1438
    %v1473 = vunpack.c.l.b16 %v1439
    %v1474 = vunpack.c.l.b16 %v1440
    %v1475 = vunpack.c.l.b16 %v1441
    %v1476 = vunpack.c.l.b16 %v1442
    %v1477 = vunpack.c.l.b16 %v1443
    %v1478 = vunpack.c.l.b16 %v1444
    %v1479 = vpack.c.b16 %v1472, %v1471
    %v1480 = vpack.c.b16 %v1474, %v1473
    %v1481 = vpack.c.b16 %v1476, %v1475
    %v1482 = vpack.c.b16 %v1478, %v1477
    %v1488 = vsel %vm1340, %v1461, 0
    %v1491 = vsel %vm1340, %v1462, 0
    %1493 = vmatpush.bf16.msra.mxu0 0
    %1494 = vmatpush.bf16.msra.mxu0 0
    %1495 = vmatpush.bf16.msra.mxu0 0
    %1496 = vmatpush.bf16.msra.mxu0 0
    %1497 = vmatpush.bf16.msra.mxu0 %v1482
    %1498 = vmatpush.bf16.msra.mxu0 %v1481
    %1499 = vmatpush.bf16.msra.mxu0 %v1480
    %1500 = vmatpush.bf16.msra.mxu0 %v1479
    %1501 = vmatmul.bf16.gmra.mxu0 %v1488
    %v1502 = vpop.f32.mrf.mxu0
    %v1503 = vadd.f32 0.0, %v1502
    %v1504 = vpop.f32.mrf.mxu0
    %v1505 = vadd.f32 0.0, %v1504
    %1506 = vmatmul.bf16.gmra.mxu0 %v1491
    %v1507 = vpop.f32.mrf.mxu0
    %v1508 = vadd.f32 0.0, %v1507
    %v1509 = vpop.f32.mrf.mxu0
    %v1510 = vadd.f32 0.0, %v1509
    %1511 = vdwg.mxu0
    %v1516 = vunpack.c.l.b16 %v1433
    %v1517 = vunpack.c.l.b16 %v1434
    %v1518 = vunpack.c.l.b16 %v1435
    %v1519 = vunpack.c.l.b16 %v1436
    %v1520 = vpack.c.b16 %v1517, %v1516
    %v1521 = vpack.c.b16 %v1519, %v1518
    %v1530 = vunpack.c.l.b16 %v1445
    %v1531 = vunpack.c.l.b16 %v1446
    %v1532 = vunpack.c.l.b16 %v1447
    %v1533 = vunpack.c.l.b16 %v1448
    %v1534 = vunpack.c.l.b16 %v1449
    %v1535 = vunpack.c.l.b16 %v1450
    %v1536 = vunpack.c.l.b16 %v1451
    %v1537 = vunpack.c.l.b16 %v1452
    %v1538 = vpack.c.b16 %v1531, %v1530
    %v1539 = vpack.c.b16 %v1533, %v1532
    %v1540 = vpack.c.b16 %v1535, %v1534
    %v1541 = vpack.c.b16 %v1537, %v1536
    %v1547 = vsel %vm1340, %v1520, 0
    %v1550 = vsel %vm1340, %v1521, 0
    %1552 = vmatpush.bf16.msra.mxu0 0
    %1553 = vmatpush.bf16.msra.mxu0 0
    %1554 = vmatpush.bf16.msra.mxu0 0
    %1555 = vmatpush.bf16.msra.mxu0 0
    %1556 = vmatpush.bf16.msra.mxu0 %v1541
    %1557 = vmatpush.bf16.msra.mxu0 %v1540
    %1558 = vmatpush.bf16.msra.mxu0 %v1539
    %1559 = vmatpush.bf16.msra.mxu0 %v1538
    %1560 = vmatmul.bf16.gmra.mxu0 %v1547
    %v1561 = vpop.f32.mrf.mxu0
    %v1562 = vadd.f32 0.0, %v1561
    %v1563 = vpop.f32.mrf.mxu0
    %v1564 = vadd.f32 0.0, %v1563
    %1565 = vmatmul.bf16.gmra.mxu0 %v1550
    %v1566 = vpop.f32.mrf.mxu0
    %v1567 = vadd.f32 0.0, %v1566
    %v1568 = vpop.f32.mrf.mxu0
    %v1569 = vadd.f32 0.0, %v1568
    %1570 = vdwg.mxu0
    %v1571 = vmul.f32 %v1503, %v142
    %v1572 = vmul.f32 %v1562, %v142
    %v1573 = vmul.f32 %v1505, %v145
    %v1574 = vmul.f32 %v1564, %v145
    %v1575 = vadd.f32 %v1571, %v1573
    %v1576 = vadd.f32 %v1572, %v1574
    %v1577 = vmul.f32 %v1508, %v148
    %v1578 = vmul.f32 %v1567, %v148
    %v1579 = vadd.f32 %v1575, %v1577
    %v1580 = vadd.f32 %v1576, %v1578
    %v1581 = vmul.f32 %v1510, %v151
    %v1582 = vmul.f32 %v1569, %v151
    %v1583 = vadd.f32 %v1579, %v1581
    %v1584 = vadd.f32 %v1580, %v1582
    %v1585 = vpack.c.bf16 %v1584, %v1583
    %v1586 = vld [vmem:[#allocation10 + $0x1c0] sm:$0xf]
    %v1587 = vld [vmem:[#allocation10 + $0x1c4] sm:$0xf]
    %v1588 = vld [vmem:[#allocation10 + $0x1c8] sm:$0xf]
    %v1589 = vld [vmem:[#allocation10 + $0x1cc] sm:$0xf]
    %v1590 = vld [vmem:[#allocation10 + $0x1d0] sm:$0xf]
    %v1591 = vld [vmem:[#allocation10 + $0x1d4] sm:$0xf]
    %v1592 = vld [vmem:[#allocation10 + $0x1d8] sm:$0xf]
    %v1593 = vld [vmem:[#allocation10 + $0x1dc] sm:$0xf]
    %v1594 = vld [vmem:[#allocation10 + $0x1e0] sm:$0xf]
    %v1595 = vld [vmem:[#allocation10 + $0x1e4] sm:$0xf]
    %v1596 = vld [vmem:[#allocation10 + $0x1e8] sm:$0xf]
    %v1597 = vld [vmem:[#allocation10 + $0x1ec] sm:$0xf]
    %v1598 = vld [vmem:[#allocation10 + $0x1f0] sm:$0xf]
    %v1599 = vld [vmem:[#allocation10 + $0x1f4] sm:$0xf]
    %v1600 = vld [vmem:[#allocation10 + $0x1f8] sm:$0xf]
    %v1601 = vld [vmem:[#allocation10 + $0x1fc] sm:$0xf]
    %v1602 = vld [vmem:[#allocation11 + $0x38] sm:$0x1]
    %v1603 = vperm.slane %v1602, 0
    %v1620 = vunpack.c.l.b16 %v1586
    %v1621 = vunpack.c.l.b16 %v1587
    %v1622 = vunpack.c.l.b16 %v1588
    %v1623 = vunpack.c.l.b16 %v1589
    %v1624 = vunpack.c.l.b16 %v1590
    %v1625 = vunpack.c.l.b16 %v1591
    %v1626 = vunpack.c.l.b16 %v1592
    %v1627 = vunpack.c.l.b16 %v1593
    %v1628 = vunpack.c.l.b16 %v1594
    %v1629 = vunpack.c.l.b16 %v1595
    %v1630 = vunpack.c.l.b16 %v1596
    %v1631 = vunpack.c.l.b16 %v1597
    %v1632 = vunpack.c.l.b16 %v1598
    %v1633 = vunpack.c.l.b16 %v1599
    %v1634 = vunpack.c.l.b16 %v1600
    %v1635 = vunpack.c.l.b16 %v1601
    %v1636 = vpack.c.b16 %v1621, %v1620
    %v1637 = vpack.c.b16 %v1623, %v1622
    %v1638 = vpack.c.b16 %v1625, %v1624
    %v1639 = vpack.c.b16 %v1627, %v1626
    %v1640 = vpack.c.b16 %v1629, %v1628
    %v1641 = vpack.c.b16 %v1631, %v1630
    %v1642 = vpack.c.b16 %v1633, %v1632
    %v1643 = vpack.c.b16 %v1635, %v1634
    %1652 = vmatpush.bf16.msra.mxu0 %v1643
    %1653 = vmatpush.bf16.msra.mxu0 %v1642
    %1654 = vmatpush.bf16.msra.mxu0 %v1641
    %1655 = vmatpush.bf16.msra.mxu0 %v1640
    %1656 = vmatpush.bf16.msra.mxu0 %v1639
    %1657 = vmatpush.bf16.msra.mxu0 %v1638
    %1658 = vmatpush.bf16.msra.mxu0 %v1637
    %1659 = vmatpush.bf16.msra.mxu0 %v1636
    %1660 = vmatmul.bf16.gmra.mxu0 %v1585
    %v1661 = vpop.f32.mrf.mxu0
    %v1662 = vadd.f32 %v1603, %v1661
    %v1663 = vpop.f32.mrf.mxu0
    %v1664 = vadd.f32 %v1603, %v1663
    %1665 = vdwg.mxu0
    %v1666 = vadd.f32 %v843, %v1662
    %v1667 = vadd.f32 %v844, %v1664
    %1668 = vadd.xlane.f32.xlu0 %v1666
    %v1669 = vpop.xlane.xlu0 %1668
    %1670 = vadd.xlane.f32.xlu0 %v1667
    %v1671 = vpop.xlane.xlu0 %1670
    %v1672 = vmul.f32 %v1669, 0.03125
    %v1673 = vmul.f32 %v1671, 0.03125
    %v1674 = vmul.f32 %v1666, %v1666
    %v1675 = vmul.f32 %v1667, %v1667
    %1676 = vadd.xlane.f32.xlu0 %v1674
    %v1677 = vpop.xlane.xlu0 %1676
    %1678 = vadd.xlane.f32.xlu0 %v1675
    %v1679 = vpop.xlane.xlu0 %1678
    %v1680 = vmul.f32 %v1677, 0.03125
    %v1681 = vmul.f32 %v1679, 0.03125
    %v1682 = vmul.f32 %v1672, %v1672
    %v1683 = vmul.f32 %v1673, %v1673
    %v1684 = vsub.f32 %v1680, %v1682
    %v1685 = vsub.f32 %v1681, %v1683
    %v1686 = vsub.f32 %v1666, %v1672
    %v1687 = vsub.f32 %v1667, %v1673
    %v1688 = vadd.f32 %v1684, 1e-05
    %v1689 = vadd.f32 %v1685, 1e-05
    %v1690 = vrsqrt.pop %v1688
    %v1691 = vmul.f32 %v1690, %v1688
    %v1692 = vmul.f32 %v1691, %v1690
    %v1693 = vmul.f32 0.5, %v1692
    %v1694 = vsub.f32 1.5, %v1693
    %v1695 = vmul.f32 %v1690, %v1694
    %vm1696 = vweird.f32 %v1688
    %vm1697 = vweird.f32 %v1690
    %vm1698 = vmor %vm1696, %vm1697
    %v1699 = vsel %vm1698, %v1690, %v1695
    %v1700 = vrsqrt.pop %v1689
    %v1701 = vmul.f32 %v1700, %v1689
    %v1702 = vmul.f32 %v1701, %v1700
    %v1703 = vmul.f32 0.5, %v1702
    %v1704 = vsub.f32 1.5, %v1703
    %v1705 = vmul.f32 %v1700, %v1704
    %vm1706 = vweird.f32 %v1689
    %vm1707 = vweird.f32 %v1700
    %vm1708 = vmor %vm1706, %vm1707
    %v1709 = vsel %vm1708, %v1700, %v1705
    %v1710 = vmul.f32 %v1686, %v1699
    %v1711 = vmul.f32 %v1687, %v1709
    %v1712 = vld [vmem:[#allocation11 + $0x80] sm:$0x1]
    %v1713 = vperm.slane %v1712, 0
    %v1714 = vmul.f32 %v1710, %v1713
    %v1715 = vmul.f32 %v1711, %v1713
    %v1716 = vld [vmem:[#allocation11 + $0x88] sm:$0x1]
    %v1717 = vperm.slane %v1716, 0
    %v1718 = vadd.f32 %v1714, %v1717
    %v1719 = vadd.f32 %v1715, %v1717
    %v1720 = vpack.c.bf16 %v1719, %v1718
    %v1721 = vld [vmem:[#allocation10 + $0x300] sm:$0xf]
    %v1722 = vld [vmem:[#allocation10 + $0x304] sm:$0xf]
    %v1723 = vld [vmem:[#allocation10 + $0x308] sm:$0xf]
    %v1724 = vld [vmem:[#allocation10 + $0x30c] sm:$0xf]
    %v1725 = vld [vmem:[#allocation10 + $0x310] sm:$0xf]
    %v1726 = vld [vmem:[#allocation10 + $0x314] sm:$0xf]
    %v1727 = vld [vmem:[#allocation10 + $0x318] sm:$0xf]
    %v1728 = vld [vmem:[#allocation10 + $0x31c] sm:$0xf]
    %v1729 = vld [vmem:[#allocation10 + $0x320] sm:$0xf]
    %v1730 = vld [vmem:[#allocation10 + $0x324] sm:$0xf]
    %v1731 = vld [vmem:[#allocation10 + $0x328] sm:$0xf]
    %v1732 = vld [vmem:[#allocation10 + $0x32c] sm:$0xf]
    %v1733 = vld [vmem:[#allocation10 + $0x330] sm:$0xf]
    %v1734 = vld [vmem:[#allocation10 + $0x334] sm:$0xf]
    %v1735 = vld [vmem:[#allocation10 + $0x338] sm:$0xf]
    %v1736 = vld [vmem:[#allocation10 + $0x33c] sm:$0xf]
    %v1737 = vld [vmem:[#allocation11 + $0x60] sm:$0x1]
    %v1738 = vperm.slane %v1737, 0
    %v1755 = vunpack.c.l.b16 %v1721
    %v1756 = vunpack.c.l.b16 %v1722
    %v1757 = vunpack.c.l.b16 %v1723
    %v1758 = vunpack.c.l.b16 %v1724
    %v1759 = vunpack.c.l.b16 %v1725
    %v1760 = vunpack.c.l.b16 %v1726
    %v1761 = vunpack.c.l.b16 %v1727
    %v1762 = vunpack.c.l.b16 %v1728
    %v1763 = vunpack.c.l.b16 %v1729
    %v1764 = vunpack.c.l.b16 %v1730
    %v1765 = vunpack.c.l.b16 %v1731
    %v1766 = vunpack.c.l.b16 %v1732
    %v1767 = vunpack.c.l.b16 %v1733
    %v1768 = vunpack.c.l.b16 %v1734
    %v1769 = vunpack.c.l.b16 %v1735
    %v1770 = vunpack.c.l.b16 %v1736
    %v1771 = vpack.c.b16 %v1756, %v1755
    %v1772 = vpack.c.b16 %v1758, %v1757
    %v1773 = vpack.c.b16 %v1760, %v1759
    %v1774 = vpack.c.b16 %v1762, %v1761
    %v1775 = vpack.c.b16 %v1764, %v1763
    %v1776 = vpack.c.b16 %v1766, %v1765
    %v1777 = vpack.c.b16 %v1768, %v1767
    %v1778 = vpack.c.b16 %v1770, %v1769
    %1787 = vmatpush.bf16.msra.mxu0 %v1778
    %1788 = vmatpush.bf16.msra.mxu0 %v1777
    %1789 = vmatpush.bf16.msra.mxu0 %v1776
    %1790 = vmatpush.bf16.msra.mxu0 %v1775
    %1791 = vmatpush.bf16.msra.mxu0 %v1774
    %1792 = vmatpush.bf16.msra.mxu0 %v1773
    %1793 = vmatpush.bf16.msra.mxu0 %v1772
    %1794 = vmatpush.bf16.msra.mxu0 %v1771
    %1795 = vmatmul.bf16.gmra.mxu0 %v1720
    %v1796 = vpop.f32.mrf.mxu0
    %v1797 = vadd.f32 %v1738, %v1796
    %v1798 = vpop.f32.mrf.mxu0
    %v1799 = vadd.f32 %v1738, %v1798
    %1800 = vdwg.mxu0
    %v1801 = vmax.f32 %v1797, 0.0
    %v1802 = vmax.f32 %v1799, 0.0
    %v1803 = vpack.c.bf16 %v1802, %v1801
    %v1804 = vld [vmem:[#allocation10 + $0x340] sm:$0xf]
    %v1805 = vld [vmem:[#allocation10 + $0x344] sm:$0xf]
    %v1806 = vld [vmem:[#allocation10 + $0x348] sm:$0xf]
    %v1807 = vld [vmem:[#allocation10 + $0x34c] sm:$0xf]
    %v1808 = vld [vmem:[#allocation10 + $0x350] sm:$0xf]
    %v1809 = vld [vmem:[#allocation10 + $0x354] sm:$0xf]
    %v1810 = vld [vmem:[#allocation10 + $0x358] sm:$0xf]
    %v1811 = vld [vmem:[#allocation10 + $0x35c] sm:$0xf]
    %v1812 = vld [vmem:[#allocation10 + $0x360] sm:$0xf]
    %v1813 = vld [vmem:[#allocation10 + $0x364] sm:$0xf]
    %v1814 = vld [vmem:[#allocation10 + $0x368] sm:$0xf]
    %v1815 = vld [vmem:[#allocation10 + $0x36c] sm:$0xf]
    %v1816 = vld [vmem:[#allocation10 + $0x370] sm:$0xf]
    %v1817 = vld [vmem:[#allocation10 + $0x374] sm:$0xf]
    %v1818 = vld [vmem:[#allocation10 + $0x378] sm:$0xf]
    %v1819 = vld [vmem:[#allocation10 + $0x37c] sm:$0xf]
    %v1820 = vld [vmem:[#allocation11 + $0x68] sm:$0x1]
    %v1821 = vperm.slane %v1820, 0
    %v1838 = vunpack.c.l.b16 %v1804
    %v1839 = vunpack.c.l.b16 %v1805
    %v1840 = vunpack.c.l.b16 %v1806
    %v1841 = vunpack.c.l.b16 %v1807
    %v1842 = vunpack.c.l.b16 %v1808
    %v1843 = vunpack.c.l.b16 %v1809
    %v1844 = vunpack.c.l.b16 %v1810
    %v1845 = vunpack.c.l.b16 %v1811
    %v1846 = vunpack.c.l.b16 %v1812
    %v1847 = vunpack.c.l.b16 %v1813
    %v1848 = vunpack.c.l.b16 %v1814
    %v1849 = vunpack.c.l.b16 %v1815
    %v1850 = vunpack.c.l.b16 %v1816
    %v1851 = vunpack.c.l.b16 %v1817
    %v1852 = vunpack.c.l.b16 %v1818
    %v1853 = vunpack.c.l.b16 %v1819
    %v1854 = vpack.c.b16 %v1839, %v1838
    %v1855 = vpack.c.b16 %v1841, %v1840
    %v1856 = vpack.c.b16 %v1843, %v1842
    %v1857 = vpack.c.b16 %v1845, %v1844
    %v1858 = vpack.c.b16 %v1847, %v1846
    %v1859 = vpack.c.b16 %v1849, %v1848
    %v1860 = vpack.c.b16 %v1851, %v1850
    %v1861 = vpack.c.b16 %v1853, %v1852
    %1870 = vmatpush.bf16.msra.mxu0 %v1861
    %1871 = vmatpush.bf16.msra.mxu0 %v1860
    %1872 = vmatpush.bf16.msra.mxu0 %v1859
    %1873 = vmatpush.bf16.msra.mxu0 %v1858
    %1874 = vmatpush.bf16.msra.mxu0 %v1857
    %1875 = vmatpush.bf16.msra.mxu0 %v1856
    %1876 = vmatpush.bf16.msra.mxu0 %v1855
    %1877 = vmatpush.bf16.msra.mxu0 %v1854
    %1878 = vmatmul.bf16.gmra.mxu0 %v1803
    %v1879 = vpop.f32.mrf.mxu0
    %v1880 = vadd.f32 %v1821, %v1879
    %v1881 = vpop.f32.mrf.mxu0
    %v1882 = vadd.f32 %v1821, %v1881
    %1883 = vdwg.mxu0
    %v1884 = vadd.f32 %v1718, %v1880
    %v1885 = vadd.f32 %v1719, %v1882
    %1886 = vadd.xlane.f32.xlu0 %v1884
    %v1887 = vpop.xlane.xlu0 %1886
    %1888 = vadd.xlane.f32.xlu0 %v1885
    %v1889 = vpop.xlane.xlu0 %1888
    %v1890 = vmul.f32 %v1887, 0.03125
    %v1891 = vmul.f32 %v1889, 0.03125
    %v1892 = vmul.f32 %v1884, %v1884
    %v1893 = vmul.f32 %v1885, %v1885
    %1894 = vadd.xlane.f32.xlu0 %v1892
    %v1895 = vpop.xlane.xlu0 %1894
    %1896 = vadd.xlane.f32.xlu0 %v1893
    %v1897 = vpop.xlane.xlu0 %1896
    %v1898 = vmul.f32 %v1895, 0.03125
    %v1899 = vmul.f32 %v1897, 0.03125
    %v1900 = vmul.f32 %v1890, %v1890
    %v1901 = vmul.f32 %v1891, %v1891
    %v1902 = vsub.f32 %v1898, %v1900
    %v1903 = vsub.f32 %v1899, %v1901
    %v1904 = vsub.f32 %v1884, %v1890
    %v1905 = vsub.f32 %v1885, %v1891
    %v1906 = vadd.f32 %v1902, 1e-05
    %v1907 = vadd.f32 %v1903, 1e-05
    %v1908 = vrsqrt.pop %v1906
    %v1909 = vmul.f32 %v1908, %v1906
    %v1910 = vmul.f32 %v1909, %v1908
    %v1911 = vmul.f32 0.5, %v1910
    %v1912 = vsub.f32 1.5, %v1911
    %v1913 = vmul.f32 %v1908, %v1912
    %vm1914 = vweird.f32 %v1906
    %vm1915 = vweird.f32 %v1908
    %vm1916 = vmor %vm1914, %vm1915
    %v1917 = vsel %vm1916, %v1908, %v1913
    %v1918 = vrsqrt.pop %v1907
    %v1919 = vmul.f32 %v1918, %v1907
    %v1920 = vmul.f32 %v1919, %v1918
    %v1921 = vmul.f32 0.5, %v1920
    %v1922 = vsub.f32 1.5, %v1921
    %v1923 = vmul.f32 %v1918, %v1922
    %vm1924 = vweird.f32 %v1907
    %vm1925 = vweird.f32 %v1918
    %vm1926 = vmor %vm1924, %vm1925
    %v1927 = vsel %vm1926, %v1918, %v1923
    %v1928 = vmul.f32 %v1904, %v1917
    %v1929 = vmul.f32 %v1905, %v1927
    %v1930 = vld [vmem:[#allocation11 + $0x90] sm:$0x1]
    %v1931 = vperm.slane %v1930, 0
    %v1932 = vmul.f32 %v1928, %v1931
    %v1933 = vmul.f32 %v1929, %v1931
    %v1934 = vld [vmem:[#allocation11 + $0x98] sm:$0x1]
    %v1935 = vperm.slane %v1934, 0
    %v1936 = vadd.f32 %v1932, %v1935
    %v1937 = vadd.f32 %v1933, %v1935
    %v1938 = vadd.f32 %v1936, %v170
    %v1939 = vadd.f32 %v1937, %v171
    %v1940 = vld [vmem:[#allocation10 + $0x200] sm:$0xf]
    %v1941 = vld [vmem:[#allocation10 + $0x204] sm:$0xf]
    %v1942 = vld [vmem:[#allocation10 + $0x208] sm:$0xf]
    %v1943 = vld [vmem:[#allocation10 + $0x20c] sm:$0xf]
    %v1944 = vld [vmem:[#allocation10 + $0x210] sm:$0xf]
    %v1945 = vld [vmem:[#allocation10 + $0x214] sm:$0xf]
    %v1946 = vld [vmem:[#allocation10 + $0x218] sm:$0xf]
    %v1947 = vld [vmem:[#allocation10 + $0x21c] sm:$0xf]
    %v1948 = vld [vmem:[#allocation10 + $0x220] sm:$0xf]
    %v1949 = vld [vmem:[#allocation10 + $0x224] sm:$0xf]
    %v1950 = vld [vmem:[#allocation10 + $0x228] sm:$0xf]
    %v1951 = vld [vmem:[#allocation10 + $0x22c] sm:$0xf]
    %v1952 = vld [vmem:[#allocation10 + $0x230] sm:$0xf]
    %v1953 = vld [vmem:[#allocation10 + $0x234] sm:$0xf]
    %v1954 = vld [vmem:[#allocation10 + $0x238] sm:$0xf]
    %v1955 = vld [vmem:[#allocation10 + $0x23c] sm:$0xf]
    %v1956 = vld [vmem:[#allocation11 + $0x40] sm:$0x1]
    %v1957 = vperm.slane %v1956, 0
    %v1974 = vunpack.c.l.b16 %v1940
    %v1975 = vunpack.c.l.b16 %v1941
    %v1976 = vunpack.c.l.b16 %v1942
    %v1977 = vunpack.c.l.b16 %v1943
    %v1978 = vunpack.c.l.b16 %v1944
    %v1979 = vunpack.c.l.b16 %v1945
    %v1980 = vunpack.c.l.b16 %v1946
    %v1981 = vunpack.c.l.b16 %v1947
    %v1982 = vunpack.c.l.b16 %v1948
    %v1983 = vunpack.c.l.b16 %v1949
    %v1984 = vunpack.c.l.b16 %v1950
    %v1985 = vunpack.c.l.b16 %v1951
    %v1986 = vunpack.c.l.b16 %v1952
    %v1987 = vunpack.c.l.b16 %v1953
    %v1988 = vunpack.c.l.b16 %v1954
    %v1989 = vunpack.c.l.b16 %v1955
    %v1990 = vpack.c.b16 %v1975, %v1974
    %v1991 = vpack.c.b16 %v1977, %v1976
    %v1992 = vpack.c.b16 %v1979, %v1978
    %v1993 = vpack.c.b16 %v1981, %v1980
    %v1994 = vpack.c.b16 %v1983, %v1982
    %v1995 = vpack.c.b16 %v1985, %v1984
    %v1996 = vpack.c.b16 %v1987, %v1986
    %v1997 = vpack.c.b16 %v1989, %v1988
    %2006 = vmatpush.bf16.msra.mxu0 %v1997
    %2007 = vmatpush.bf16.msra.mxu0 %v1996
    %2008 = vmatpush.bf16.msra.mxu0 %v1995
    %2009 = vmatpush.bf16.msra.mxu0 %v1994
    %2010 = vmatpush.bf16.msra.mxu0 %v1993
    %2011 = vmatpush.bf16.msra.mxu0 %v1992
    %2012 = vmatpush.bf16.msra.mxu0 %v1991
    %2013 = vmatpush.bf16.msra.mxu0 %v1990
    %2014 = vmatmul.bf16.gmra.mxu0 %v944
    %v2015 = vpop.f32.mrf.mxu0
    %v2016 = vadd.f32 %v1957, %v2015
    %v2017 = vpop.f32.mrf.mxu0
    %v2018 = vadd.f32 %v1957, %v2017
    %2019 = vmatmul.bf16.gmra.mxu0 %v945
    %v2020 = vpop.f32.mrf.mxu0
    %v2021 = vadd.f32 %v1957, %v2020
    %v2022 = vpop.f32.mrf.mxu0
    %v2023 = vadd.f32 %v1957, %v2022
    %2024 = vmatmul.bf16.gmra.mxu0 %v946
    %v2025 = vpop.f32.mrf.mxu0
    %v2026 = vadd.f32 %v1957, %v2025
    %v2027 = vpop.f32.mrf.mxu0
    %v2028 = vadd.f32 %v1957, %v2027
    %2029 = vmatmul.bf16.gmra.mxu0 %v947
    %v2030 = vpop.f32.mrf.mxu0
    %v2031 = vadd.f32 %v1957, %v2030
    %v2032 = vpop.f32.mrf.mxu0
    %v2033 = vadd.f32 %v1957, %v2032
    %2034 = vmatmul.bf16.gmra.mxu0 %v948
    %v2035 = vpop.f32.mrf.mxu0
    %v2036 = vadd.f32 %v1957, %v2035
    %v2037 = vpop.f32.mrf.mxu0
    %v2038 = vadd.f32 %v1957, %v2037
    %2039 = vmatmul.bf16.gmra.mxu0 %v949
    %v2040 = vpop.f32.mrf.mxu0
    %v2041 = vadd.f32 %v1957, %v2040
    %v2042 = vpop.f32.mrf.mxu0
    %v2043 = vadd.f32 %v1957, %v2042
    %2044 = vmatmul.bf16.gmra.mxu0 %v950
    %v2045 = vpop.f32.mrf.mxu0
    %v2046 = vadd.f32 %v1957, %v2045
    %v2047 = vpop.f32.mrf.mxu0
    %v2048 = vadd.f32 %v1957, %v2047
    %2049 = vmatmul.bf16.gmra.mxu0 %v951
    %v2050 = vpop.f32.mrf.mxu0
    %v2051 = vadd.f32 %v1957, %v2050
    %v2052 = vpop.f32.mrf.mxu0
    %v2053 = vadd.f32 %v1957, %v2052
    %2054 = vdwg.mxu0
    %v2055 = vpack.c.bf16 %v1939, %v1938
    %v2056 = vld [vmem:[#allocation10 + $0x240] sm:$0xf]
    %v2057 = vld [vmem:[#allocation10 + $0x244] sm:$0xf]
    %v2058 = vld [vmem:[#allocation10 + $0x248] sm:$0xf]
    %v2059 = vld [vmem:[#allocation10 + $0x24c] sm:$0xf]
    %v2060 = vld [vmem:[#allocation10 + $0x250] sm:$0xf]
    %v2061 = vld [vmem:[#allocation10 + $0x254] sm:$0xf]
    %v2062 = vld [vmem:[#allocation10 + $0x258] sm:$0xf]
    %v2063 = vld [vmem:[#allocation10 + $0x25c] sm:$0xf]
    %v2064 = vld [vmem:[#allocation10 + $0x260] sm:$0xf]
    %v2065 = vld [vmem:[#allocation10 + $0x264] sm:$0xf]
    %v2066 = vld [vmem:[#allocation10 + $0x268] sm:$0xf]
    %v2067 = vld [vmem:[#allocation10 + $0x26c] sm:$0xf]
    %v2068 = vld [vmem:[#allocation10 + $0x270] sm:$0xf]
    %v2069 = vld [vmem:[#allocation10 + $0x274] sm:$0xf]
    %v2070 = vld [vmem:[#allocation10 + $0x278] sm:$0xf]
    %v2071 = vld [vmem:[#allocation10 + $0x27c] sm:$0xf]
    %v2072 = vld [vmem:[#allocation11 + $0x48] sm:$0x1]
    %v2073 = vperm.slane %v2072, 0
    %v2090 = vunpack.c.l.b16 %v2056
    %v2091 = vunpack.c.l.b16 %v2057
    %v2092 = vunpack.c.l.b16 %v2058
    %v2093 = vunpack.c.l.b16 %v2059
    %v2094 = vunpack.c.l.b16 %v2060
    %v2095 = vunpack.c.l.b16 %v2061
    %v2096 = vunpack.c.l.b16 %v2062
    %v2097 = vunpack.c.l.b16 %v2063
    %v2098 = vunpack.c.l.b16 %v2064
    %v2099 = vunpack.c.l.b16 %v2065
    %v2100 = vunpack.c.l.b16 %v2066
    %v2101 = vunpack.c.l.b16 %v2067
    %v2102 = vunpack.c.l.b16 %v2068
    %v2103 = vunpack.c.l.b16 %v2069
    %v2104 = vunpack.c.l.b16 %v2070
    %v2105 = vunpack.c.l.b16 %v2071
    %v2106 = vpack.c.b16 %v2091, %v2090
    %v2107 = vpack.c.b16 %v2093, %v2092
    %v2108 = vpack.c.b16 %v2095, %v2094
    %v2109 = vpack.c.b16 %v2097, %v2096
    %v2110 = vpack.c.b16 %v2099, %v2098
    %v2111 = vpack.c.b16 %v2101, %v2100
    %v2112 = vpack.c.b16 %v2103, %v2102
    %v2113 = vpack.c.b16 %v2105, %v2104
    %2122 = vmatpush.bf16.msra.mxu0 %v2113
    %2123 = vmatpush.bf16.msra.mxu0 %v2112
    %2124 = vmatpush.bf16.msra.mxu0 %v2111
    %2125 = vmatpush.bf16.msra.mxu0 %v2110
    %2126 = vmatpush.bf16.msra.mxu0 %v2109
    %2127 = vmatpush.bf16.msra.mxu0 %v2108
    %2128 = vmatpush.bf16.msra.mxu0 %v2107
    %2129 = vmatpush.bf16.msra.mxu0 %v2106
    %2130 = vmatmul.bf16.gmra.mxu0 %v2055
    %v2131 = vpop.f32.mrf.mxu0
    %v2132 = vadd.f32 %v2073, %v2131
    %v2133 = vpop.f32.mrf.mxu0
    %v2134 = vadd.f32 %v2073, %v2133
    %2135 = vdwg.mxu0
    %v2136 = vpack.c.bf16 %v1937, %v1936
    %v2137 = vld [vmem:[#allocation10 + $0x280] sm:$0xf]
    %v2138 = vld [vmem:[#allocation10 + $0x284] sm:$0xf]
    %v2139 = vld [vmem:[#allocation10 + $0x288] sm:$0xf]
    %v2140 = vld [vmem:[#allocation10 + $0x28c] sm:$0xf]
    %v2141 = vld [vmem:[#allocation10 + $0x290] sm:$0xf]
    %v2142 = vld [vmem:[#allocation10 + $0x294] sm:$0xf]
    %v2143 = vld [vmem:[#allocation10 + $0x298] sm:$0xf]
    %v2144 = vld [vmem:[#allocation10 + $0x29c] sm:$0xf]
    %v2145 = vld [vmem:[#allocation10 + $0x2a0] sm:$0xf]
    %v2146 = vld [vmem:[#allocation10 + $0x2a4] sm:$0xf]
    %v2147 = vld [vmem:[#allocation10 + $0x2a8] sm:$0xf]
    %v2148 = vld [vmem:[#allocation10 + $0x2ac] sm:$0xf]
    %v2149 = vld [vmem:[#allocation10 + $0x2b0] sm:$0xf]
    %v2150 = vld [vmem:[#allocation10 + $0x2b4] sm:$0xf]
    %v2151 = vld [vmem:[#allocation10 + $0x2b8] sm:$0xf]
    %v2152 = vld [vmem:[#allocation10 + $0x2bc] sm:$0xf]
    %v2153 = vld [vmem:[#allocation11 + $0x50] sm:$0x1]
    %v2154 = vperm.slane %v2153, 0
    %v2171 = vunpack.c.l.b16 %v2137
    %v2172 = vunpack.c.l.b16 %v2138
    %v2173 = vunpack.c.l.b16 %v2139
    %v2174 = vunpack.c.l.b16 %v2140
    %v2175 = vunpack.c.l.b16 %v2141
    %v2176 = vunpack.c.l.b16 %v2142
    %v2177 = vunpack.c.l.b16 %v2143
    %v2178 = vunpack.c.l.b16 %v2144
    %v2179 = vunpack.c.l.b16 %v2145
    %v2180 = vunpack.c.l.b16 %v2146
    %v2181 = vunpack.c.l.b16 %v2147
    %v2182 = vunpack.c.l.b16 %v2148
    %v2183 = vunpack.c.l.b16 %v2149
    %v2184 = vunpack.c.l.b16 %v2150
    %v2185 = vunpack.c.l.b16 %v2151
    %v2186 = vunpack.c.l.b16 %v2152
    %v2187 = vpack.c.b16 %v2172, %v2171
    %v2188 = vpack.c.b16 %v2174, %v2173
    %v2189 = vpack.c.b16 %v2176, %v2175
    %v2190 = vpack.c.b16 %v2178, %v2177
    %v2191 = vpack.c.b16 %v2180, %v2179
    %v2192 = vpack.c.b16 %v2182, %v2181
    %v2193 = vpack.c.b16 %v2184, %v2183
    %v2194 = vpack.c.b16 %v2186, %v2185
    %2203 = vmatpush.bf16.msra.mxu0 %v2194
    %2204 = vmatpush.bf16.msra.mxu0 %v2193
    %2205 = vmatpush.bf16.msra.mxu0 %v2192
    %2206 = vmatpush.bf16.msra.mxu0 %v2191
    %2207 = vmatpush.bf16.msra.mxu0 %v2190
    %2208 = vmatpush.bf16.msra.mxu0 %v2189
    %2209 = vmatpush.bf16.msra.mxu0 %v2188
    %2210 = vmatpush.bf16.msra.mxu0 %v2187
    %2211 = vmatmul.bf16.gmra.mxu0 %v2136
    %v2212 = vpop.f32.mrf.mxu0
    %v2213 = vadd.f32 %v2154, %v2212
    %v2214 = vpop.f32.mrf.mxu0
    %v2215 = vadd.f32 %v2154, %v2214
    %2216 = vdwg.mxu0
    %v2217 = vmul.f32 %v2016, %v142
    %v2218 = vmul.f32 %v2018, %v142
    %v2219 = vmul.f32 %v2021, %v142
    %v2220 = vmul.f32 %v2023, %v142
    %v2221 = vmul.f32 %v2026, %v142
    %v2222 = vmul.f32 %v2028, %v142
    %v2223 = vmul.f32 %v2031, %v142
    %v2224 = vmul.f32 %v2033, %v142
    %v2225 = vmul.f32 %v2036, %v142
    %v2226 = vmul.f32 %v2038, %v142
    %v2227 = vmul.f32 %v2041, %v142
    %v2228 = vmul.f32 %v2043, %v142
    %v2229 = vmul.f32 %v2046, %v142
    %v2230 = vmul.f32 %v2048, %v142
    %v2231 = vmul.f32 %v2051, %v142
    %v2232 = vmul.f32 %v2053, %v142
    %v2233 = vmul.f32 %v2016, %v145
    %v2234 = vmul.f32 %v2018, %v145
    %v2235 = vmul.f32 %v2021, %v145
    %v2236 = vmul.f32 %v2023, %v145
    %v2237 = vmul.f32 %v2026, %v145
    %v2238 = vmul.f32 %v2028, %v145
    %v2239 = vmul.f32 %v2031, %v145
    %v2240 = vmul.f32 %v2033, %v145
    %v2241 = vmul.f32 %v2036, %v145
    %v2242 = vmul.f32 %v2038, %v145
    %v2243 = vmul.f32 %v2041, %v145
    %v2244 = vmul.f32 %v2043, %v145
    %v2245 = vmul.f32 %v2046, %v145
    %v2246 = vmul.f32 %v2048, %v145
    %v2247 = vmul.f32 %v2051, %v145
    %v2248 = vmul.f32 %v2053, %v145
    %v2249 = vmul.f32 %v2016, %v148
    %v2250 = vmul.f32 %v2018, %v148
    %v2251 = vmul.f32 %v2021, %v148
    %v2252 = vmul.f32 %v2023, %v148
    %v2253 = vmul.f32 %v2026, %v148
    %v2254 = vmul.f32 %v2028, %v148
    %v2255 = vmul.f32 %v2031, %v148
    %v2256 = vmul.f32 %v2033, %v148
    %v2257 = vmul.f32 %v2036, %v148
    %v2258 = vmul.f32 %v2038, %v148
    %v2259 = vmul.f32 %v2041, %v148
    %v2260 = vmul.f32 %v2043, %v148
    %v2261 = vmul.f32 %v2046, %v148
    %v2262 = vmul.f32 %v2048, %v148
    %v2263 = vmul.f32 %v2051, %v148
    %v2264 = vmul.f32 %v2053, %v148
    %v2265 = vmul.f32 %v2016, %v151
    %v2266 = vmul.f32 %v2018, %v151
    %v2267 = vmul.f32 %v2021, %v151
    %v2268 = vmul.f32 %v2023, %v151
    %v2269 = vmul.f32 %v2026, %v151
    %v2270 = vmul.f32 %v2028, %v151
    %v2271 = vmul.f32 %v2031, %v151
    %v2272 = vmul.f32 %v2033, %v151
    %v2273 = vmul.f32 %v2036, %v151
    %v2274 = vmul.f32 %v2038, %v151
    %v2275 = vmul.f32 %v2041, %v151
    %v2276 = vmul.f32 %v2043, %v151
    %v2277 = vmul.f32 %v2046, %v151
    %v2278 = vmul.f32 %v2048, %v151
    %v2279 = vmul.f32 %v2051, %v151
    %v2280 = vmul.f32 %v2053, %v151
    %v2281 = vpack.c.bf16 %v2217, %v2217
    %v2282 = vpack.c.bf16 %v2218, %v2218
    %v2283 = vpack.c.bf16 %v2219, %v2219
    %v2284 = vpack.c.bf16 %v2220, %v2220
    %v2285 = vpack.c.bf16 %v2221, %v2221
    %v2286 = vpack.c.bf16 %v2222, %v2222
    %v2287 = vpack.c.bf16 %v2223, %v2223
    %v2288 = vpack.c.bf16 %v2224, %v2224
    %v2289 = vpack.c.bf16 %v2233, %v2233
    %v2290 = vpack.c.bf16 %v2234, %v2234
    %v2291 = vpack.c.bf16 %v2235, %v2235
    %v2292 = vpack.c.bf16 %v2236, %v2236
    %v2293 = vpack.c.bf16 %v2237, %v2237
    %v2294 = vpack.c.bf16 %v2238, %v2238
    %v2295 = vpack.c.bf16 %v2239, %v2239
    %v2296 = vpack.c.bf16 %v2240, %v2240
    %v2297 = vpack.c.bf16 %v2249, %v2249
    %v2298 = vpack.c.bf16 %v2250, %v2250
    %v2299 = vpack.c.bf16 %v2251, %v2251
    %v2300 = vpack.c.bf16 %v2252, %v2252
    %v2301 = vpack.c.bf16 %v2253, %v2253
    %v2302 = vpack.c.bf16 %v2254, %v2254
    %v2303 = vpack.c.bf16 %v2255, %v2255
    %v2304 = vpack.c.bf16 %v2256, %v2256
    %v2305 = vpack.c.bf16 %v2265, %v2265
    %v2306 = vpack.c.bf16 %v2266, %v2266
    %v2307 = vpack.c.bf16 %v2267, %v2267
    %v2308 = vpack.c.bf16 %v2268, %v2268
    %v2309 = vpack.c.bf16 %v2269, %v2269
    %v2310 = vpack.c.bf16 %v2270, %v2270
    %v2311 = vpack.c.bf16 %v2271, %v2271
    %v2312 = vpack.c.bf16 %v2272, %v2272
    %v2313 = vpack.c.bf16 %v2225, %v2225
    %v2314 = vpack.c.bf16 %v2226, %v2226
    %v2315 = vpack.c.bf16 %v2227, %v2227
    %v2316 = vpack.c.bf16 %v2228, %v2228
    %v2317 = vpack.c.bf16 %v2229, %v2229
    %v2318 = vpack.c.bf16 %v2230, %v2230
    %v2319 = vpack.c.bf16 %v2231, %v2231
    %v2320 = vpack.c.bf16 %v2232, %v2232
    %v2321 = vpack.c.bf16 %v2241, %v2241
    %v2322 = vpack.c.bf16 %v2242, %v2242
    %v2323 = vpack.c.bf16 %v2243, %v2243
    %v2324 = vpack.c.bf16 %v2244, %v2244
    %v2325 = vpack.c.bf16 %v2245, %v2245
    %v2326 = vpack.c.bf16 %v2246, %v2246
    %v2327 = vpack.c.bf16 %v2247, %v2247
    %v2328 = vpack.c.bf16 %v2248, %v2248
    %v2329 = vpack.c.bf16 %v2257, %v2257
    %v2330 = vpack.c.bf16 %v2258, %v2258
    %v2331 = vpack.c.bf16 %v2259, %v2259
    %v2332 = vpack.c.bf16 %v2260, %v2260
    %v2333 = vpack.c.bf16 %v2261, %v2261
    %v2334 = vpack.c.bf16 %v2262, %v2262
    %v2335 = vpack.c.bf16 %v2263, %v2263
    %v2336 = vpack.c.bf16 %v2264, %v2264
    %v2337 = vpack.c.bf16 %v2273, %v2273
    %v2338 = vpack.c.bf16 %v2274, %v2274
    %v2339 = vpack.c.bf16 %v2275, %v2275
    %v2340 = vpack.c.bf16 %v2276, %v2276
    %v2341 = vpack.c.bf16 %v2277, %v2277
    %v2342 = vpack.c.bf16 %v2278, %v2278
    %v2343 = vpack.c.bf16 %v2279, %v2279
    %v2344 = vpack.c.bf16 %v2280, %v2280
    %v2345 = vpack.c.bf16 %v2132, %v2132
    %v2346 = vpack.c.bf16 %v2134, %v2134
    %v2379 = vunpack.c.l.b16 %v2281
    %v2380 = vunpack.c.l.b16 %v2282
    %v2381 = vunpack.c.l.b16 %v2283
    %v2382 = vunpack.c.l.b16 %v2284
    %v2383 = vunpack.c.l.b16 %v2285
    %v2384 = vunpack.c.l.b16 %v2286
    %v2385 = vunpack.c.l.b16 %v2287
    %v2386 = vunpack.c.l.b16 %v2288
    %v2387 = vunpack.c.l.b16 %v2289
    %v2388 = vunpack.c.l.b16 %v2290
    %v2389 = vunpack.c.l.b16 %v2291
    %v2390 = vunpack.c.l.b16 %v2292
    %v2391 = vunpack.c.l.b16 %v2293
    %v2392 = vunpack.c.l.b16 %v2294
    %v2393 = vunpack.c.l.b16 %v2295
    %v2394 = vunpack.c.l.b16 %v2296
    %v2395 = vunpack.c.l.b16 %v2297
    %v2396 = vunpack.c.l.b16 %v2298
    %v2397 = vunpack.c.l.b16 %v2299
    %v2398 = vunpack.c.l.b16 %v2300
    %v2399 = vunpack.c.l.b16 %v2301
    %v2400 = vunpack.c.l.b16 %v2302
    %v2401 = vunpack.c.l.b16 %v2303
    %v2402 = vunpack.c.l.b16 %v2304
    %v2403 = vunpack.c.l.b16 %v2305
    %v2404 = vunpack.c.l.b16 %v2306
    %v2405 = vunpack.c.l.b16 %v2307
    %v2406 = vunpack.c.l.b16 %v2308
    %v2407 = vunpack.c.l.b16 %v2309
    %v2408 = vunpack.c.l.b16 %v2310
    %v2409 = vunpack.c.l.b16 %v2311
    %v2410 = vunpack.c.l.b16 %v2312
    %v2411 = vpack.c.b16 %v2380, %v2379
    %v2412 = vpack.c.b16 %v2382, %v2381
    %v2413 = vpack.c.b16 %v2384, %v2383
    %v2414 = vpack.c.b16 %v2386, %v2385
    %v2415 = vpack.c.b16 %v2388, %v2387
    %v2416 = vpack.c.b16 %v2390, %v2389
    %v2417 = vpack.c.b16 %v2392, %v2391
    %v2418 = vpack.c.b16 %v2394, %v2393
    %v2419 = vpack.c.b16 %v2396, %v2395
    %v2420 = vpack.c.b16 %v2398, %v2397
    %v2421 = vpack.c.b16 %v2400, %v2399
    %v2422 = vpack.c.b16 %v2402, %v2401
    %v2423 = vpack.c.b16 %v2404, %v2403
    %v2424 = vpack.c.b16 %v2406, %v2405
    %v2425 = vpack.c.b16 %v2408, %v2407
    %v2426 = vpack.c.b16 %v2410, %v2409
    %2443 = vmatpush.bf16.xpose.msra.mxu0 0
    %2444 = vmatpush.bf16.xpose.msra.mxu0 0
    %2445 = vmatpush.bf16.xpose.msra.mxu0 0
    %2446 = vmatpush.bf16.xpose.msra.mxu0 0
    %2447 = vmatpush.bf16.xpose.msra.mxu0 0
    %2448 = vmatpush.bf16.xpose.msra.mxu0 0
    %2449 = vmatpush.bf16.xpose.msra.mxu0 0
    %2450 = vmatpush.bf16.xpose.msra.mxu0 %v2345
    %2451 = vmatmul.bf16.gmra.mxu0 %v2411
    %v2452 = vpop.f32.mrf.mxu0
    %v2453 = vadd.f32 0.0, %v2452
    %v2454 = vpop.f32.mrf.mxu0
    %v2455 = vadd.f32 0.0, %v2454
    %2456 = vmatmul.bf16.gmra.mxu0 %v2412
    %v2457 = vpop.f32.mrf.mxu0
    %v2458 = vadd.f32 0.0, %v2457
    %v2459 = vpop.f32.mrf.mxu0
    %v2460 = vadd.f32 0.0, %v2459
    %2461 = vmatmul.bf16.gmra.mxu0 %v2413
    %v2462 = vpop.f32.mrf.mxu0
    %v2463 = vadd.f32 0.0, %v2462
    %v2464 = vpop.f32.mrf.mxu0
    %v2465 = vadd.f32 0.0, %v2464
    %2466 = vmatmul.bf16.gmra.mxu0 %v2414
    %v2467 = vpop.f32.mrf.mxu0
    %v2468 = vadd.f32 0.0, %v2467
    %v2469 = vpop.f32.mrf.mxu0
    %v2470 = vadd.f32 0.0, %v2469
    %2471 = vmatmul.bf16.gmra.mxu0 %v2415
    %v2472 = vpop.f32.mrf.mxu0
    %v2473 = vadd.f32 0.0, %v2472
    %v2474 = vpop.f32.mrf.mxu0
    %v2475 = vadd.f32 0.0, %v2474
    %2476 = vmatmul.bf16.gmra.mxu0 %v2416
    %v2477 = vpop.f32.mrf.mxu0
    %v2478 = vadd.f32 0.0, %v2477
    %v2479 = vpop.f32.mrf.mxu0
    %v2480 = vadd.f32 0.0, %v2479
    %2481 = vmatmul.bf16.gmra.mxu0 %v2417
    %v2482 = vpop.f32.mrf.mxu0
    %v2483 = vadd.f32 0.0, %v2482
    %v2484 = vpop.f32.mrf.mxu0
    %v2485 = vadd.f32 0.0, %v2484
    %2486 = vmatmul.bf16.gmra.mxu0 %v2418
    %v2487 = vpop.f32.mrf.mxu0
    %v2488 = vadd.f32 0.0, %v2487
    %v2489 = vpop.f32.mrf.mxu0
    %v2490 = vadd.f32 0.0, %v2489
    %2491 = vmatmul.bf16.gmra.mxu0 %v2419
    %v2492 = vpop.f32.mrf.mxu0
    %v2493 = vadd.f32 0.0, %v2492
    %v2494 = vpop.f32.mrf.mxu0
    %v2495 = vadd.f32 0.0, %v2494
    %2496 = vmatmul.bf16.gmra.mxu0 %v2420
    %v2497 = vpop.f32.mrf.mxu0
    %v2498 = vadd.f32 0.0, %v2497
    %v2499 = vpop.f32.mrf.mxu0
    %v2500 = vadd.f32 0.0, %v2499
    %2501 = vmatmul.bf16.gmra.mxu0 %v2421
    %v2502 = vpop.f32.mrf.mxu0
    %v2503 = vadd.f32 0.0, %v2502
    %v2504 = vpop.f32.mrf.mxu0
    %v2505 = vadd.f32 0.0, %v2504
    %2506 = vmatmul.bf16.gmra.mxu0 %v2422
    %v2507 = vpop.f32.mrf.mxu0
    %v2508 = vadd.f32 0.0, %v2507
    %v2509 = vpop.f32.mrf.mxu0
    %v2510 = vadd.f32 0.0, %v2509
    %2511 = vmatmul.bf16.gmra.mxu0 %v2423
    %v2512 = vpop.f32.mrf.mxu0
    %v2513 = vadd.f32 0.0, %v2512
    %v2514 = vpop.f32.mrf.mxu0
    %v2515 = vadd.f32 0.0, %v2514
    %2516 = vmatmul.bf16.gmra.mxu0 %v2424
    %v2517 = vpop.f32.mrf.mxu0
    %v2518 = vadd.f32 0.0, %v2517
    %v2519 = vpop.f32.mrf.mxu0
    %v2520 = vadd.f32 0.0, %v2519
    %2521 = vmatmul.bf16.gmra.mxu0 %v2425
    %v2522 = vpop.f32.mrf.mxu0
    %v2523 = vadd.f32 0.0, %v2522
    %v2524 = vpop.f32.mrf.mxu0
    %v2525 = vadd.f32 0.0, %v2524
    %2526 = vmatmul.bf16.gmra.mxu0 %v2426
    %v2527 = vpop.f32.mrf.mxu0
    %v2528 = vadd.f32 0.0, %v2527
    %v2529 = vpop.f32.mrf.mxu0
    %v2530 = vadd.f32 0.0, %v2529
    %2531 = vdwg.mxu0
    %v2564 = vunpack.c.l.b16 %v2313
    %v2565 = vunpack.c.l.b16 %v2314
    %v2566 = vunpack.c.l.b16 %v2315
    %v2567 = vunpack.c.l.b16 %v2316
    %v2568 = vunpack.c.l.b16 %v2317
    %v2569 = vunpack.c.l.b16 %v2318
    %v2570 = vunpack.c.l.b16 %v2319
    %v2571 = vunpack.c.l.b16 %v2320
    %v2572 = vunpack.c.l.b16 %v2321
    %v2573 = vunpack.c.l.b16 %v2322
    %v2574 = vunpack.c.l.b16 %v2323
    %v2575 = vunpack.c.l.b16 %v2324
    %v2576 = vunpack.c.l.b16 %v2325
    %v2577 = vunpack.c.l.b16 %v2326
    %v2578 = vunpack.c.l.b16 %v2327
    %v2579 = vunpack.c.l.b16 %v2328
    %v2580 = vunpack.c.l.b16 %v2329
    %v2581 = vunpack.c.l.b16 %v2330
    %v2582 = vunpack.c.l.b16 %v2331
    %v2583 = vunpack.c.l.b16 %v2332
    %v2584 = vunpack.c.l.b16 %v2333
    %v2585 = vunpack.c.l.b16 %v2334
    %v2586 = vunpack.c.l.b16 %v2335
    %v2587 = vunpack.c.l.b16 %v2336
    %v2588 = vunpack.c.l.b16 %v2337
    %v2589 = vunpack.c.l.b16 %v2338
    %v2590 = vunpack.c.l.b16 %v2339
    %v2591 = vunpack.c.l.b16 %v2340
    %v2592 = vunpack.c.l.b16 %v2341
    %v2593 = vunpack.c.l.b16 %v2342
    %v2594 = vunpack.c.l.b16 %v2343
    %v2595 = vunpack.c.l.b16 %v2344
    %v2596 = vpack.c.b16 %v2565, %v2564
    %v2597 = vpack.c.b16 %v2567, %v2566
    %v2598 = vpack.c.b16 %v2569, %v2568
    %v2599 = vpack.c.b16 %v2571, %v2570
    %v2600 = vpack.c.b16 %v2573, %v2572
    %v2601 = vpack.c.b16 %v2575, %v2574
    %v2602 = vpack.c.b16 %v2577, %v2576
    %v2603 = vpack.c.b16 %v2579, %v2578
    %v2604 = vpack.c.b16 %v2581, %v2580
    %v2605 = vpack.c.b16 %v2583, %v2582
    %v2606 = vpack.c.b16 %v2585, %v2584
    %v2607 = vpack.c.b16 %v2587, %v2586
    %v2608 = vpack.c.b16 %v2589, %v2588
    %v2609 = vpack.c.b16 %v2591, %v2590
    %v2610 = vpack.c.b16 %v2593, %v2592
    %v2611 = vpack.c.b16 %v2595, %v2594
    %2628 = vmatpush.bf16.xpose.msra.mxu0 0
    %2629 = vmatpush.bf16.xpose.msra.mxu0 0
    %2630 = vmatpush.bf16.xpose.msra.mxu0 0
    %2631 = vmatpush.bf16.xpose.msra.mxu0 0
    %2632 = vmatpush.bf16.xpose.msra.mxu0 0
    %2633 = vmatpush.bf16.xpose.msra.mxu0 0
    %2634 = vmatpush.bf16.xpose.msra.mxu0 0
    %2635 = vmatpush.bf16.xpose.msra.mxu0 %v2346
    %2636 = vmatmul.bf16.gmra.mxu0 %v2596
    %v2637 = vpop.f32.mrf.mxu0
    %v2638 = vadd.f32 0.0, %v2637
    %v2639 = vpop.f32.mrf.mxu0
    %v2640 = vadd.f32 0.0, %v2639
    %2641 = vmatmul.bf16.gmra.mxu0 %v2597
    %v2642 = vpop.f32.mrf.mxu0
    %v2643 = vadd.f32 0.0, %v2642
    %v2644 = vpop.f32.mrf.mxu0
    %v2645 = vadd.f32 0.0, %v2644
    %2646 = vmatmul.bf16.gmra.mxu0 %v2598
    %v2647 = vpop.f32.mrf.mxu0
    %v2648 = vadd.f32 0.0, %v2647
    %v2649 = vpop.f32.mrf.mxu0
    %v2650 = vadd.f32 0.0, %v2649
    %2651 = vmatmul.bf16.gmra.mxu0 %v2599
    %v2652 = vpop.f32.mrf.mxu0
    %v2653 = vadd.f32 0.0, %v2652
    %v2654 = vpop.f32.mrf.mxu0
    %v2655 = vadd.f32 0.0, %v2654
    %2656 = vmatmul.bf16.gmra.mxu0 %v2600
    %v2657 = vpop.f32.mrf.mxu0
    %v2658 = vadd.f32 0.0, %v2657
    %v2659 = vpop.f32.mrf.mxu0
    %v2660 = vadd.f32 0.0, %v2659
    %2661 = vmatmul.bf16.gmra.mxu0 %v2601
    %v2662 = vpop.f32.mrf.mxu0
    %v2663 = vadd.f32 0.0, %v2662
    %v2664 = vpop.f32.mrf.mxu0
    %v2665 = vadd.f32 0.0, %v2664
    %2666 = vmatmul.bf16.gmra.mxu0 %v2602
    %v2667 = vpop.f32.mrf.mxu0
    %v2668 = vadd.f32 0.0, %v2667
    %v2669 = vpop.f32.mrf.mxu0
    %v2670 = vadd.f32 0.0, %v2669
    %2671 = vmatmul.bf16.gmra.mxu0 %v2603
    %v2672 = vpop.f32.mrf.mxu0
    %v2673 = vadd.f32 0.0, %v2672
    %v2674 = vpop.f32.mrf.mxu0
    %v2675 = vadd.f32 0.0, %v2674
    %2676 = vmatmul.bf16.gmra.mxu0 %v2604
    %v2677 = vpop.f32.mrf.mxu0
    %v2678 = vadd.f32 0.0, %v2677
    %v2679 = vpop.f32.mrf.mxu0
    %v2680 = vadd.f32 0.0, %v2679
    %2681 = vmatmul.bf16.gmra.mxu0 %v2605
    %v2682 = vpop.f32.mrf.mxu0
    %v2683 = vadd.f32 0.0, %v2682
    %v2684 = vpop.f32.mrf.mxu0
    %v2685 = vadd.f32 0.0, %v2684
    %2686 = vmatmul.bf16.gmra.mxu0 %v2606
    %v2687 = vpop.f32.mrf.mxu0
    %v2688 = vadd.f32 0.0, %v2687
    %v2689 = vpop.f32.mrf.mxu0
    %v2690 = vadd.f32 0.0, %v2689
    %2691 = vmatmul.bf16.gmra.mxu0 %v2607
    %v2692 = vpop.f32.mrf.mxu0
    %v2693 = vadd.f32 0.0, %v2692
    %v2694 = vpop.f32.mrf.mxu0
    %v2695 = vadd.f32 0.0, %v2694
    %2696 = vmatmul.bf16.gmra.mxu0 %v2608
    %v2697 = vpop.f32.mrf.mxu0
    %v2698 = vadd.f32 0.0, %v2697
    %v2699 = vpop.f32.mrf.mxu0
    %v2700 = vadd.f32 0.0, %v2699
    %2701 = vmatmul.bf16.gmra.mxu0 %v2609
    %v2702 = vpop.f32.mrf.mxu0
    %v2703 = vadd.f32 0.0, %v2702
    %v2704 = vpop.f32.mrf.mxu0
    %v2705 = vadd.f32 0.0, %v2704
    %2706 = vmatmul.bf16.gmra.mxu0 %v2610
    %v2707 = vpop.f32.mrf.mxu0
    %v2708 = vadd.f32 0.0, %v2707
    %v2709 = vpop.f32.mrf.mxu0
    %v2710 = vadd.f32 0.0, %v2709
    %2711 = vmatmul.bf16.gmra.mxu0 %v2611
    %v2712 = vpop.f32.mrf.mxu0
    %v2713 = vadd.f32 0.0, %v2712
    %v2714 = vpop.f32.mrf.mxu0
    %v2715 = vadd.f32 0.0, %v2714
    %2716 = vdwg.mxu0
    %v2717 = vmul.f32 %v2453, 0.5
    %v2718 = vmul.f32 %v2455, 0.5
    %v2719 = vmul.f32 %v2458, 0.5
    %v2720 = vmul.f32 %v2460, 0.5
    %v2721 = vmul.f32 %v2463, 0.5
    %v2722 = vmul.f32 %v2465, 0.5
    %v2723 = vmul.f32 %v2468, 0.5
    %v2724 = vmul.f32 %v2470, 0.5
    %v2725 = vmul.f32 %v2473, 0.5
    %v2726 = vmul.f32 %v2475, 0.5
    %v2727 = vmul.f32 %v2478, 0.5
    %v2728 = vmul.f32 %v2480, 0.5
    %v2729 = vmul.f32 %v2483, 0.5
    %v2730 = vmul.f32 %v2485, 0.5
    %v2731 = vmul.f32 %v2488, 0.5
    %v2732 = vmul.f32 %v2490, 0.5
    %v2733 = vmul.f32 %v2493, 0.5
    %v2734 = vmul.f32 %v2495, 0.5
    %v2735 = vmul.f32 %v2498, 0.5
    %v2736 = vmul.f32 %v2500, 0.5
    %v2737 = vmul.f32 %v2503, 0.5
    %v2738 = vmul.f32 %v2505, 0.5
    %v2739 = vmul.f32 %v2508, 0.5
    %v2740 = vmul.f32 %v2510, 0.5
    %v2741 = vmul.f32 %v2513, 0.5
    %v2742 = vmul.f32 %v2515, 0.5
    %v2743 = vmul.f32 %v2518, 0.5
    %v2744 = vmul.f32 %v2520, 0.5
    %v2745 = vmul.f32 %v2523, 0.5
    %v2746 = vmul.f32 %v2525, 0.5
    %v2747 = vmul.f32 %v2528, 0.5
    %v2748 = vmul.f32 %v2530, 0.5
    %v2749 = vmul.f32 %v2638, 0.5
    %v2750 = vmul.f32 %v2640, 0.5
    %v2751 = vmul.f32 %v2643, 0.5
    %v2752 = vmul.f32 %v2645, 0.5
    %v2753 = vmul.f32 %v2648, 0.5
    %v2754 = vmul.f32 %v2650, 0.5
    %v2755 = vmul.f32 %v2653, 0.5
    %v2756 = vmul.f32 %v2655, 0.5
    %v2757 = vmul.f32 %v2658, 0.5
    %v2758 = vmul.f32 %v2660, 0.5
    %v2759 = vmul.f32 %v2663, 0.5
    %v2760 = vmul.f32 %v2665, 0.5
    %v2761 = vmul.f32 %v2668, 0.5
    %v2762 = vmul.f32 %v2670, 0.5
    %v2763 = vmul.f32 %v2673, 0.5
    %v2764 = vmul.f32 %v2675, 0.5
    %v2765 = vmul.f32 %v2678, 0.5
    %v2766 = vmul.f32 %v2680, 0.5
    %v2767 = vmul.f32 %v2683, 0.5
    %v2768 = vmul.f32 %v2685, 0.5
    %v2769 = vmul.f32 %v2688, 0.5
    %v2770 = vmul.f32 %v2690, 0.5
    %v2771 = vmul.f32 %v2693, 0.5
    %v2772 = vmul.f32 %v2695, 0.5
    %v2773 = vmul.f32 %v2698, 0.5
    %v2774 = vmul.f32 %v2700, 0.5
    %v2775 = vmul.f32 %v2703, 0.5
    %v2776 = vmul.f32 %v2705, 0.5
    %v2777 = vmul.f32 %v2708, 0.5
    %v2778 = vmul.f32 %v2710, 0.5
    %v2779 = vmul.f32 %v2713, 0.5
    %v2780 = vmul.f32 %v2715, 0.5
    %v2781 = vsel %vm520, %v2717, -inf
    %2782 = vmax.xlane.f32.xlu0 %v2781
    %v2783 = vpop.xlane.xlu0 %2782
    %v2784 = vsel %vm520, %v2718, -inf
    %2785 = vmax.xlane.f32.xlu0 %v2784
    %v2786 = vpop.xlane.xlu0 %2785
    %v2787 = vsel %vm520, %v2719, -inf
    %2788 = vmax.xlane.f32.xlu0 %v2787
    %v2789 = vpop.xlane.xlu0 %2788
    %v2790 = vsel %vm520, %v2720, -inf
    %2791 = vmax.xlane.f32.xlu0 %v2790
    %v2792 = vpop.xlane.xlu0 %2791
    %v2793 = vsel %vm520, %v2721, -inf
    %2794 = vmax.xlane.f32.xlu0 %v2793
    %v2795 = vpop.xlane.xlu0 %2794
    %v2796 = vsel %vm520, %v2722, -inf
    %2797 = vmax.xlane.f32.xlu0 %v2796
    %v2798 = vpop.xlane.xlu0 %2797
    %v2799 = vsel %vm520, %v2723, -inf
    %2800 = vmax.xlane.f32.xlu0 %v2799
    %v2801 = vpop.xlane.xlu0 %2800
    %v2802 = vsel %vm520, %v2724, -inf
    %2803 = vmax.xlane.f32.xlu0 %v2802
    %v2804 = vpop.xlane.xlu0 %2803
    %v2805 = vsel %vm520, %v2725, -inf
    %2806 = vmax.xlane.f32.xlu0 %v2805
    %v2807 = vpop.xlane.xlu0 %2806
    %v2808 = vsel %vm520, %v2726, -inf
    %2809 = vmax.xlane.f32.xlu0 %v2808
    %v2810 = vpop.xlane.xlu0 %2809
    %v2811 = vsel %vm520, %v2727, -inf
    %2812 = vmax.xlane.f32.xlu0 %v2811
    %v2813 = vpop.xlane.xlu0 %2812
    %v2814 = vsel %vm520, %v2728, -inf
    %2815 = vmax.xlane.f32.xlu0 %v2814
    %v2816 = vpop.xlane.xlu0 %2815
    %v2817 = vsel %vm520, %v2729, -inf
    %2818 = vmax.xlane.f32.xlu0 %v2817
    %v2819 = vpop.xlane.xlu0 %2818
    %v2820 = vsel %vm520, %v2730, -inf
    %2821 = vmax.xlane.f32.xlu0 %v2820
    %v2822 = vpop.xlane.xlu0 %2821
    %v2823 = vsel %vm520, %v2731, -inf
    %2824 = vmax.xlane.f32.xlu0 %v2823
    %v2825 = vpop.xlane.xlu0 %2824
    %v2826 = vsel %vm520, %v2732, -inf
    %2827 = vmax.xlane.f32.xlu0 %v2826
    %v2828 = vpop.xlane.xlu0 %2827
    %v2829 = vsel %vm520, %v2733, -inf
    %2830 = vmax.xlane.f32.xlu0 %v2829
    %v2831 = vpop.xlane.xlu0 %2830
    %v2832 = vsel %vm520, %v2734, -inf
    %2833 = vmax.xlane.f32.xlu0 %v2832
    %v2834 = vpop.xlane.xlu0 %2833
    %v2835 = vsel %vm520, %v2735, -inf
    %2836 = vmax.xlane.f32.xlu0 %v2835
    %v2837 = vpop.xlane.xlu0 %2836
    %v2838 = vsel %vm520, %v2736, -inf
    %2839 = vmax.xlane.f32.xlu0 %v2838
    %v2840 = vpop.xlane.xlu0 %2839
    %v2841 = vsel %vm520, %v2737, -inf
    %2842 = vmax.xlane.f32.xlu0 %v2841
    %v2843 = vpop.xlane.xlu0 %2842
    %v2844 = vsel %vm520, %v2738, -inf
    %2845 = vmax.xlane.f32.xlu0 %v2844
    %v2846 = vpop.xlane.xlu0 %2845
    %v2847 = vsel %vm520, %v2739, -inf
    %2848 = vmax.xlane.f32.xlu0 %v2847
    %v2849 = vpop.xlane.xlu0 %2848
    %v2850 = vsel %vm520, %v2740, -inf
    %2851 = vmax.xlane.f32.xlu0 %v2850
    %v2852 = vpop.xlane.xlu0 %2851
    %v2853 = vsel %vm520, %v2741, -inf
    %2854 = vmax.xlane.f32.xlu0 %v2853
    %v2855 = vpop.xlane.xlu0 %2854
    %v2856 = vsel %vm520, %v2742, -inf
    %2857 = vmax.xlane.f32.xlu0 %v2856
    %v2858 = vpop.xlane.xlu0 %2857
    %v2859 = vsel %vm520, %v2743, -inf
    %2860 = vmax.xlane.f32.xlu0 %v2859
    %v2861 = vpop.xlane.xlu0 %2860
    %v2862 = vsel %vm520, %v2744, -inf
    %2863 = vmax.xlane.f32.xlu0 %v2862
    %v2864 = vpop.xlane.xlu0 %2863
    %v2865 = vsel %vm520, %v2745, -inf
    %2866 = vmax.xlane.f32.xlu0 %v2865
    %v2867 = vpop.xlane.xlu0 %2866
    %v2868 = vsel %vm520, %v2746, -inf
    %2869 = vmax.xlane.f32.xlu0 %v2868
    %v2870 = vpop.xlane.xlu0 %2869
    %v2871 = vsel %vm520, %v2747, -inf
    %2872 = vmax.xlane.f32.xlu0 %v2871
    %v2873 = vpop.xlane.xlu0 %2872
    %v2874 = vsel %vm520, %v2748, -inf
    %2875 = vmax.xlane.f32.xlu0 %v2874
    %v2876 = vpop.xlane.xlu0 %2875
    %v2877 = vsel %vm520, %v2749, -inf
    %2878 = vmax.xlane.f32.xlu0 %v2877
    %v2879 = vpop.xlane.xlu0 %2878
    %v2880 = vsel %vm520, %v2750, -inf
    %2881 = vmax.xlane.f32.xlu0 %v2880
    %v2882 = vpop.xlane.xlu0 %2881
    %v2883 = vsel %vm520, %v2751, -inf
    %2884 = vmax.xlane.f32.xlu0 %v2883
    %v2885 = vpop.xlane.xlu0 %2884
    %v2886 = vsel %vm520, %v2752, -inf
    %2887 = vmax.xlane.f32.xlu0 %v2886
    %v2888 = vpop.xlane.xlu0 %2887
    %v2889 = vsel %vm520, %v2753, -inf
    %2890 = vmax.xlane.f32.xlu0 %v2889
    %v2891 = vpop.xlane.xlu0 %2890
    %v2892 = vsel %vm520, %v2754, -inf
    %2893 = vmax.xlane.f32.xlu0 %v2892
    %v2894 = vpop.xlane.xlu0 %2893
    %v2895 = vsel %vm520, %v2755, -inf
    %2896 = vmax.xlane.f32.xlu0 %v2895
    %v2897 = vpop.xlane.xlu0 %2896
    %v2898 = vsel %vm520, %v2756, -inf
    %2899 = vmax.xlane.f32.xlu0 %v2898
    %v2900 = vpop.xlane.xlu0 %2899
    %v2901 = vsel %vm520, %v2757, -inf
    %2902 = vmax.xlane.f32.xlu0 %v2901
    %v2903 = vpop.xlane.xlu0 %2902
    %v2904 = vsel %vm520, %v2758, -inf
    %2905 = vmax.xlane.f32.xlu0 %v2904
    %v2906 = vpop.xlane.xlu0 %2905
    %v2907 = vsel %vm520, %v2759, -inf
    %2908 = vmax.xlane.f32.xlu0 %v2907
    %v2909 = vpop.xlane.xlu0 %2908
    %v2910 = vsel %vm520, %v2760, -inf
    %2911 = vmax.xlane.f32.xlu0 %v2910
    %v2912 = vpop.xlane.xlu0 %2911
    %v2913 = vsel %vm520, %v2761, -inf
    %2914 = vmax.xlane.f32.xlu0 %v2913
    %v2915 = vpop.xlane.xlu0 %2914
    %v2916 = vsel %vm520, %v2762, -inf
    %2917 = vmax.xlane.f32.xlu0 %v2916
    %v2918 = vpop.xlane.xlu0 %2917
    %v2919 = vsel %vm520, %v2763, -inf
    %2920 = vmax.xlane.f32.xlu0 %v2919
    %v2921 = vpop.xlane.xlu0 %2920
    %v2922 = vsel %vm520, %v2764, -inf
    %2923 = vmax.xlane.f32.xlu0 %v2922
    %v2924 = vpop.xlane.xlu0 %2923
    %v2925 = vsel %vm520, %v2765, -inf
    %2926 = vmax.xlane.f32.xlu0 %v2925
    %v2927 = vpop.xlane.xlu0 %2926
    %v2928 = vsel %vm520, %v2766, -inf
    %2929 = vmax.xlane.f32.xlu0 %v2928
    %v2930 = vpop.xlane.xlu0 %2929
    %v2931 = vsel %vm520, %v2767, -inf
    %2932 = vmax.xlane.f32.xlu0 %v2931
    %v2933 = vpop.xlane.xlu0 %2932
    %v2934 = vsel %vm520, %v2768, -inf
    %2935 = vmax.xlane.f32.xlu0 %v2934
    %v2936 = vpop.xlane.xlu0 %2935
    %v2937 = vsel %vm520, %v2769, -inf
    %2938 = vmax.xlane.f32.xlu0 %v2937
    %v2939 = vpop.xlane.xlu0 %2938
    %v2940 = vsel %vm520, %v2770, -inf
    %2941 = vmax.xlane.f32.xlu0 %v2940
    %v2942 = vpop.xlane.xlu0 %2941
    %v2943 = vsel %vm520, %v2771, -inf
    %2944 = vmax.xlane.f32.xlu0 %v2943
    %v2945 = vpop.xlane.xlu0 %2944
    %v2946 = vsel %vm520, %v2772, -inf
    %2947 = vmax.xlane.f32.xlu0 %v2946
    %v2948 = vpop.xlane.xlu0 %2947
    %v2949 = vsel %vm520, %v2773, -inf
    %2950 = vmax.xlane.f32.xlu0 %v2949
    %v2951 = vpop.xlane.xlu0 %2950
    %v2952 = vsel %vm520, %v2774, -inf
    %2953 = vmax.xlane.f32.xlu0 %v2952
    %v2954 = vpop.xlane.xlu0 %2953
    %v2955 = vsel %vm520, %v2775, -inf
    %2956 = vmax.xlane.f32.xlu0 %v2955
    %v2957 = vpop.xlane.xlu0 %2956
    %v2958 = vsel %vm520, %v2776, -inf
    %2959 = vmax.xlane.f32.xlu0 %v2958
    %v2960 = vpop.xlane.xlu0 %2959
    %v2961 = vsel %vm520, %v2777, -inf
    %2962 = vmax.xlane.f32.xlu0 %v2961
    %v2963 = vpop.xlane.xlu0 %2962
    %v2964 = vsel %vm520, %v2778, -inf
    %2965 = vmax.xlane.f32.xlu0 %v2964
    %v2966 = vpop.xlane.xlu0 %2965
    %v2967 = vsel %vm520, %v2779, -inf
    %2968 = vmax.xlane.f32.xlu0 %v2967
    %v2969 = vpop.xlane.xlu0 %2968
    %v2970 = vsel %vm520, %v2780, -inf
    %2971 = vmax.xlane.f32.xlu0 %v2970
    %v2972 = vpop.xlane.xlu0 %2971
    %v2973 = vsub.f32 %v2717, %v2783
    %v2974 = vsub.f32 %v2718, %v2786
    %v2975 = vsub.f32 %v2719, %v2789
    %v2976 = vsub.f32 %v2720, %v2792
    %v2977 = vsub.f32 %v2721, %v2795
    %v2978 = vsub.f32 %v2722, %v2798
    %v2979 = vsub.f32 %v2723, %v2801
    %v2980 = vsub.f32 %v2724, %v2804
    %v2981 = vsub.f32 %v2725, %v2807
    %v2982 = vsub.f32 %v2726, %v2810
    %v2983 = vsub.f32 %v2727, %v2813
    %v2984 = vsub.f32 %v2728, %v2816
    %v2985 = vsub.f32 %v2729, %v2819
    %v2986 = vsub.f32 %v2730, %v2822
    %v2987 = vsub.f32 %v2731, %v2825
    %v2988 = vsub.f32 %v2732, %v2828
    %v2989 = vsub.f32 %v2733, %v2831
    %v2990 = vsub.f32 %v2734, %v2834
    %v2991 = vsub.f32 %v2735, %v2837
    %v2992 = vsub.f32 %v2736, %v2840
    %v2993 = vsub.f32 %v2737, %v2843
    %v2994 = vsub.f32 %v2738, %v2846
    %v2995 = vsub.f32 %v2739, %v2849
    %v2996 = vsub.f32 %v2740, %v2852
    %v2997 = vsub.f32 %v2741, %v2855
    %v2998 = vsub.f32 %v2742, %v2858
    %v2999 = vsub.f32 %v2743, %v2861
    %v3000 = vsub.f32 %v2744, %v2864
    %v3001 = vsub.f32 %v2745, %v2867
    %v3002 = vsub.f32 %v2746, %v2870
    %v3003 = vsub.f32 %v2747, %v2873
    %v3004 = vsub.f32 %v2748, %v2876
    %v3005 = vsub.f32 %v2749, %v2879
    %v3006 = vsub.f32 %v2750, %v2882
    %v3007 = vsub.f32 %v2751, %v2885
    %v3008 = vsub.f32 %v2752, %v2888
    %v3009 = vsub.f32 %v2753, %v2891
    %v3010 = vsub.f32 %v2754, %v2894
    %v3011 = vsub.f32 %v2755, %v2897
    %v3012 = vsub.f32 %v2756, %v2900
    %v3013 = vsub.f32 %v2757, %v2903
    %v3014 = vsub.f32 %v2758, %v2906
    %v3015 = vsub.f32 %v2759, %v2909
    %v3016 = vsub.f32 %v2760, %v2912
    %v3017 = vsub.f32 %v2761, %v2915
    %v3018 = vsub.f32 %v2762, %v2918
    %v3019 = vsub.f32 %v2763, %v2921
    %v3020 = vsub.f32 %v2764, %v2924
    %v3021 = vsub.f32 %v2765, %v2927
    %v3022 = vsub.f32 %v2766, %v2930
    %v3023 = vsub.f32 %v2767, %v2933
    %v3024 = vsub.f32 %v2768, %v2936
    %v3025 = vsub.f32 %v2769, %v2939
    %v3026 = vsub.f32 %v2770, %v2942
    %v3027 = vsub.f32 %v2771, %v2945
    %v3028 = vsub.f32 %v2772, %v2948
    %v3029 = vsub.f32 %v2773, %v2951
    %v3030 = vsub.f32 %v2774, %v2954
    %v3031 = vsub.f32 %v2775, %v2957
    %v3032 = vsub.f32 %v2776, %v2960
    %v3033 = vsub.f32 %v2777, %v2963
    %v3034 = vsub.f32 %v2778, %v2966
    %v3035 = vsub.f32 %v2779, %v2969
    %v3036 = vsub.f32 %v2780, %v2972
    %v3037 = vmul.f32 %v2973, 1.442695
    %v3038 = vpow.pop %v3037
    %v3039 = vmul.f32 %v2974, 1.442695
    %v3040 = vpow.pop %v3039
    %v3041 = vmul.f32 %v2975, 1.442695
    %v3042 = vpow.pop %v3041
    %v3043 = vmul.f32 %v2976, 1.442695
    %v3044 = vpow.pop %v3043
    %v3045 = vmul.f32 %v2977, 1.442695
    %v3046 = vpow.pop %v3045
    %v3047 = vmul.f32 %v2978, 1.442695
    %v3048 = vpow.pop %v3047
    %v3049 = vmul.f32 %v2979, 1.442695
    %v3050 = vpow.pop %v3049
    %v3051 = vmul.f32 %v2980, 1.442695
    %v3052 = vpow.pop %v3051
    %v3053 = vmul.f32 %v2981, 1.442695
    %v3054 = vpow.pop %v3053
    %v3055 = vmul.f32 %v2982, 1.442695
    %v3056 = vpow.pop %v3055
    %v3057 = vmul.f32 %v2983, 1.442695
    %v3058 = vpow.pop %v3057
    %v3059 = vmul.f32 %v2984, 1.442695
    %v3060 = vpow.pop %v3059
    %v3061 = vmul.f32 %v2985, 1.442695
    %v3062 = vpow.pop %v3061
    %v3063 = vmul.f32 %v2986, 1.442695
    %v3064 = vpow.pop %v3063
    %v3065 = vmul.f32 %v2987, 1.442695
    %v3066 = vpow.pop %v3065
    %v3067 = vmul.f32 %v2988, 1.442695
    %v3068 = vpow.pop %v3067
    %v3069 = vmul.f32 %v2989, 1.442695
    %v3070 = vpow.pop %v3069
    %v3071 = vmul.f32 %v2990, 1.442695
    %v3072 = vpow.pop %v3071
    %v3073 = vmul.f32 %v2991, 1.442695
    %v3074 = vpow.pop %v3073
    %v3075 = vmul.f32 %v2992, 1.442695
    %v3076 = vpow.pop %v3075
    %v3077 = vmul.f32 %v2993, 1.442695
    %v3078 = vpow.pop %v3077
    %v3079 = vmul.f32 %v2994, 1.442695
    %v3080 = vpow.pop %v3079
    %v3081 = vmul.f32 %v2995, 1.442695
    %v3082 = vpow.pop %v3081
    %v3083 = vmul.f32 %v2996, 1.442695
    %v3084 = vpow.pop %v3083
    %v3085 = vmul.f32 %v2997, 1.442695
    %v3086 = vpow.pop %v3085
    %v3087 = vmul.f32 %v2998, 1.442695
    %v3088 = vpow.pop %v3087
    %v3089 = vmul.f32 %v2999, 1.442695
    %v3090 = vpow.pop %v3089
    %v3091 = vmul.f32 %v3000, 1.442695
    %v3092 = vpow.pop %v3091
    %v3093 = vmul.f32 %v3001, 1.442695
    %v3094 = vpow.pop %v3093
    %v3095 = vmul.f32 %v3002, 1.442695
    %v3096 = vpow.pop %v3095
    %v3097 = vmul.f32 %v3003, 1.442695
    %v3098 = vpow.pop %v3097
    %v3099 = vmul.f32 %v3004, 1.442695
    %v3100 = vpow.pop %v3099
    %v3101 = vmul.f32 %v3005, 1.442695
    %v3102 = vpow.pop %v3101
    %v3103 = vmul.f32 %v3006, 1.442695
    %v3104 = vpow.pop %v3103
    %v3105 = vmul.f32 %v3007, 1.442695
    %v3106 = vpow.pop %v3105
    %v3107 = vmul.f32 %v3008, 1.442695
    %v3108 = vpow.pop %v3107
    %v3109 = vmul.f32 %v3009, 1.442695
    %v3110 = vpow.pop %v3109
    %v3111 = vmul.f32 %v3010, 1.442695
    %v3112 = vpow.pop %v3111
    %v3113 = vmul.f32 %v3011, 1.442695
    %v3114 = vpow.pop %v3113
    %v3115 = vmul.f32 %v3012, 1.442695
    %v3116 = vpow.pop %v3115
    %v3117 = vmul.f32 %v3013, 1.442695
    %v3118 = vpow.pop %v3117
    %v3119 = vmul.f32 %v3014, 1.442695
    %v3120 = vpow.pop %v3119
    %v3121 = vmul.f32 %v3015, 1.442695
    %v3122 = vpow.pop %v3121
    %v3123 = vmul.f32 %v3016, 1.442695
    %v3124 = vpow.pop %v3123
    %v3125 = vmul.f32 %v3017, 1.442695
    %v3126 = vpow.pop %v3125
    %v3127 = vmul.f32 %v3018, 1.442695
    %v3128 = vpow.pop %v3127
    %v3129 = vmul.f32 %v3019, 1.442695
    %v3130 = vpow.pop %v3129
    %v3131 = vmul.f32 %v3020, 1.442695
    %v3132 = vpow.pop %v3131
    %v3133 = vmul.f32 %v3021, 1.442695
    %v3134 = vpow.pop %v3133
    %v3135 = vmul.f32 %v3022, 1.442695
    %v3136 = vpow.pop %v3135
    %v3137 = vmul.f32 %v3023, 1.442695
    %v3138 = vpow.pop %v3137
    %v3139 = vmul.f32 %v3024, 1.442695
    %v3140 = vpow.pop %v3139
    %v3141 = vmul.f32 %v3025, 1.442695
    %v3142 = vpow.pop %v3141
    %v3143 = vmul.f32 %v3026, 1.442695
    %v3144 = vpow.pop %v3143
    %v3145 = vmul.f32 %v3027, 1.442695
    %v3146 = vpow.pop %v3145
    %v3147 = vmul.f32 %v3028, 1.442695
    %v3148 = vpow.pop %v3147
    %v3149 = vmul.f32 %v3029, 1.442695
    %v3150 = vpow.pop %v3149
    %v3151 = vmul.f32 %v3030, 1.442695
    %v3152 = vpow.pop %v3151
    %v3153 = vmul.f32 %v3031, 1.442695
    %v3154 = vpow.pop %v3153
    %v3155 = vmul.f32 %v3032, 1.442695
    %v3156 = vpow.pop %v3155
    %v3157 = vmul.f32 %v3033, 1.442695
    %v3158 = vpow.pop %v3157
    %v3159 = vmul.f32 %v3034, 1.442695
    %v3160 = vpow.pop %v3159
    %v3161 = vmul.f32 %v3035, 1.442695
    %v3162 = vpow.pop %v3161
    %v3163 = vmul.f32 %v3036, 1.442695
    %v3164 = vpow.pop %v3163
    %v3165 = vsel %vm520, %v3038, 0.0
    %3166 = vadd.xlane.f32.xlu0 %v3165
    %v3167 = vpop.xlane.xlu0 %3166
    %v3168 = vsel %vm520, %v3040, 0.0
    %3169 = vadd.xlane.f32.xlu0 %v3168
    %v3170 = vpop.xlane.xlu0 %3169
    %v3171 = vsel %vm520, %v3042, 0.0
    %3172 = vadd.xlane.f32.xlu0 %v3171
    %v3173 = vpop.xlane.xlu0 %3172
    %v3174 = vsel %vm520, %v3044, 0.0
    %3175 = vadd.xlane.f32.xlu0 %v3174
    %v3176 = vpop.xlane.xlu0 %3175
    %v3177 = vsel %vm520, %v3046, 0.0
    %3178 = vadd.xlane.f32.xlu0 %v3177
    %v3179 = vpop.xlane.xlu0 %3178
    %v3180 = vsel %vm520, %v3048, 0.0
    %3181 = vadd.xlane.f32.xlu0 %v3180
    %v3182 = vpop.xlane.xlu0 %3181
    %v3183 = vsel %vm520, %v3050, 0.0
    %3184 = vadd.xlane.f32.xlu0 %v3183
    %v3185 = vpop.xlane.xlu0 %3184
    %v3186 = vsel %vm520, %v3052, 0.0
    %3187 = vadd.xlane.f32.xlu0 %v3186
    %v3188 = vpop.xlane.xlu0 %3187
    %v3189 = vsel %vm520, %v3054, 0.0
    %3190 = vadd.xlane.f32.xlu0 %v3189
    %v3191 = vpop.xlane.xlu0 %3190
    %v3192 = vsel %vm520, %v3056, 0.0
    %3193 = vadd.xlane.f32.xlu0 %v3192
    %v3194 = vpop.xlane.xlu0 %3193
    %v3195 = vsel %vm520, %v3058, 0.0
    %3196 = vadd.xlane.f32.xlu0 %v3195
    %v3197 = vpop.xlane.xlu0 %3196
    %v3198 = vsel %vm520, %v3060, 0.0
    %3199 = vadd.xlane.f32.xlu0 %v3198
    %v3200 = vpop.xlane.xlu0 %3199
    %v3201 = vsel %vm520, %v3062, 0.0
    %3202 = vadd.xlane.f32.xlu0 %v3201
    %v3203 = vpop.xlane.xlu0 %3202
    %v3204 = vsel %vm520, %v3064, 0.0
    %3205 = vadd.xlane.f32.xlu0 %v3204
    %v3206 = vpop.xlane.xlu0 %3205
    %v3207 = vsel %vm520, %v3066, 0.0
    %3208 = vadd.xlane.f32.xlu0 %v3207
    %v3209 = vpop.xlane.xlu0 %3208
    %v3210 = vsel %vm520, %v3068, 0.0
    %3211 = vadd.xlane.f32.xlu0 %v3210
    %v3212 = vpop.xlane.xlu0 %3211
    %v3213 = vsel %vm520, %v3070, 0.0
    %3214 = vadd.xlane.f32.xlu0 %v3213
    %v3215 = vpop.xlane.xlu0 %3214
    %v3216 = vsel %vm520, %v3072, 0.0
    %3217 = vadd.xlane.f32.xlu0 %v3216
    %v3218 = vpop.xlane.xlu0 %3217
    %v3219 = vsel %vm520, %v3074, 0.0
    %3220 = vadd.xlane.f32.xlu0 %v3219
    %v3221 = vpop.xlane.xlu0 %3220
    %v3222 = vsel %vm520, %v3076, 0.0
    %3223 = vadd.xlane.f32.xlu0 %v3222
    %v3224 = vpop.xlane.xlu0 %3223
    %v3225 = vsel %vm520, %v3078, 0.0
    %3226 = vadd.xlane.f32.xlu0 %v3225
    %v3227 = vpop.xlane.xlu0 %3226
    %v3228 = vsel %vm520, %v3080, 0.0
    %3229 = vadd.xlane.f32.xlu0 %v3228
    %v3230 = vpop.xlane.xlu0 %3229
    %v3231 = vsel %vm520, %v3082, 0.0
    %3232 = vadd.xlane.f32.xlu0 %v3231
    %v3233 = vpop.xlane.xlu0 %3232
    %v3234 = vsel %vm520, %v3084, 0.0
    %3235 = vadd.xlane.f32.xlu0 %v3234
    %v3236 = vpop.xlane.xlu0 %3235
    %v3237 = vsel %vm520, %v3086, 0.0
    %3238 = vadd.xlane.f32.xlu0 %v3237
    %v3239 = vpop.xlane.xlu0 %3238
    %v3240 = vsel %vm520, %v3088, 0.0
    %3241 = vadd.xlane.f32.xlu0 %v3240
    %v3242 = vpop.xlane.xlu0 %3241
    %v3243 = vsel %vm520, %v3090, 0.0
    %3244 = vadd.xlane.f32.xlu0 %v3243
    %v3245 = vpop.xlane.xlu0 %3244
    %v3246 = vsel %vm520, %v3092, 0.0
    %3247 = vadd.xlane.f32.xlu0 %v3246
    %v3248 = vpop.xlane.xlu0 %3247
    %v3249 = vsel %vm520, %v3094, 0.0
    %3250 = vadd.xlane.f32.xlu0 %v3249
    %v3251 = vpop.xlane.xlu0 %3250
    %v3252 = vsel %vm520, %v3096, 0.0
    %3253 = vadd.xlane.f32.xlu0 %v3252
    %v3254 = vpop.xlane.xlu0 %3253
    %v3255 = vsel %vm520, %v3098, 0.0
    %3256 = vadd.xlane.f32.xlu0 %v3255
    %v3257 = vpop.xlane.xlu0 %3256
    %v3258 = vsel %vm520, %v3100, 0.0
    %3259 = vadd.xlane.f32.xlu0 %v3258
    %v3260 = vpop.xlane.xlu0 %3259
    %v3261 = vsel %vm520, %v3102, 0.0
    %3262 = vadd.xlane.f32.xlu0 %v3261
    %v3263 = vpop.xlane.xlu0 %3262
    %v3264 = vsel %vm520, %v3104, 0.0
    %3265 = vadd.xlane.f32.xlu0 %v3264
    %v3266 = vpop.xlane.xlu0 %3265
    %v3267 = vsel %vm520, %v3106, 0.0
    %3268 = vadd.xlane.f32.xlu0 %v3267
    %v3269 = vpop.xlane.xlu0 %3268
    %v3270 = vsel %vm520, %v3108, 0.0
    %3271 = vadd.xlane.f32.xlu0 %v3270
    %v3272 = vpop.xlane.xlu0 %3271
    %v3273 = vsel %vm520, %v3110, 0.0
    %3274 = vadd.xlane.f32.xlu0 %v3273
    %v3275 = vpop.xlane.xlu0 %3274
    %v3276 = vsel %vm520, %v3112, 0.0
    %3277 = vadd.xlane.f32.xlu0 %v3276
    %v3278 = vpop.xlane.xlu0 %3277
    %v3279 = vsel %vm520, %v3114, 0.0
    %3280 = vadd.xlane.f32.xlu0 %v3279
    %v3281 = vpop.xlane.xlu0 %3280
    %v3282 = vsel %vm520, %v3116, 0.0
    %3283 = vadd.xlane.f32.xlu0 %v3282
    %v3284 = vpop.xlane.xlu0 %3283
    %v3285 = vsel %vm520, %v3118, 0.0
    %3286 = vadd.xlane.f32.xlu0 %v3285
    %v3287 = vpop.xlane.xlu0 %3286
    %v3288 = vsel %vm520, %v3120, 0.0
    %3289 = vadd.xlane.f32.xlu0 %v3288
    %v3290 = vpop.xlane.xlu0 %3289
    %v3291 = vsel %vm520, %v3122, 0.0
    %3292 = vadd.xlane.f32.xlu0 %v3291
    %v3293 = vpop.xlane.xlu0 %3292
    %v3294 = vsel %vm520, %v3124, 0.0
    %3295 = vadd.xlane.f32.xlu0 %v3294
    %v3296 = vpop.xlane.xlu0 %3295
    %v3297 = vsel %vm520, %v3126, 0.0
    %3298 = vadd.xlane.f32.xlu0 %v3297
    %v3299 = vpop.xlane.xlu0 %3298
    %v3300 = vsel %vm520, %v3128, 0.0
    %3301 = vadd.xlane.f32.xlu0 %v3300
    %v3302 = vpop.xlane.xlu0 %3301
    %v3303 = vsel %vm520, %v3130, 0.0
    %3304 = vadd.xlane.f32.xlu0 %v3303
    %v3305 = vpop.xlane.xlu0 %3304
    %v3306 = vsel %vm520, %v3132, 0.0
    %3307 = vadd.xlane.f32.xlu0 %v3306
    %v3308 = vpop.xlane.xlu0 %3307
    %v3309 = vsel %vm520, %v3134, 0.0
    %3310 = vadd.xlane.f32.xlu0 %v3309
    %v3311 = vpop.xlane.xlu0 %3310
    %v3312 = vsel %vm520, %v3136, 0.0
    %3313 = vadd.xlane.f32.xlu0 %v3312
    %v3314 = vpop.xlane.xlu0 %3313
    %v3315 = vsel %vm520, %v3138, 0.0
    %3316 = vadd.xlane.f32.xlu0 %v3315
    %v3317 = vpop.xlane.xlu0 %3316
    %v3318 = vsel %vm520, %v3140, 0.0
    %3319 = vadd.xlane.f32.xlu0 %v3318
    %v3320 = vpop.xlane.xlu0 %3319
    %v3321 = vsel %vm520, %v3142, 0.0
    %3322 = vadd.xlane.f32.xlu0 %v3321
    %v3323 = vpop.xlane.xlu0 %3322
    %v3324 = vsel %vm520, %v3144, 0.0
    %3325 = vadd.xlane.f32.xlu0 %v3324
    %v3326 = vpop.xlane.xlu0 %3325
    %v3327 = vsel %vm520, %v3146, 0.0
    %3328 = vadd.xlane.f32.xlu0 %v3327
    %v3329 = vpop.xlane.xlu0 %3328
    %v3330 = vsel %vm520, %v3148, 0.0
    %3331 = vadd.xlane.f32.xlu0 %v3330
    %v3332 = vpop.xlane.xlu0 %3331
    %v3333 = vsel %vm520, %v3150, 0.0
    %3334 = vadd.xlane.f32.xlu0 %v3333
    %v3335 = vpop.xlane.xlu0 %3334
    %v3336 = vsel %vm520, %v3152, 0.0
    %3337 = vadd.xlane.f32.xlu0 %v3336
    %v3338 = vpop.xlane.xlu0 %3337
    %v3339 = vsel %vm520, %v3154, 0.0
    %3340 = vadd.xlane.f32.xlu0 %v3339
    %v3341 = vpop.xlane.xlu0 %3340
    %v3342 = vsel %vm520, %v3156, 0.0
    %3343 = vadd.xlane.f32.xlu0 %v3342
    %v3344 = vpop.xlane.xlu0 %3343
    %v3345 = vsel %vm520, %v3158, 0.0
    %3346 = vadd.xlane.f32.xlu0 %v3345
    %v3347 = vpop.xlane.xlu0 %3346
    %v3348 = vsel %vm520, %v3160, 0.0
    %3349 = vadd.xlane.f32.xlu0 %v3348
    %v3350 = vpop.xlane.xlu0 %3349
    %v3351 = vsel %vm520, %v3162, 0.0
    %3352 = vadd.xlane.f32.xlu0 %v3351
    %v3353 = vpop.xlane.xlu0 %3352
    %v3354 = vsel %vm520, %v3164, 0.0
    %3355 = vadd.xlane.f32.xlu0 %v3354
    %v3356 = vpop.xlane.xlu0 %3355
    %v3357 = vrcp.pop %v3167
    %v3358 = vrcp.pop %v3170
    %v3359 = vrcp.pop %v3173
    %v3360 = vrcp.pop %v3176
    %v3361 = vrcp.pop %v3179
    %v3362 = vrcp.pop %v3182
    %v3363 = vrcp.pop %v3185
    %v3364 = vrcp.pop %v3188
    %v3365 = vrcp.pop %v3191
    %v3366 = vrcp.pop %v3194
    %v3367 = vrcp.pop %v3197
    %v3368 = vrcp.pop %v3200
    %v3369 = vrcp.pop %v3203
    %v3370 = vrcp.pop %v3206
    %v3371 = vrcp.pop %v3209
    %v3372 = vrcp.pop %v3212
    %v3373 = vrcp.pop %v3215
    %v3374 = vrcp.pop %v3218
    %v3375 = vrcp.pop %v3221
    %v3376 = vrcp.pop %v3224
    %v3377 = vrcp.pop %v3227
    %v3378 = vrcp.pop %v3230
    %v3379 = vrcp.pop %v3233
    %v3380 = vrcp.pop %v3236
    %v3381 = vrcp.pop %v3239
    %v3382 = vrcp.pop %v3242
    %v3383 = vrcp.pop %v3245
    %v3384 = vrcp.pop %v3248
    %v3385 = vrcp.pop %v3251
    %v3386 = vrcp.pop %v3254
    %v3387 = vrcp.pop %v3257
    %v3388 = vrcp.pop %v3260
    %v3389 = vrcp.pop %v3263
    %v3390 = vrcp.pop %v3266
    %v3391 = vrcp.pop %v3269
    %v3392 = vrcp.pop %v3272
    %v3393 = vrcp.pop %v3275
    %v3394 = vrcp.pop %v3278
    %v3395 = vrcp.pop %v3281
    %v3396 = vrcp.pop %v3284
    %v3397 = vrcp.pop %v3287
    %v3398 = vrcp.pop %v3290
    %v3399 = vrcp.pop %v3293
    %v3400 = vrcp.pop %v3296
    %v3401 = vrcp.pop %v3299
    %v3402 = vrcp.pop %v3302
    %v3403 = vrcp.pop %v3305
    %v3404 = vrcp.pop %v3308
    %v3405 = vrcp.pop %v3311
    %v3406 = vrcp.pop %v3314
    %v3407 = vrcp.pop %v3317
    %v3408 = vrcp.pop %v3320
    %v3409 = vrcp.pop %v3323
    %v3410 = vrcp.pop %v3326
    %v3411 = vrcp.pop %v3329
    %v3412 = vrcp.pop %v3332
    %v3413 = vrcp.pop %v3335
    %v3414 = vrcp.pop %v3338
    %v3415 = vrcp.pop %v3341
    %v3416 = vrcp.pop %v3344
    %v3417 = vrcp.pop %v3347
    %v3418 = vrcp.pop %v3350
    %v3419 = vrcp.pop %v3353
    %v3420 = vrcp.pop %v3356
    %v3421 = vmul.f32 %v3038, %v3357
    %v3422 = vmul.f32 %v3040, %v3358
    %v3423 = vmul.f32 %v3042, %v3359
    %v3424 = vmul.f32 %v3044, %v3360
    %v3425 = vmul.f32 %v3046, %v3361
    %v3426 = vmul.f32 %v3048, %v3362
    %v3427 = vmul.f32 %v3050, %v3363
    %v3428 = vmul.f32 %v3052, %v3364
    %v3429 = vmul.f32 %v3054, %v3365
    %v3430 = vmul.f32 %v3056, %v3366
    %v3431 = vmul.f32 %v3058, %v3367
    %v3432 = vmul.f32 %v3060, %v3368
    %v3433 = vmul.f32 %v3062, %v3369
    %v3434 = vmul.f32 %v3064, %v3370
    %v3435 = vmul.f32 %v3066, %v3371
    %v3436 = vmul.f32 %v3068, %v3372
    %v3437 = vmul.f32 %v3070, %v3373
    %v3438 = vmul.f32 %v3072, %v3374
    %v3439 = vmul.f32 %v3074, %v3375
    %v3440 = vmul.f32 %v3076, %v3376
    %v3441 = vmul.f32 %v3078, %v3377
    %v3442 = vmul.f32 %v3080, %v3378
    %v3443 = vmul.f32 %v3082, %v3379
    %v3444 = vmul.f32 %v3084, %v3380
    %v3445 = vmul.f32 %v3086, %v3381
    %v3446 = vmul.f32 %v3088, %v3382
    %v3447 = vmul.f32 %v3090, %v3383
    %v3448 = vmul.f32 %v3092, %v3384
    %v3449 = vmul.f32 %v3094, %v3385
    %v3450 = vmul.f32 %v3096, %v3386
    %v3451 = vmul.f32 %v3098, %v3387
    %v3452 = vmul.f32 %v3100, %v3388
    %v3453 = vmul.f32 %v3102, %v3389
    %v3454 = vmul.f32 %v3104, %v3390
    %v3455 = vmul.f32 %v3106, %v3391
    %v3456 = vmul.f32 %v3108, %v3392
    %v3457 = vmul.f32 %v3110, %v3393
    %v3458 = vmul.f32 %v3112, %v3394
    %v3459 = vmul.f32 %v3114, %v3395
    %v3460 = vmul.f32 %v3116, %v3396
    %v3461 = vmul.f32 %v3118, %v3397
    %v3462 = vmul.f32 %v3120, %v3398
    %v3463 = vmul.f32 %v3122, %v3399
    %v3464 = vmul.f32 %v3124, %v3400
    %v3465 = vmul.f32 %v3126, %v3401
    %v3466 = vmul.f32 %v3128, %v3402
    %v3467 = vmul.f32 %v3130, %v3403
    %v3468 = vmul.f32 %v3132, %v3404
    %v3469 = vmul.f32 %v3134, %v3405
    %v3470 = vmul.f32 %v3136, %v3406
    %v3471 = vmul.f32 %v3138, %v3407
    %v3472 = vmul.f32 %v3140, %v3408
    %v3473 = vmul.f32 %v3142, %v3409
    %v3474 = vmul.f32 %v3144, %v3410
    %v3475 = vmul.f32 %v3146, %v3411
    %v3476 = vmul.f32 %v3148, %v3412
    %v3477 = vmul.f32 %v3150, %v3413
    %v3478 = vmul.f32 %v3152, %v3414
    %v3479 = vmul.f32 %v3154, %v3415
    %v3480 = vmul.f32 %v3156, %v3416
    %v3481 = vmul.f32 %v3158, %v3417
    %v3482 = vmul.f32 %v3160, %v3418
    %v3483 = vmul.f32 %v3162, %v3419
    %v3484 = vmul.f32 %v3164, %v3420
    %v3485 = vpack.c.bf16 %v3421, %v3421
    %v3486 = vpack.c.bf16 %v3422, %v3422
    %v3487 = vpack.c.bf16 %v3423, %v3423
    %v3488 = vpack.c.bf16 %v3424, %v3424
    %v3489 = vpack.c.bf16 %v3425, %v3425
    %v3490 = vpack.c.bf16 %v3426, %v3426
    %v3491 = vpack.c.bf16 %v3427, %v3427
    %v3492 = vpack.c.bf16 %v3428, %v3428
    %v3493 = vpack.c.bf16 %v3429, %v3429
    %v3494 = vpack.c.bf16 %v3430, %v3430
    %v3495 = vpack.c.bf16 %v3431, %v3431
    %v3496 = vpack.c.bf16 %v3432, %v3432
    %v3497 = vpack.c.bf16 %v3433, %v3433
    %v3498 = vpack.c.bf16 %v3434, %v3434
    %v3499 = vpack.c.bf16 %v3435, %v3435
    %v3500 = vpack.c.bf16 %v3436, %v3436
    %v3501 = vpack.c.bf16 %v3437, %v3437
    %v3502 = vpack.c.bf16 %v3438, %v3438
    %v3503 = vpack.c.bf16 %v3439, %v3439
    %v3504 = vpack.c.bf16 %v3440, %v3440
    %v3505 = vpack.c.bf16 %v3441, %v3441
    %v3506 = vpack.c.bf16 %v3442, %v3442
    %v3507 = vpack.c.bf16 %v3443, %v3443
    %v3508 = vpack.c.bf16 %v3444, %v3444
    %v3509 = vpack.c.bf16 %v3445, %v3445
    %v3510 = vpack.c.bf16 %v3446, %v3446
    %v3511 = vpack.c.bf16 %v3447, %v3447
    %v3512 = vpack.c.bf16 %v3448, %v3448
    %v3513 = vpack.c.bf16 %v3449, %v3449
    %v3514 = vpack.c.bf16 %v3450, %v3450
    %v3515 = vpack.c.bf16 %v3451, %v3451
    %v3516 = vpack.c.bf16 %v3452, %v3452
    %v3517 = vpack.c.bf16 %v3453, %v3453
    %v3518 = vpack.c.bf16 %v3454, %v3454
    %v3519 = vpack.c.bf16 %v3455, %v3455
    %v3520 = vpack.c.bf16 %v3456, %v3456
    %v3521 = vpack.c.bf16 %v3457, %v3457
    %v3522 = vpack.c.bf16 %v3458, %v3458
    %v3523 = vpack.c.bf16 %v3459, %v3459
    %v3524 = vpack.c.bf16 %v3460, %v3460
    %v3525 = vpack.c.bf16 %v3461, %v3461
    %v3526 = vpack.c.bf16 %v3462, %v3462
    %v3527 = vpack.c.bf16 %v3463, %v3463
    %v3528 = vpack.c.bf16 %v3464, %v3464
    %v3529 = vpack.c.bf16 %v3465, %v3465
    %v3530 = vpack.c.bf16 %v3466, %v3466
    %v3531 = vpack.c.bf16 %v3467, %v3467
    %v3532 = vpack.c.bf16 %v3468, %v3468
    %v3533 = vpack.c.bf16 %v3469, %v3469
    %v3534 = vpack.c.bf16 %v3470, %v3470
    %v3535 = vpack.c.bf16 %v3471, %v3471
    %v3536 = vpack.c.bf16 %v3472, %v3472
    %v3537 = vpack.c.bf16 %v3473, %v3473
    %v3538 = vpack.c.bf16 %v3474, %v3474
    %v3539 = vpack.c.bf16 %v3475, %v3475
    %v3540 = vpack.c.bf16 %v3476, %v3476
    %v3541 = vpack.c.bf16 %v3477, %v3477
    %v3542 = vpack.c.bf16 %v3478, %v3478
    %v3543 = vpack.c.bf16 %v3479, %v3479
    %v3544 = vpack.c.bf16 %v3480, %v3480
    %v3545 = vpack.c.bf16 %v3481, %v3481
    %v3546 = vpack.c.bf16 %v3482, %v3482
    %v3547 = vpack.c.bf16 %v3483, %v3483
    %v3548 = vpack.c.bf16 %v3484, %v3484
    %v3549 = vpack.c.bf16 %v2213, %v2213
    %v3550 = vpack.c.bf16 %v2215, %v2215
    %v3583 = vunpack.c.l.b16 %v3485
    %v3584 = vunpack.c.l.b16 %v3486
    %v3585 = vunpack.c.l.b16 %v3487
    %v3586 = vunpack.c.l.b16 %v3488
    %v3587 = vunpack.c.l.b16 %v3489
    %v3588 = vunpack.c.l.b16 %v3490
    %v3589 = vunpack.c.l.b16 %v3491
    %v3590 = vunpack.c.l.b16 %v3492
    %v3591 = vunpack.c.l.b16 %v3493
    %v3592 = vunpack.c.l.b16 %v3494
    %v3593 = vunpack.c.l.b16 %v3495
    %v3594 = vunpack.c.l.b16 %v3496
    %v3595 = vunpack.c.l.b16 %v3497
    %v3596 = vunpack.c.l.b16 %v3498
    %v3597 = vunpack.c.l.b16 %v3499
    %v3598 = vunpack.c.l.b16 %v3500
    %v3599 = vunpack.c.l.b16 %v3501
    %v3600 = vunpack.c.l.b16 %v3502
    %v3601 = vunpack.c.l.b16 %v3503
    %v3602 = vunpack.c.l.b16 %v3504
    %v3603 = vunpack.c.l.b16 %v3505
    %v3604 = vunpack.c.l.b16 %v3506
    %v3605 = vunpack.c.l.b16 %v3507
    %v3606 = vunpack.c.l.b16 %v3508
    %v3607 = vunpack.c.l.b16 %v3509
    %v3608 = vunpack.c.l.b16 %v3510
    %v3609 = vunpack.c.l.b16 %v3511
    %v3610 = vunpack.c.l.b16 %v3512
    %v3611 = vunpack.c.l.b16 %v3513
    %v3612 = vunpack.c.l.b16 %v3514
    %v3613 = vunpack.c.l.b16 %v3515
    %v3614 = vunpack.c.l.b16 %v3516
    %v3615 = vpack.c.b16 %v3584, %v3583
    %v3616 = vpack.c.b16 %v3586, %v3585
    %v3617 = vpack.c.b16 %v3588, %v3587
    %v3618 = vpack.c.b16 %v3590, %v3589
    %v3619 = vpack.c.b16 %v3592, %v3591
    %v3620 = vpack.c.b16 %v3594, %v3593
    %v3621 = vpack.c.b16 %v3596, %v3595
    %v3622 = vpack.c.b16 %v3598, %v3597
    %v3623 = vpack.c.b16 %v3600, %v3599
    %v3624 = vpack.c.b16 %v3602, %v3601
    %v3625 = vpack.c.b16 %v3604, %v3603
    %v3626 = vpack.c.b16 %v3606, %v3605
    %v3627 = vpack.c.b16 %v3608, %v3607
    %v3628 = vpack.c.b16 %v3610, %v3609
    %v3629 = vpack.c.b16 %v3612, %v3611
    %v3630 = vpack.c.b16 %v3614, %v3613
    %v3632 = vsel %vm520, %v3615, 0
    %v3635 = vsel %vm520, %v3616, 0
    %v3638 = vsel %vm520, %v3617, 0
    %v3641 = vsel %vm520, %v3618, 0
    %v3644 = vsel %vm520, %v3619, 0
    %v3647 = vsel %vm520, %v3620, 0
    %v3650 = vsel %vm520, %v3621, 0
    %v3653 = vsel %vm520, %v3622, 0
    %v3656 = vsel %vm520, %v3623, 0
    %v3659 = vsel %vm520, %v3624, 0
    %v3662 = vsel %vm520, %v3625, 0
    %v3665 = vsel %vm520, %v3626, 0
    %v3668 = vsel %vm520, %v3627, 0
    %v3671 = vsel %vm520, %v3628, 0
    %v3674 = vsel %vm520, %v3629, 0
    %v3677 = vsel %vm520, %v3630, 0
    %v3680 = vsel %vm635, %v3549, 0
    %3682 = vmatpush.bf16.msra.mxu0 0
    %3683 = vmatpush.bf16.msra.mxu0 0
    %3684 = vmatpush.bf16.msra.mxu0 0
    %3685 = vmatpush.bf16.msra.mxu0 0
    %3686 = vmatpush.bf16.msra.mxu0 0
    %3687 = vmatpush.bf16.msra.mxu0 0
    %3688 = vmatpush.bf16.msra.mxu0 0
    %3689 = vmatpush.bf16.msra.mxu0 %v3680
    %3690 = vmatmul.bf16.gmra.mxu0 %v3632
    %v3691 = vpop.f32.mrf.mxu0
    %v3692 = vadd.f32 0.0, %v3691
    %v3693 = vpop.f32.mrf.mxu0
    %v3694 = vadd.f32 0.0, %v3693
    %3695 = vmatmul.bf16.gmra.mxu0 %v3635
    %v3696 = vpop.f32.mrf.mxu0
    %v3697 = vadd.f32 0.0, %v3696
    %v3698 = vpop.f32.mrf.mxu0
    %v3699 = vadd.f32 0.0, %v3698
    %3700 = vmatmul.bf16.gmra.mxu0 %v3638
    %v3701 = vpop.f32.mrf.mxu0
    %v3702 = vadd.f32 0.0, %v3701
    %v3703 = vpop.f32.mrf.mxu0
    %v3704 = vadd.f32 0.0, %v3703
    %3705 = vmatmul.bf16.gmra.mxu0 %v3641
    %v3706 = vpop.f32.mrf.mxu0
    %v3707 = vadd.f32 0.0, %v3706
    %v3708 = vpop.f32.mrf.mxu0
    %v3709 = vadd.f32 0.0, %v3708
    %3710 = vmatmul.bf16.gmra.mxu0 %v3644
    %v3711 = vpop.f32.mrf.mxu0
    %v3712 = vadd.f32 0.0, %v3711
    %v3713 = vpop.f32.mrf.mxu0
    %v3714 = vadd.f32 0.0, %v3713
    %3715 = vmatmul.bf16.gmra.mxu0 %v3647
    %v3716 = vpop.f32.mrf.mxu0
    %v3717 = vadd.f32 0.0, %v3716
    %v3718 = vpop.f32.mrf.mxu0
    %v3719 = vadd.f32 0.0, %v3718
    %3720 = vmatmul.bf16.gmra.mxu0 %v3650
    %v3721 = vpop.f32.mrf.mxu0
    %v3722 = vadd.f32 0.0, %v3721
    %v3723 = vpop.f32.mrf.mxu0
    %v3724 = vadd.f32 0.0, %v3723
    %3725 = vmatmul.bf16.gmra.mxu0 %v3653
    %v3726 = vpop.f32.mrf.mxu0
    %v3727 = vadd.f32 0.0, %v3726
    %v3728 = vpop.f32.mrf.mxu0
    %v3729 = vadd.f32 0.0, %v3728
    %3730 = vmatmul.bf16.gmra.mxu0 %v3656
    %v3731 = vpop.f32.mrf.mxu0
    %v3732 = vadd.f32 0.0, %v3731
    %v3733 = vpop.f32.mrf.mxu0
    %v3734 = vadd.f32 0.0, %v3733
    %3735 = vmatmul.bf16.gmra.mxu0 %v3659
    %v3736 = vpop.f32.mrf.mxu0
    %v3737 = vadd.f32 0.0, %v3736
    %v3738 = vpop.f32.mrf.mxu0
    %v3739 = vadd.f32 0.0, %v3738
    %3740 = vmatmul.bf16.gmra.mxu0 %v3662
    %v3741 = vpop.f32.mrf.mxu0
    %v3742 = vadd.f32 0.0, %v3741
    %v3743 = vpop.f32.mrf.mxu0
    %v3744 = vadd.f32 0.0, %v3743
    %3745 = vmatmul.bf16.gmra.mxu0 %v3665
    %v3746 = vpop.f32.mrf.mxu0
    %v3747 = vadd.f32 0.0, %v3746
    %v3748 = vpop.f32.mrf.mxu0
    %v3749 = vadd.f32 0.0, %v3748
    %3750 = vmatmul.bf16.gmra.mxu0 %v3668
    %v3751 = vpop.f32.mrf.mxu0
    %v3752 = vadd.f32 0.0, %v3751
    %v3753 = vpop.f32.mrf.mxu0
    %v3754 = vadd.f32 0.0, %v3753
    %3755 = vmatmul.bf16.gmra.mxu0 %v3671
    %v3756 = vpop.f32.mrf.mxu0
    %v3757 = vadd.f32 0.0, %v3756
    %v3758 = vpop.f32.mrf.mxu0
    %v3759 = vadd.f32 0.0, %v3758
    %3760 = vmatmul.bf16.gmra.mxu0 %v3674
    %v3761 = vpop.f32.mrf.mxu0
    %v3762 = vadd.f32 0.0, %v3761
    %v3763 = vpop.f32.mrf.mxu0
    %v3764 = vadd.f32 0.0, %v3763
    %3765 = vmatmul.bf16.gmra.mxu0 %v3677
    %v3766 = vpop.f32.mrf.mxu0
    %v3767 = vadd.f32 0.0, %v3766
    %v3768 = vpop.f32.mrf.mxu0
    %v3769 = vadd.f32 0.0, %v3768
    %3770 = vdwg.mxu0
    %v3803 = vunpack.c.l.b16 %v3517
    %v3804 = vunpack.c.l.b16 %v3518
    %v3805 = vunpack.c.l.b16 %v3519
    %v3806 = vunpack.c.l.b16 %v3520
    %v3807 = vunpack.c.l.b16 %v3521
    %v3808 = vunpack.c.l.b16 %v3522
    %v3809 = vunpack.c.l.b16 %v3523
    %v3810 = vunpack.c.l.b16 %v3524
    %v3811 = vunpack.c.l.b16 %v3525
    %v3812 = vunpack.c.l.b16 %v3526
    %v3813 = vunpack.c.l.b16 %v3527
    %v3814 = vunpack.c.l.b16 %v3528
    %v3815 = vunpack.c.l.b16 %v3529
    %v3816 = vunpack.c.l.b16 %v3530
    %v3817 = vunpack.c.l.b16 %v3531
    %v3818 = vunpack.c.l.b16 %v3532
    %v3819 = vunpack.c.l.b16 %v3533
    %v3820 = vunpack.c.l.b16 %v3534
    %v3821 = vunpack.c.l.b16 %v3535
    %v3822 = vunpack.c.l.b16 %v3536
    %v3823 = vunpack.c.l.b16 %v3537
    %v3824 = vunpack.c.l.b16 %v3538
    %v3825 = vunpack.c.l.b16 %v3539
    %v3826 = vunpack.c.l.b16 %v3540
    %v3827 = vunpack.c.l.b16 %v3541
    %v3828 = vunpack.c.l.b16 %v3542
    %v3829 = vunpack.c.l.b16 %v3543
    %v3830 = vunpack.c.l.b16 %v3544
    %v3831 = vunpack.c.l.b16 %v3545
    %v3832 = vunpack.c.l.b16 %v3546
    %v3833 = vunpack.c.l.b16 %v3547
    %v3834 = vunpack.c.l.b16 %v3548
    %v3835 = vpack.c.b16 %v3804, %v3803
    %v3836 = vpack.c.b16 %v3806, %v3805
    %v3837 = vpack.c.b16 %v3808, %v3807
    %v3838 = vpack.c.b16 %v3810, %v3809
    %v3839 = vpack.c.b16 %v3812, %v3811
    %v3840 = vpack.c.b16 %v3814, %v3813
    %v3841 = vpack.c.b16 %v3816, %v3815
    %v3842 = vpack.c.b16 %v3818, %v3817
    %v3843 = vpack.c.b16 %v3820, %v3819
    %v3844 = vpack.c.b16 %v3822, %v3821
    %v3845 = vpack.c.b16 %v3824, %v3823
    %v3846 = vpack.c.b16 %v3826, %v3825
    %v3847 = vpack.c.b16 %v3828, %v3827
    %v3848 = vpack.c.b16 %v3830, %v3829
    %v3849 = vpack.c.b16 %v3832, %v3831
    %v3850 = vpack.c.b16 %v3834, %v3833
    %v3852 = vsel %vm520, %v3835, 0
    %v3855 = vsel %vm520, %v3836, 0
    %v3858 = vsel %vm520, %v3837, 0
    %v3861 = vsel %vm520, %v3838, 0
    %v3864 = vsel %vm520, %v3839, 0
    %v3867 = vsel %vm520, %v3840, 0
    %v3870 = vsel %vm520, %v3841, 0
    %v3873 = vsel %vm520, %v3842, 0
    %v3876 = vsel %vm520, %v3843, 0
    %v3879 = vsel %vm520, %v3844, 0
    %v3882 = vsel %vm520, %v3845, 0
    %v3885 = vsel %vm520, %v3846, 0
    %v3888 = vsel %vm520, %v3847, 0
    %v3891 = vsel %vm520, %v3848, 0
    %v3894 = vsel %vm520, %v3849, 0
    %v3897 = vsel %vm520, %v3850, 0
    %v3900 = vsel %vm635, %v3550, 0
    %3902 = vmatpush.bf16.msra.mxu0 0
    %3903 = vmatpush.bf16.msra.mxu0 0
    %3904 = vmatpush.bf16.msra.mxu0 0
    %3905 = vmatpush.bf16.msra.mxu0 0
    %3906 = vmatpush.bf16.msra.mxu0 0
    %3907 = vmatpush.bf16.msra.mxu0 0
    %3908 = vmatpush.bf16.msra.mxu0 0
    %3909 = vmatpush.bf16.msra.mxu0 %v3900
    %3910 = vmatmul.bf16.gmra.mxu0 %v3852
    %v3911 = vpop.f32.mrf.mxu0
    %v3912 = vadd.f32 0.0, %v3911
    %v3913 = vpop.f32.mrf.mxu0
    %v3914 = vadd.f32 0.0, %v3913
    %3915 = vmatmul.bf16.gmra.mxu0 %v3855
    %v3916 = vpop.f32.mrf.mxu0
    %v3917 = vadd.f32 0.0, %v3916
    %v3918 = vpop.f32.mrf.mxu0
    %v3919 = vadd.f32 0.0, %v3918
    %3920 = vmatmul.bf16.gmra.mxu0 %v3858
    %v3921 = vpop.f32.mrf.mxu0
    %v3922 = vadd.f32 0.0, %v3921
    %v3923 = vpop.f32.mrf.mxu0
    %v3924 = vadd.f32 0.0, %v3923
    %3925 = vmatmul.bf16.gmra.mxu0 %v3861
    %v3926 = vpop.f32.mrf.mxu0
    %v3927 = vadd.f32 0.0, %v3926
    %v3928 = vpop.f32.mrf.mxu0
    %v3929 = vadd.f32 0.0, %v3928
    %3930 = vmatmul.bf16.gmra.mxu0 %v3864
    %v3931 = vpop.f32.mrf.mxu0
    %v3932 = vadd.f32 0.0, %v3931
    %v3933 = vpop.f32.mrf.mxu0
    %v3934 = vadd.f32 0.0, %v3933
    %3935 = vmatmul.bf16.gmra.mxu0 %v3867
    %v3936 = vpop.f32.mrf.mxu0
    %v3937 = vadd.f32 0.0, %v3936
    %v3938 = vpop.f32.mrf.mxu0
    %v3939 = vadd.f32 0.0, %v3938
    %3940 = vmatmul.bf16.gmra.mxu0 %v3870
    %v3941 = vpop.f32.mrf.mxu0
    %v3942 = vadd.f32 0.0, %v3941
    %v3943 = vpop.f32.mrf.mxu0
    %v3944 = vadd.f32 0.0, %v3943
    %3945 = vmatmul.bf16.gmra.mxu0 %v3873
    %v3946 = vpop.f32.mrf.mxu0
    %v3947 = vadd.f32 0.0, %v3946
    %v3948 = vpop.f32.mrf.mxu0
    %v3949 = vadd.f32 0.0, %v3948
    %3950 = vmatmul.bf16.gmra.mxu0 %v3876
    %v3951 = vpop.f32.mrf.mxu0
    %v3952 = vadd.f32 0.0, %v3951
    %v3953 = vpop.f32.mrf.mxu0
    %v3954 = vadd.f32 0.0, %v3953
    %3955 = vmatmul.bf16.gmra.mxu0 %v3879
    %v3956 = vpop.f32.mrf.mxu0
    %v3957 = vadd.f32 0.0, %v3956
    %v3958 = vpop.f32.mrf.mxu0
    %v3959 = vadd.f32 0.0, %v3958
    %3960 = vmatmul.bf16.gmra.mxu0 %v3882
    %v3961 = vpop.f32.mrf.mxu0
    %v3962 = vadd.f32 0.0, %v3961
    %v3963 = vpop.f32.mrf.mxu0
    %v3964 = vadd.f32 0.0, %v3963
    %3965 = vmatmul.bf16.gmra.mxu0 %v3885
    %v3966 = vpop.f32.mrf.mxu0
    %v3967 = vadd.f32 0.0, %v3966
    %v3968 = vpop.f32.mrf.mxu0
    %v3969 = vadd.f32 0.0, %v3968
    %3970 = vmatmul.bf16.gmra.mxu0 %v3888
    %v3971 = vpop.f32.mrf.mxu0
    %v3972 = vadd.f32 0.0, %v3971
    %v3973 = vpop.f32.mrf.mxu0
    %v3974 = vadd.f32 0.0, %v3973
    %3975 = vmatmul.bf16.gmra.mxu0 %v3891
    %v3976 = vpop.f32.mrf.mxu0
    %v3977 = vadd.f32 0.0, %v3976
    %v3978 = vpop.f32.mrf.mxu0
    %v3979 = vadd.f32 0.0, %v3978
    %3980 = vmatmul.bf16.gmra.mxu0 %v3894
    %v3981 = vpop.f32.mrf.mxu0
    %v3982 = vadd.f32 0.0, %v3981
    %v3983 = vpop.f32.mrf.mxu0
    %v3984 = vadd.f32 0.0, %v3983
    %3985 = vmatmul.bf16.gmra.mxu0 %v3897
    %v3986 = vpop.f32.mrf.mxu0
    %v3987 = vadd.f32 0.0, %v3986
    %v3988 = vpop.f32.mrf.mxu0
    %v3989 = vadd.f32 0.0, %v3988
    %3990 = vdwg.mxu0
    %v3991 = vmul.f32 %v3692, %v142
    %v3992 = vmul.f32 %v3694, %v142
    %v3993 = vmul.f32 %v3697, %v142
    %v3994 = vmul.f32 %v3699, %v142
    %v3995 = vmul.f32 %v3702, %v142
    %v3996 = vmul.f32 %v3704, %v142
    %v3997 = vmul.f32 %v3707, %v142
    %v3998 = vmul.f32 %v3709, %v142
    %v3999 = vmul.f32 %v3912, %v142
    %v4000 = vmul.f32 %v3914, %v142
    %v4001 = vmul.f32 %v3917, %v142
    %v4002 = vmul.f32 %v3919, %v142
    %v4003 = vmul.f32 %v3922, %v142
    %v4004 = vmul.f32 %v3924, %v142
    %v4005 = vmul.f32 %v3927, %v142
    %v4006 = vmul.f32 %v3929, %v142
    %v4007 = vmul.f32 %v3712, %v145
    %v4008 = vmul.f32 %v3714, %v145
    %v4009 = vmul.f32 %v3717, %v145
    %v4010 = vmul.f32 %v3719, %v145
    %v4011 = vmul.f32 %v3722, %v145
    %v4012 = vmul.f32 %v3724, %v145
    %v4013 = vmul.f32 %v3727, %v145
    %v4014 = vmul.f32 %v3729, %v145
    %v4015 = vmul.f32 %v3932, %v145
    %v4016 = vmul.f32 %v3934, %v145
    %v4017 = vmul.f32 %v3937, %v145
    %v4018 = vmul.f32 %v3939, %v145
    %v4019 = vmul.f32 %v3942, %v145
    %v4020 = vmul.f32 %v3944, %v145
    %v4021 = vmul.f32 %v3947, %v145
    %v4022 = vmul.f32 %v3949, %v145
    %v4023 = vadd.f32 %v3991, %v4007
    %v4024 = vadd.f32 %v3992, %v4008
    %v4025 = vadd.f32 %v3993, %v4009
    %v4026 = vadd.f32 %v3994, %v4010
    %v4027 = vadd.f32 %v3995, %v4011
    %v4028 = vadd.f32 %v3996, %v4012
    %v4029 = vadd.f32 %v3997, %v4013
    %v4030 = vadd.f32 %v3998, %v4014
    %v4031 = vadd.f32 %v3999, %v4015
    %v4032 = vadd.f32 %v4000, %v4016
    %v4033 = vadd.f32 %v4001, %v4017
    %v4034 = vadd.f32 %v4002, %v4018
    %v4035 = vadd.f32 %v4003, %v4019
    %v4036 = vadd.f32 %v4004, %v4020
    %v4037 = vadd.f32 %v4005, %v4021
    %v4038 = vadd.f32 %v4006, %v4022
    %v4039 = vmul.f32 %v3732, %v148
    %v4040 = vmul.f32 %v3734, %v148
    %v4041 = vmul.f32 %v3737, %v148
    %v4042 = vmul.f32 %v3739, %v148
    %v4043 = vmul.f32 %v3742, %v148
    %v4044 = vmul.f32 %v3744, %v148
    %v4045 = vmul.f32 %v3747, %v148
    %v4046 = vmul.f32 %v3749, %v148
    %v4047 = vmul.f32 %v3952, %v148
    %v4048 = vmul.f32 %v3954, %v148
    %v4049 = vmul.f32 %v3957, %v148
    %v4050 = vmul.f32 %v3959, %v148
    %v4051 = vmul.f32 %v3962, %v148
    %v4052 = vmul.f32 %v3964, %v148
    %v4053 = vmul.f32 %v3967, %v148
    %v4054 = vmul.f32 %v3969, %v148
    %v4055 = vadd.f32 %v4023, %v4039
    %v4056 = vadd.f32 %v4024, %v4040
    %v4057 = vadd.f32 %v4025, %v4041
    %v4058 = vadd.f32 %v4026, %v4042
    %v4059 = vadd.f32 %v4027, %v4043
    %v4060 = vadd.f32 %v4028, %v4044
    %v4061 = vadd.f32 %v4029, %v4045
    %v4062 = vadd.f32 %v4030, %v4046
    %v4063 = vadd.f32 %v4031, %v4047
    %v4064 = vadd.f32 %v4032, %v4048
    %v4065 = vadd.f32 %v4033, %v4049
    %v4066 = vadd.f32 %v4034, %v4050
    %v4067 = vadd.f32 %v4035, %v4051
    %v4068 = vadd.f32 %v4036, %v4052
    %v4069 = vadd.f32 %v4037, %v4053
    %v4070 = vadd.f32 %v4038, %v4054
    %v4071 = vmul.f32 %v3752, %v151
    %v4072 = vmul.f32 %v3754, %v151
    %v4073 = vmul.f32 %v3757, %v151
    %v4074 = vmul.f32 %v3759, %v151
    %v4075 = vmul.f32 %v3762, %v151
    %v4076 = vmul.f32 %v3764, %v151
    %v4077 = vmul.f32 %v3767, %v151
    %v4078 = vmul.f32 %v3769, %v151
    %v4079 = vmul.f32 %v3972, %v151
    %v4080 = vmul.f32 %v3974, %v151
    %v4081 = vmul.f32 %v3977, %v151
    %v4082 = vmul.f32 %v3979, %v151
    %v4083 = vmul.f32 %v3982, %v151
    %v4084 = vmul.f32 %v3984, %v151
    %v4085 = vmul.f32 %v3987, %v151
    %v4086 = vmul.f32 %v3989, %v151
    %v4087 = vadd.f32 %v4055, %v4071
    %v4088 = vadd.f32 %v4056, %v4072
    %v4089 = vadd.f32 %v4057, %v4073
    %v4090 = vadd.f32 %v4058, %v4074
    %v4091 = vadd.f32 %v4059, %v4075
    %v4092 = vadd.f32 %v4060, %v4076
    %v4093 = vadd.f32 %v4061, %v4077
    %v4094 = vadd.f32 %v4062, %v4078
    %v4095 = vadd.f32 %v4063, %v4079
    %v4096 = vadd.f32 %v4064, %v4080
    %v4097 = vadd.f32 %v4065, %v4081
    %v4098 = vadd.f32 %v4066, %v4082
    %v4099 = vadd.f32 %v4067, %v4083
    %v4100 = vadd.f32 %v4068, %v4084
    %v4101 = vadd.f32 %v4069, %v4085
    %v4102 = vadd.f32 %v4070, %v4086
    %v4103 = vpack.c.bf16 %v4088, %v4087
    %v4104 = vpack.c.bf16 %v4090, %v4089
    %v4105 = vpack.c.bf16 %v4092, %v4091
    %v4106 = vpack.c.bf16 %v4094, %v4093
    %v4107 = vpack.c.bf16 %v4096, %v4095
    %v4108 = vpack.c.bf16 %v4098, %v4097
    %v4109 = vpack.c.bf16 %v4100, %v4099
    %v4110 = vpack.c.bf16 %v4102, %v4101
    %v4111 = vld [vmem:[#allocation10 + $0x2c0] sm:$0xf]
    %v4112 = vld [vmem:[#allocation10 + $0x2c4] sm:$0xf]
    %v4113 = vld [vmem:[#allocation10 + $0x2c8] sm:$0xf]
    %v4114 = vld [vmem:[#allocation10 + $0x2cc] sm:$0xf]
    %v4115 = vld [vmem:[#allocation10 + $0x2d0] sm:$0xf]
    %v4116 = vld [vmem:[#allocation10 + $0x2d4] sm:$0xf]
    %v4117 = vld [vmem:[#allocation10 + $0x2d8] sm:$0xf]
    %v4118 = vld [vmem:[#allocation10 + $0x2dc] sm:$0xf]
    %v4119 = vld [vmem:[#allocation10 + $0x2e0] sm:$0xf]
    %v4120 = vld [vmem:[#allocation10 + $0x2e4] sm:$0xf]
    %v4121 = vld [vmem:[#allocation10 + $0x2e8] sm:$0xf]
    %v4122 = vld [vmem:[#allocation10 + $0x2ec] sm:$0xf]
    %v4123 = vld [vmem:[#allocation10 + $0x2f0] sm:$0xf]
    %v4124 = vld [vmem:[#allocation10 + $0x2f4] sm:$0xf]
    %v4125 = vld [vmem:[#allocation10 + $0x2f8] sm:$0xf]
    %v4126 = vld [vmem:[#allocation10 + $0x2fc] sm:$0xf]
    %v4127 = vld [vmem:[#allocation11 + $0x58] sm:$0x1]
    %v4128 = vperm.slane %v4127, 0
    %v4145 = vunpack.c.l.b16 %v4111
    %v4146 = vunpack.c.l.b16 %v4112
    %v4147 = vunpack.c.l.b16 %v4113
    %v4148 = vunpack.c.l.b16 %v4114
    %v4149 = vunpack.c.l.b16 %v4115
    %v4150 = vunpack.c.l.b16 %v4116
    %v4151 = vunpack.c.l.b16 %v4117
    %v4152 = vunpack.c.l.b16 %v4118
    %v4153 = vunpack.c.l.b16 %v4119
    %v4154 = vunpack.c.l.b16 %v4120
    %v4155 = vunpack.c.l.b16 %v4121
    %v4156 = vunpack.c.l.b16 %v4122
    %v4157 = vunpack.c.l.b16 %v4123
    %v4158 = vunpack.c.l.b16 %v4124
    %v4159 = vunpack.c.l.b16 %v4125
    %v4160 = vunpack.c.l.b16 %v4126
    %v4161 = vpack.c.b16 %v4146, %v4145
    %v4162 = vpack.c.b16 %v4148, %v4147
    %v4163 = vpack.c.b16 %v4150, %v4149
    %v4164 = vpack.c.b16 %v4152, %v4151
    %v4165 = vpack.c.b16 %v4154, %v4153
    %v4166 = vpack.c.b16 %v4156, %v4155
    %v4167 = vpack.c.b16 %v4158, %v4157
    %v4168 = vpack.c.b16 %v4160, %v4159
    %4177 = vmatpush.bf16.msra.mxu0 %v4168
    %4178 = vmatpush.bf16.msra.mxu0 %v4167
    %4179 = vmatpush.bf16.msra.mxu0 %v4166
    %4180 = vmatpush.bf16.msra.mxu0 %v4165
    %4181 = vmatpush.bf16.msra.mxu0 %v4164
    %4182 = vmatpush.bf16.msra.mxu0 %v4163
    %4183 = vmatpush.bf16.msra.mxu0 %v4162
    %4184 = vmatpush.bf16.msra.mxu0 %v4161
    %4185 = vmatmul.bf16.gmra.mxu0 %v4103
    %v4186 = vpop.f32.mrf.mxu0
    %v4187 = vadd.f32 %v4128, %v4186
    %v4188 = vpop.f32.mrf.mxu0
    %v4189 = vadd.f32 %v4128, %v4188
    %4190 = vmatmul.bf16.gmra.mxu0 %v4104
    %v4191 = vpop.f32.mrf.mxu0
    %v4192 = vadd.f32 %v4128, %v4191
    %v4193 = vpop.f32.mrf.mxu0
    %v4194 = vadd.f32 %v4128, %v4193
    %4195 = vmatmul.bf16.gmra.mxu0 %v4105
    %v4196 = vpop.f32.mrf.mxu0
    %v4197 = vadd.f32 %v4128, %v4196
    %v4198 = vpop.f32.mrf.mxu0
    %v4199 = vadd.f32 %v4128, %v4198
    %4200 = vmatmul.bf16.gmra.mxu0 %v4106
    %v4201 = vpop.f32.mrf.mxu0
    %v4202 = vadd.f32 %v4128, %v4201
    %v4203 = vpop.f32.mrf.mxu0
    %v4204 = vadd.f32 %v4128, %v4203
    %4205 = vmatmul.bf16.gmra.mxu0 %v4107
    %v4206 = vpop.f32.mrf.mxu0
    %v4207 = vadd.f32 %v4128, %v4206
    %v4208 = vpop.f32.mrf.mxu0
    %v4209 = vadd.f32 %v4128, %v4208
    %4210 = vmatmul.bf16.gmra.mxu0 %v4108
    %v4211 = vpop.f32.mrf.mxu0
    %v4212 = vadd.f32 %v4128, %v4211
    %v4213 = vpop.f32.mrf.mxu0
    %v4214 = vadd.f32 %v4128, %v4213
    %4215 = vmatmul.bf16.gmra.mxu0 %v4109
    %v4216 = vpop.f32.mrf.mxu0
    %v4217 = vadd.f32 %v4128, %v4216
    %v4218 = vpop.f32.mrf.mxu0
    %v4219 = vadd.f32 %v4128, %v4218
    %4220 = vmatmul.bf16.gmra.mxu0 %v4110
    %v4221 = vpop.f32.mrf.mxu0
    %v4222 = vadd.f32 %v4128, %v4221
    %v4223 = vpop.f32.mrf.mxu0
    %v4224 = vadd.f32 %v4128, %v4223
    %4225 = vdwg.mxu0
    %v4226 = vadd.f32 %v154, %v4187
    %v4227 = vadd.f32 %v155, %v4189
    %v4228 = vadd.f32 %v156, %v4192
    %v4229 = vadd.f32 %v157, %v4194
    %v4230 = vadd.f32 %v158, %v4197
    %v4231 = vadd.f32 %v159, %v4199
    %v4232 = vadd.f32 %v160, %v4202
    %v4233 = vadd.f32 %v161, %v4204
    %v4234 = vadd.f32 %v162, %v4207
    %v4235 = vadd.f32 %v163, %v4209
    %v4236 = vadd.f32 %v164, %v4212
    %v4237 = vadd.f32 %v165, %v4214
    %v4238 = vadd.f32 %v166, %v4217
    %v4239 = vadd.f32 %v167, %v4219
    %v4240 = vadd.f32 %v168, %v4222
    %v4241 = vadd.f32 %v169, %v4224
    %4242 = vadd.xlane.f32.xlu0 %v4226
    %v4243 = vpop.xlane.xlu0 %4242
    %4244 = vadd.xlane.f32.xlu0 %v4227
    %v4245 = vpop.xlane.xlu0 %4244
    %4246 = vadd.xlane.f32.xlu0 %v4228
    %v4247 = vpop.xlane.xlu0 %4246
    %4248 = vadd.xlane.f32.xlu0 %v4229
    %v4249 = vpop.xlane.xlu0 %4248
    %4250 = vadd.xlane.f32.xlu0 %v4230
    %v4251 = vpop.xlane.xlu0 %4250
    %4252 = vadd.xlane.f32.xlu0 %v4231
    %v4253 = vpop.xlane.xlu0 %4252
    %4254 = vadd.xlane.f32.xlu0 %v4232
    %v4255 = vpop.xlane.xlu0 %4254
    %4256 = vadd.xlane.f32.xlu0 %v4233
    %v4257 = vpop.xlane.xlu0 %4256
    %4258 = vadd.xlane.f32.xlu0 %v4234
    %v4259 = vpop.xlane.xlu0 %4258
    %4260 = vadd.xlane.f32.xlu0 %v4235
    %v4261 = vpop.xlane.xlu0 %4260
    %4262 = vadd.xlane.f32.xlu0 %v4236
    %v4263 = vpop.xlane.xlu0 %4262
    %4264 = vadd.xlane.f32.xlu0 %v4237
    %v4265 = vpop.xlane.xlu0 %4264
    %4266 = vadd.xlane.f32.xlu0 %v4238
    %v4267 = vpop.xlane.xlu0 %4266
    %4268 = vadd.xlane.f32.xlu0 %v4239
    %v4269 = vpop.xlane.xlu0 %4268
    %4270 = vadd.xlane.f32.xlu0 %v4240
    %v4271 = vpop.xlane.xlu0 %4270
    %4272 = vadd.xlane.f32.xlu0 %v4241
    %v4273 = vpop.xlane.xlu0 %4272
    %v4274 = vmul.f32 %v4243, 0.03125
    %v4275 = vmul.f32 %v4245, 0.03125
    %v4276 = vmul.f32 %v4247, 0.03125
    %v4277 = vmul.f32 %v4249, 0.03125
    %v4278 = vmul.f32 %v4251, 0.03125
    %v4279 = vmul.f32 %v4253, 0.03125
    %v4280 = vmul.f32 %v4255, 0.03125
    %v4281 = vmul.f32 %v4257, 0.03125
    %v4282 = vmul.f32 %v4259, 0.03125
    %v4283 = vmul.f32 %v4261, 0.03125
    %v4284 = vmul.f32 %v4263, 0.03125
    %v4285 = vmul.f32 %v4265, 0.03125
    %v4286 = vmul.f32 %v4267, 0.03125
    %v4287 = vmul.f32 %v4269, 0.03125
    %v4288 = vmul.f32 %v4271, 0.03125
    %v4289 = vmul.f32 %v4273, 0.03125
    %v4290 = vmul.f32 %v4226, %v4226
    %v4291 = vmul.f32 %v4227, %v4227
    %v4292 = vmul.f32 %v4228, %v4228
    %v4293 = vmul.f32 %v4229, %v4229
    %v4294 = vmul.f32 %v4230, %v4230
    %v4295 = vmul.f32 %v4231, %v4231
    %v4296 = vmul.f32 %v4232, %v4232
    %v4297 = vmul.f32 %v4233, %v4233
    %v4298 = vmul.f32 %v4234, %v4234
    %v4299 = vmul.f32 %v4235, %v4235
    %v4300 = vmul.f32 %v4236, %v4236
    %v4301 = vmul.f32 %v4237, %v4237
    %v4302 = vmul.f32 %v4238, %v4238
    %v4303 = vmul.f32 %v4239, %v4239
    %v4304 = vmul.f32 %v4240, %v4240
    %v4305 = vmul.f32 %v4241, %v4241
    %4306 = vadd.xlane.f32.xlu0 %v4290
    %v4307 = vpop.xlane.xlu0 %4306
    %4308 = vadd.xlane.f32.xlu0 %v4291
    %v4309 = vpop.xlane.xlu0 %4308
    %4310 = vadd.xlane.f32.xlu0 %v4292
    %v4311 = vpop.xlane.xlu0 %4310
    %4312 = vadd.xlane.f32.xlu0 %v4293
    %v4313 = vpop.xlane.xlu0 %4312
    %4314 = vadd.xlane.f32.xlu0 %v4294
    %v4315 = vpop.xlane.xlu0 %4314
    %4316 = vadd.xlane.f32.xlu0 %v4295
    %v4317 = vpop.xlane.xlu0 %4316
    %4318 = vadd.xlane.f32.xlu0 %v4296
    %v4319 = vpop.xlane.xlu0 %4318
    %4320 = vadd.xlane.f32.xlu0 %v4297
    %v4321 = vpop.xlane.xlu0 %4320
    %4322 = vadd.xlane.f32.xlu0 %v4298
    %v4323 = vpop.xlane.xlu0 %4322
    %4324 = vadd.xlane.f32.xlu0 %v4299
    %v4325 = vpop.xlane.xlu0 %4324
    %4326 = vadd.xlane.f32.xlu0 %v4300
    %v4327 = vpop.xlane.xlu0 %4326
    %4328 = vadd.xlane.f32.xlu0 %v4301
    %v4329 = vpop.xlane.xlu0 %4328
    %4330 = vadd.xlane.f32.xlu0 %v4302
    %v4331 = vpop.xlane.xlu0 %4330
    %4332 = vadd.xlane.f32.xlu0 %v4303
    %v4333 = vpop.xlane.xlu0 %4332
    %4334 = vadd.xlane.f32.xlu0 %v4304
    %v4335 = vpop.xlane.xlu0 %4334
    %4336 = vadd.xlane.f32.xlu0 %v4305
    %v4337 = vpop.xlane.xlu0 %4336
    %v4338 = vmul.f32 %v4307, 0.03125
    %v4339 = vmul.f32 %v4309, 0.03125
    %v4340 = vmul.f32 %v4311, 0.03125
    %v4341 = vmul.f32 %v4313, 0.03125
    %v4342 = vmul.f32 %v4315, 0.03125
    %v4343 = vmul.f32 %v4317, 0.03125
    %v4344 = vmul.f32 %v4319, 0.03125
    %v4345 = vmul.f32 %v4321, 0.03125
    %v4346 = vmul.f32 %v4323, 0.03125
    %v4347 = vmul.f32 %v4325, 0.03125
    %v4348 = vmul.f32 %v4327, 0.03125
    %v4349 = vmul.f32 %v4329, 0.03125
    %v4350 = vmul.f32 %v4331, 0.03125
    %v4351 = vmul.f32 %v4333, 0.03125
    %v4352 = vmul.f32 %v4335, 0.03125
    %v4353 = vmul.f32 %v4337, 0.03125
    %v4354 = vmul.f32 %v4274, %v4274
    %v4355 = vmul.f32 %v4275, %v4275
    %v4356 = vmul.f32 %v4276, %v4276
    %v4357 = vmul.f32 %v4277, %v4277
    %v4358 = vmul.f32 %v4278, %v4278
    %v4359 = vmul.f32 %v4279, %v4279
    %v4360 = vmul.f32 %v4280, %v4280
    %v4361 = vmul.f32 %v4281, %v4281
    %v4362 = vmul.f32 %v4282, %v4282
    %v4363 = vmul.f32 %v4283, %v4283
    %v4364 = vmul.f32 %v4284, %v4284
    %v4365 = vmul.f32 %v4285, %v4285
    %v4366 = vmul.f32 %v4286, %v4286
    %v4367 = vmul.f32 %v4287, %v4287
    %v4368 = vmul.f32 %v4288, %v4288
    %v4369 = vmul.f32 %v4289, %v4289
    %v4370 = vsub.f32 %v4338, %v4354
    %v4371 = vsub.f32 %v4339, %v4355
    %v4372 = vsub.f32 %v4340, %v4356
    %v4373 = vsub.f32 %v4341, %v4357
    %v4374 = vsub.f32 %v4342, %v4358
    %v4375 = vsub.f32 %v4343, %v4359
    %v4376 = vsub.f32 %v4344, %v4360
    %v4377 = vsub.f32 %v4345, %v4361
    %v4378 = vsub.f32 %v4346, %v4362
    %v4379 = vsub.f32 %v4347, %v4363
    %v4380 = vsub.f32 %v4348, %v4364
    %v4381 = vsub.f32 %v4349, %v4365
    %v4382 = vsub.f32 %v4350, %v4366
    %v4383 = vsub.f32 %v4351, %v4367
    %v4384 = vsub.f32 %v4352, %v4368
    %v4385 = vsub.f32 %v4353, %v4369
    %v4386 = vsub.f32 %v4226, %v4274
    %v4387 = vsub.f32 %v4227, %v4275
    %v4388 = vsub.f32 %v4228, %v4276
    %v4389 = vsub.f32 %v4229, %v4277
    %v4390 = vsub.f32 %v4230, %v4278
    %v4391 = vsub.f32 %v4231, %v4279
    %v4392 = vsub.f32 %v4232, %v4280
    %v4393 = vsub.f32 %v4233, %v4281
    %v4394 = vsub.f32 %v4234, %v4282
    %v4395 = vsub.f32 %v4235, %v4283
    %v4396 = vsub.f32 %v4236, %v4284
    %v4397 = vsub.f32 %v4237, %v4285
    %v4398 = vsub.f32 %v4238, %v4286
    %v4399 = vsub.f32 %v4239, %v4287
    %v4400 = vsub.f32 %v4240, %v4288
    %v4401 = vsub.f32 %v4241, %v4289
    %v4402 = vadd.f32 %v4370, 1e-05
    %v4403 = vadd.f32 %v4371, 1e-05
    %v4404 = vadd.f32 %v4372, 1e-05
    %v4405 = vadd.f32 %v4373, 1e-05
    %v4406 = vadd.f32 %v4374, 1e-05
    %v4407 = vadd.f32 %v4375, 1e-05
    %v4408 = vadd.f32 %v4376, 1e-05
    %v4409 = vadd.f32 %v4377, 1e-05
    %v4410 = vadd.f32 %v4378, 1e-05
    %v4411 = vadd.f32 %v4379, 1e-05
    %v4412 = vadd.f32 %v4380, 1e-05
    %v4413 = vadd.f32 %v4381, 1e-05
    %v4414 = vadd.f32 %v4382, 1e-05
    %v4415 = vadd.f32 %v4383, 1e-05
    %v4416 = vadd.f32 %v4384, 1e-05
    %v4417 = vadd.f32 %v4385, 1e-05
    %v4418 = vrsqrt.pop %v4402
    %v4419 = vmul.f32 %v4418, %v4402
    %v4420 = vmul.f32 %v4419, %v4418
    %v4421 = vmul.f32 0.5, %v4420
    %v4422 = vsub.f32 1.5, %v4421
    %v4423 = vmul.f32 %v4418, %v4422
    %vm4424 = vweird.f32 %v4402
    %vm4425 = vweird.f32 %v4418
    %vm4426 = vmor %vm4424, %vm4425
    %v4427 = vsel %vm4426, %v4418, %v4423
    %v4428 = vrsqrt.pop %v4403
    %v4429 = vmul.f32 %v4428, %v4403
    %v4430 = vmul.f32 %v4429, %v4428
    %v4431 = vmul.f32 0.5, %v4430
    %v4432 = vsub.f32 1.5, %v4431
    %v4433 = vmul.f32 %v4428, %v4432
    %vm4434 = vweird.f32 %v4403
    %vm4435 = vweird.f32 %v4428
    %vm4436 = vmor %vm4434, %vm4435
    %v4437 = vsel %vm4436, %v4428, %v4433
    %v4438 = vrsqrt.pop %v4404
    %v4439 = vmul.f32 %v4438, %v4404
    %v4440 = vmul.f32 %v4439, %v4438
    %v4441 = vmul.f32 0.5, %v4440
    %v4442 = vsub.f32 1.5, %v4441
    %v4443 = vmul.f32 %v4438, %v4442
    %vm4444 = vweird.f32 %v4404
    %vm4445 = vweird.f32 %v4438
    %vm4446 = vmor %vm4444, %vm4445
    %v4447 = vsel %vm4446, %v4438, %v4443
    %v4448 = vrsqrt.pop %v4405
    %v4449 = vmul.f32 %v4448, %v4405
    %v4450 = vmul.f32 %v4449, %v4448
    %v4451 = vmul.f32 0.5, %v4450
    %v4452 = vsub.f32 1.5, %v4451
    %v4453 = vmul.f32 %v4448, %v4452
    %vm4454 = vweird.f32 %v4405
    %vm4455 = vweird.f32 %v4448
    %vm4456 = vmor %vm4454, %vm4455
    %v4457 = vsel %vm4456, %v4448, %v4453
    %v4458 = vrsqrt.pop %v4406
    %v4459 = vmul.f32 %v4458, %v4406
    %v4460 = vmul.f32 %v4459, %v4458
    %v4461 = vmul.f32 0.5, %v4460
    %v4462 = vsub.f32 1.5, %v4461
    %v4463 = vmul.f32 %v4458, %v4462
    %vm4464 = vweird.f32 %v4406
    %vm4465 = vweird.f32 %v4458
    %vm4466 = vmor %vm4464, %vm4465
    %v4467 = vsel %vm4466, %v4458, %v4463
    %v4468 = vrsqrt.pop %v4407
    %v4469 = vmul.f32 %v4468, %v4407
    %v4470 = vmul.f32 %v4469, %v4468
    %v4471 = vmul.f32 0.5, %v4470
    %v4472 = vsub.f32 1.5, %v4471
    %v4473 = vmul.f32 %v4468, %v4472
    %vm4474 = vweird.f32 %v4407
    %vm4475 = vweird.f32 %v4468
    %vm4476 = vmor %vm4474, %vm4475
    %v4477 = vsel %vm4476, %v4468, %v4473
    %v4478 = vrsqrt.pop %v4408
    %v4479 = vmul.f32 %v4478, %v4408
    %v4480 = vmul.f32 %v4479, %v4478
    %v4481 = vmul.f32 0.5, %v4480
    %v4482 = vsub.f32 1.5, %v4481
    %v4483 = vmul.f32 %v4478, %v4482
    %vm4484 = vweird.f32 %v4408
    %vm4485 = vweird.f32 %v4478
    %vm4486 = vmor %vm4484, %vm4485
    %v4487 = vsel %vm4486, %v4478, %v4483
    %v4488 = vrsqrt.pop %v4409
    %v4489 = vmul.f32 %v4488, %v4409
    %v4490 = vmul.f32 %v4489, %v4488
    %v4491 = vmul.f32 0.5, %v4490
    %v4492 = vsub.f32 1.5, %v4491
    %v4493 = vmul.f32 %v4488, %v4492
    %vm4494 = vweird.f32 %v4409
    %vm4495 = vweird.f32 %v4488
    %vm4496 = vmor %vm4494, %vm4495
    %v4497 = vsel %vm4496, %v4488, %v4493
    %v4498 = vrsqrt.pop %v4410
    %v4499 = vmul.f32 %v4498, %v4410
    %v4500 = vmul.f32 %v4499, %v4498
    %v4501 = vmul.f32 0.5, %v4500
    %v4502 = vsub.f32 1.5, %v4501
    %v4503 = vmul.f32 %v4498, %v4502
    %vm4504 = vweird.f32 %v4410
    %vm4505 = vweird.f32 %v4498
    %vm4506 = vmor %vm4504, %vm4505
    %v4507 = vsel %vm4506, %v4498, %v4503
    %v4508 = vrsqrt.pop %v4411
    %v4509 = vmul.f32 %v4508, %v4411
    %v4510 = vmul.f32 %v4509, %v4508
    %v4511 = vmul.f32 0.5, %v4510
    %v4512 = vsub.f32 1.5, %v4511
    %v4513 = vmul.f32 %v4508, %v4512
    %vm4514 = vweird.f32 %v4411
    %vm4515 = vweird.f32 %v4508
    %vm4516 = vmor %vm4514, %vm4515
    %v4517 = vsel %vm4516, %v4508, %v4513
    %v4518 = vrsqrt.pop %v4412
    %v4519 = vmul.f32 %v4518, %v4412
    %v4520 = vmul.f32 %v4519, %v4518
    %v4521 = vmul.f32 0.5, %v4520
    %v4522 = vsub.f32 1.5, %v4521
    %v4523 = vmul.f32 %v4518, %v4522
    %vm4524 = vweird.f32 %v4412
    %vm4525 = vweird.f32 %v4518
    %vm4526 = vmor %vm4524, %vm4525
    %v4527 = vsel %vm4526, %v4518, %v4523
    %v4528 = vrsqrt.pop %v4413
    %v4529 = vmul.f32 %v4528, %v4413
    %v4530 = vmul.f32 %v4529, %v4528
    %v4531 = vmul.f32 0.5, %v4530
    %v4532 = vsub.f32 1.5, %v4531
    %v4533 = vmul.f32 %v4528, %v4532
    %vm4534 = vweird.f32 %v4413
    %vm4535 = vweird.f32 %v4528
    %vm4536 = vmor %vm4534, %vm4535
    %v4537 = vsel %vm4536, %v4528, %v4533
    %v4538 = vrsqrt.pop %v4414
    %v4539 = vmul.f32 %v4538, %v4414
    %v4540 = vmul.f32 %v4539, %v4538
    %v4541 = vmul.f32 0.5, %v4540
    %v4542 = vsub.f32 1.5, %v4541
    %v4543 = vmul.f32 %v4538, %v4542
    %vm4544 = vweird.f32 %v4414
    %vm4545 = vweird.f32 %v4538
    %vm4546 = vmor %vm4544, %vm4545
    %v4547 = vsel %vm4546, %v4538, %v4543
    %v4548 = vrsqrt.pop %v4415
    %v4549 = vmul.f32 %v4548, %v4415
    %v4550 = vmul.f32 %v4549, %v4548
    %v4551 = vmul.f32 0.5, %v4550
    %v4552 = vsub.f32 1.5, %v4551
    %v4553 = vmul.f32 %v4548, %v4552
    %vm4554 = vweird.f32 %v4415
    %vm4555 = vweird.f32 %v4548
    %vm4556 = vmor %vm4554, %vm4555
    %v4557 = vsel %vm4556, %v4548, %v4553
    %v4558 = vrsqrt.pop %v4416
    %v4559 = vmul.f32 %v4558, %v4416
    %v4560 = vmul.f32 %v4559, %v4558
    %v4561 = vmul.f32 0.5, %v4560
    %v4562 = vsub.f32 1.5, %v4561
    %v4563 = vmul.f32 %v4558, %v4562
    %vm4564 = vweird.f32 %v4416
    %vm4565 = vweird.f32 %v4558
    %vm4566 = vmor %vm4564, %vm4565
    %v4567 = vsel %vm4566, %v4558, %v4563
    %v4568 = vrsqrt.pop %v4417
    %v4569 = vmul.f32 %v4568, %v4417
    %v4570 = vmul.f32 %v4569, %v4568
    %v4571 = vmul.f32 0.5, %v4570
    %v4572 = vsub.f32 1.5, %v4571
    %v4573 = vmul.f32 %v4568, %v4572
    %vm4574 = vweird.f32 %v4417
    %vm4575 = vweird.f32 %v4568
    %vm4576 = vmor %vm4574, %vm4575
    %v4577 = vsel %vm4576, %v4568, %v4573
    %v4578 = vmul.f32 %v4386, %v4427
    %v4579 = vmul.f32 %v4387, %v4437
    %v4580 = vmul.f32 %v4388, %v4447
    %v4581 = vmul.f32 %v4389, %v4457
    %v4582 = vmul.f32 %v4390, %v4467
    %v4583 = vmul.f32 %v4391, %v4477
    %v4584 = vmul.f32 %v4392, %v4487
    %v4585 = vmul.f32 %v4393, %v4497
    %v4586 = vmul.f32 %v4394, %v4507
    %v4587 = vmul.f32 %v4395, %v4517
    %v4588 = vmul.f32 %v4396, %v4527
    %v4589 = vmul.f32 %v4397, %v4537
    %v4590 = vmul.f32 %v4398, %v4547
    %v4591 = vmul.f32 %v4399, %v4557
    %v4592 = vmul.f32 %v4400, %v4567
    %v4593 = vmul.f32 %v4401, %v4577
    %v4594 = vld [vmem:[#allocation11 + $0xa0] sm:$0x1]
    %v4595 = vperm.slane %v4594, 0
    %v4596 = vmul.f32 %v4578, %v4595
    %v4597 = vmul.f32 %v4579, %v4595
    %v4598 = vmul.f32 %v4580, %v4595
    %v4599 = vmul.f32 %v4581, %v4595
    %v4600 = vmul.f32 %v4582, %v4595
    %v4601 = vmul.f32 %v4583, %v4595
    %v4602 = vmul.f32 %v4584, %v4595
    %v4603 = vmul.f32 %v4585, %v4595
    %v4604 = vmul.f32 %v4586, %v4595
    %v4605 = vmul.f32 %v4587, %v4595
    %v4606 = vmul.f32 %v4588, %v4595
    %v4607 = vmul.f32 %v4589, %v4595
    %v4608 = vmul.f32 %v4590, %v4595
    %v4609 = vmul.f32 %v4591, %v4595
    %v4610 = vmul.f32 %v4592, %v4595
    %v4611 = vmul.f32 %v4593, %v4595
    %v4612 = vld [vmem:[#allocation11 + $0xa8] sm:$0x1]
    %v4613 = vperm.slane %v4612, 0
    %v4614 = vadd.f32 %v4596, %v4613
    %v4615 = vadd.f32 %v4597, %v4613
    %v4616 = vadd.f32 %v4598, %v4613
    %v4617 = vadd.f32 %v4599, %v4613
    %v4618 = vadd.f32 %v4600, %v4613
    %v4619 = vadd.f32 %v4601, %v4613
    %v4620 = vadd.f32 %v4602, %v4613
    %v4621 = vadd.f32 %v4603, %v4613
    %v4622 = vadd.f32 %v4604, %v4613
    %v4623 = vadd.f32 %v4605, %v4613
    %v4624 = vadd.f32 %v4606, %v4613
    %v4625 = vadd.f32 %v4607, %v4613
    %v4626 = vadd.f32 %v4608, %v4613
    %v4627 = vadd.f32 %v4609, %v4613
    %v4628 = vadd.f32 %v4610, %v4613
    %v4629 = vadd.f32 %v4611, %v4613
    %4630 = vst [vmem:[#allocation13] sm:$0xff] %v1936
    %4631 = vst [vmem:[#allocation13 + $0x8] sm:$0xff] %v1937
    %4632 = vst [vmem:[#allocation14] sm:$0xff] %v4614
    %4633 = vst [vmem:[#allocation14 + $0x8] sm:$0xff] %v4615
    %4634 = vst [vmem:[#allocation14 + $0x10] sm:$0xff] %v4616
    %4635 = vst [vmem:[#allocation14 + $0x18] sm:$0xff] %v4617
    %4636 = vst [vmem:[#allocation14 + $0x20] sm:$0xff] %v4618
    %4637 = vst [vmem:[#allocation14 + $0x28] sm:$0xff] %v4619
    %4638 = vst [vmem:[#allocation14 + $0x30] sm:$0xff] %v4620
    %4639 = vst [vmem:[#allocation14 + $0x38] sm:$0xff] %v4621
    %4640 = vst [vmem:[#allocation14 + $0x40] sm:$0xff] %v4622
    %4641 = vst [vmem:[#allocation14 + $0x48] sm:$0xff] %v4623
    %4642 = vst [vmem:[#allocation14 + $0x50] sm:$0xff] %v4624
    %4643 = vst [vmem:[#allocation14 + $0x58] sm:$0xff] %v4625
    %4644 = vst [vmem:[#allocation14 + $0x60] sm:$0xff] %v4626
    %4645 = vst [vmem:[#allocation14 + $0x68] sm:$0xff] %v4627
    %4646 = vst [vmem:[#allocation14 + $0x70] sm:$0xff] %v4628
    %4647 = vst [vmem:[#allocation14 + $0x78] sm:$0xff] %v4629
    // Predicated region
    $region50: #{tpu_custom_call.1} parent=1 // pred_check
      _
    $region51: #{tpu_custom_call.1} parent=1 // pred_check_branch
      %4649 = sbr.rel (0) target = $region53
    $region52: #{tpu_custom_call.1} parent=1 // pred_region
      %4651 = vsyncadd [#allocation4], 0
      %s4652 = sshll.u32 [#allocation13], 4
      %s4653 = int_to_ptr.vmem [resolvable:$true] %s4652
      %s4654 = sshll.u32 %s6, 4
      %s4655 = int_to_ptr.hbm [resolvable:$true] %s4654
      %4660 = dma.vmem_to_hbm [thread:$0]  %s4653, 256, %s4655, [#allocation4], 128, 128, 8
    $region53: #{tpu_custom_call.1} parent=1 // pred_fallthru
      _
    // Predicated region
    $region54: #{tpu_custom_call.1} parent=1 // pred_check
      _
    $region55: #{tpu_custom_call.1} parent=1 // pred_check_branch
      %4662 = sbr.rel (0) target = $region57
    $region56: #{tpu_custom_call.1} parent=1 // pred_region
      %4664 = vsyncadd [#allocation15], 0
      %s4665 = sshll.u32 [#allocation14], 4
      %s4666 = int_to_ptr.vmem [resolvable:$true] %s4665
      %s4667 = sshll.u32 %s7, 4
      %s4668 = int_to_ptr.hbm [resolvable:$true] %s4667
      %4673 = dma.vmem_to_hbm [thread:$0]  %s4666, 2048, %s4668, [#allocation15], 128, 128, 8
    $region57: #{tpu_custom_call.1} parent=1 // pred_fallthru
      _
    // Predicated region
    $region58: #{tpu_custom_call.1} parent=1 // pred_check
      _
    $region59: #{tpu_custom_call.1} parent=1 // pred_check_branch
      %4675 = sbr.rel (0) target = $region61
    $region60: #{tpu_custom_call.1} parent=1 // pred_region
      %4677 = dma.done [#allocation4], 256
    $region61: #{tpu_custom_call.1} parent=1 // pred_fallthru
      _
    // Predicated region
    $region62: #{tpu_custom_call.1} parent=1 // pred_check
      _
    $region63: #{tpu_custom_call.1} parent=1 // pred_check_branch
      %4679 = sbr.rel (0) target = $region65
    $region64: #{tpu_custom_call.1} parent=1 // pred_region
      %4681 = dma.done [#allocation15], 2048
    $region65: #{tpu_custom_call.1} parent=1 // pred_fallthru
      _
    %4682 = vsyncpa [#allocation3], 1
    %4683 = vsyncpa [#allocation6], 1
    %4684 = vsyncpa [#allocation9], 1
    %4685 = vsyncpa [#allocation12], 1
    %4686 = vsyncpa [#allocation4], 1
    %4687 = vsyncpa [#allocation15], 1

</llo_original>
